<compile_context>
chip_gen: v7x
topology: tpu7x:2x2x1
jax: 0.10.0
libtpu: 0.0.40
codegen_flags: <defaults>
</compile_context>

<pallas_src>
import math

import jax
import jax.numpy as jnp
from jax.experimental import pallas as pl
from jax.experimental.pallas import tpu as pltpu

_NP = 128  # nef padded to one full lane width (lane-dense output)


# ---------------------------------------------------------------------------
# Pallas kernels
# ---------------------------------------------------------------------------

def _matmul_bias_kernel(a_ref, b_ref, bias_ref, o_ref):
    """o = a @ b + bias.  Full-K tiles: no accumulator scratch needed."""
    acc = jnp.dot(a_ref[...], b_ref[...], preferred_element_type=jnp.float32)
    o_ref[...] = (acc + bias_ref[...]).astype(o_ref.dtype)


def _pool_linear_kernel(x_ref, w_ref, bias_ref, o_ref):
    """Fused avg_pool2d(k=8) + Linear: (B, HW, C) -> mean over HW -> @ (C, NP) + bias."""
    pooled = jnp.mean(x_ref[...].astype(jnp.float32), axis=1)         # (B, C) f32
    acc = jnp.dot(pooled.astype(jnp.bfloat16), w_ref[...],
                  preferred_element_type=jnp.float32)                 # (B, NP)
    o_ref[...] = (acc + bias_ref[...]).astype(o_ref.dtype)


# ---------------------------------------------------------------------------
# Wrappers around pallas_call
# ---------------------------------------------------------------------------

def _round_up(x, m):
    return (x + m - 1) // m * m


def pallas_matmul_bias(a, w_padded, bias_padded, *, out_dtype=jnp.float32):
    """(M, K) bf16 @ (K, NP) bf16 + bias, lane-dense NP (multiple of 128)."""
    M, K = a.shape
    K2, NP = w_padded.shape
    assert K == K2 and NP % 128 == 0 and K % 128 == 0

    # >=2 M blocks (v7x dual-TC sharding) unless M is tiny; cap the tile at 512
    # rows so DMAs are large but VMEM stays far below the scoped limit.
    nblocks = max(2, pl.cdiv(M, 512)) if M >= 16 else 1
    tm = _round_up(pl.cdiv(M, nblocks), 8)
    Mp = tm * nblocks

    a_p = jnp.pad(a, ((0, Mp - M), (0, 0)))
    bias2 = bias_padded.astype(jnp.float32).reshape(1, NP)

    out = pl.pallas_call(
        _matmul_bias_kernel,
        out_shape=jax.ShapeDtypeStruct((Mp, NP), out_dtype),
        grid_spec=pltpu.PrefetchScalarGridSpec(
            num_scalar_prefetch=0,
            grid=(nblocks,),
            in_specs=[
                pl.BlockSpec((tm, K), lambda i: (i, 0)),
                pl.BlockSpec((K, NP), lambda i: (0, 0)),
                pl.BlockSpec((1, NP), lambda i: (0, 0)),
            ],
            out_specs=pl.BlockSpec((tm, NP), lambda i: (i, 0)),
        ),
        compiler_params=pltpu.CompilerParams(
            dimension_semantics=("parallel",)),
        cost_estimate=pl.CostEstimate(
            flops=2 * Mp * K * NP,
            transcendentals=0,
            bytes_accessed=Mp * K * 2 + K * NP * 2 + Mp * NP * 4 + NP * 4),
    )(a_p, w_padded, bias2)
    return out[:M]


def pallas_pool_linear(x_rows, w_padded, bias_padded):
    """x: (B, HW, C) bf16 -> mean over HW -> Linear C -> NP (+bias), f32 out."""
    B, HW, C = x_rows.shape
    NP = w_padded.shape[1]
    bias2 = bias_padded.astype(jnp.float32).reshape(1, NP)

    return pl.pallas_call(
        _pool_linear_kernel,
        out_shape=jax.ShapeDtypeStruct((B, NP), jnp.float32),
        grid_spec=pltpu.PrefetchScalarGridSpec(
            num_scalar_prefetch=0,
            grid=(1,),
            in_specs=[
                pl.BlockSpec((B, HW, C), lambda i: (0, 0, 0)),
                pl.BlockSpec((C, NP), lambda i: (0, 0)),
                pl.BlockSpec((1, NP), lambda i: (0, 0)),
            ],
            out_specs=pl.BlockSpec((B, NP), lambda i: (0, 0)),
        ),
        compiler_params=pltpu.CompilerParams(
            dimension_semantics=("arbitrary",)),
        cost_estimate=pl.CostEstimate(
            flops=2 * B * C * NP + B * HW * C,
            transcendentals=0,
            bytes_accessed=B * HW * C * 2 + C * NP * 2 + B * NP * 4 + NP * 4),
    )(x_rows, w_padded, bias2)


# ---------------------------------------------------------------------------
# CNN_ENCODER forward (head in Pallas, backbone stubbed deterministically)
# ---------------------------------------------------------------------------

def init_params(key, nef=32):
    """Shapes follow CNN_ENCODER.__init__: emb_features = Conv2d(768, nef, 1, bias=False),
    emb_cnn_code = Linear(2048, nef).  Trainable weights ~ U(-0.1, 0.1) as in
    init_trainable_weights().  Weights are stored pre-transposed (K, nef),
    zero-padded on the output axis to 128 lanes, and cast to bf16 for the MXU."""
    k1, k2, k3, k4, k5 = jax.random.split(key, 5)

    w_feat = jax.random.uniform(k1, (768, nef), jnp.float32, -0.1, 0.1)
    w_feat_p = jnp.zeros((768, _NP), jnp.float32).at[:, :nef].set(w_feat)

    w_code = jax.random.uniform(k2, (2048, nef), jnp.float32, -0.1, 0.1)
    w_code_p = jnp.zeros((2048, _NP), jnp.float32).at[:, :nef].set(w_code)

    bound = 1.0 / math.sqrt(2048.0)
    b_code = jax.random.uniform(k3, (nef,), jnp.float32, -bound, bound)
    b_code_p = jnp.zeros((_NP,), jnp.float32).at[:nef].set(b_code)

    return {
        "emb_features_w": w_feat_p.astype(jnp.bfloat16),   # (768, 128) bf16
        "emb_cnn_code_w": w_code_p.astype(jnp.bfloat16),   # (2048, 128) bf16
        "emb_cnn_code_b": b_code_p,                        # (128,) f32 (zero-padded)
        "zero_bias": jnp.zeros((_NP,), jnp.float32),
        # deterministic stand-in projections for the pretrained backbone
        "stub_p768": 0.1 * jax.random.normal(k4, (3, 768), jnp.float32),
        "stub_p2048": 0.1 * jax.random.normal(k5, (3, 2048), jnp.float32),
    }


def _backbone_stub(params, x299):
    """Deterministic stand-in for the frozen Inception-v3 backbone.
    TODO(synk): real Conv2d_1a_3x3 ... Mixed_7c need the pretrained checkpoint.
    Produces the true backbone output shapes, channels-last (feeds the Pallas
    kernels without extra transposes):
      features (B, 17, 17, 768)   (Mixed_6e output)
      x        (B, 8, 8, 2048)    (Mixed_7c output)
    """
    B = x299.shape[0]
    f17 = jax.image.resize(x299, (B, 3, 17, 17), method="bilinear")
    f8 = jax.image.resize(x299, (B, 3, 8, 8), method="bilinear")
    feat = jnp.einsum("bchw,cd->bhwd", f17, params["stub_p768"])
    xmap = jax.nn.relu(jnp.einsum("bchw,cd->bhwd", f8, params["stub_p2048"]))
    return feat.astype(jnp.bfloat16), xmap.astype(jnp.bfloat16)


def cnn_encoder_forward(params, x, nef=32):
    """x: (B, 3, H, W) NCHW float32.  Returns (features, cnn_code) exactly like
    CNN_ENCODER.forward: features (B, nef, 17, 17), cnn_code (B, nef)."""
    B = x.shape[0]

    # x = F.interpolate(x, size=(299, 299), mode='bilinear', align_corners=False)
    # (jax.image.resize 'bilinear' uses half-pixel centers == align_corners=False)
    x = jax.image.resize(x.astype(jnp.float32), (B, 3, 299, 299), method="bilinear")

    # --- frozen pretrained Inception-v3 backbone (stubbed, see TODO above) ---
    feat_nhwc, x_nhwc = _backbone_stub(params, x)   # (B,17,17,768), (B,8,8,2048) bf16

    # --- features = self.emb_features(features): 1x1 conv 768 -> nef, no bias ---
    Bf, Hf, Wf, Cf = feat_nhwc.shape
    feat_rows = feat_nhwc.reshape(Bf * Hf * Wf, Cf)                    # (B*289, 768)
    emb = pallas_matmul_bias(feat_rows, params["emb_features_w"],
                             params["zero_bias"])                      # (B*289, 128)
    features = jnp.transpose(emb[:, :nef].reshape(Bf, Hf, Wf, nef),
                             (0, 3, 1, 2))                             # (B, nef, 17, 17)

    # --- x = F.avg_pool2d(x, 8); x = x.view(B, -1); cnn_code = emb_cnn_code(x) ---
    Bx, Hx, Wx, Cx = x_nhwc.shape
    x_rows = x_nhwc.reshape(Bx, Hx * Wx, Cx)                           # (B, 64, 2048)
    code_full = pallas_pool_linear(x_rows, params["emb_cnn_code_w"],
                                   params["emb_cnn_code_b"])           # (B, 128)
    cnn_code = code_full[:, :nef]                                      # (B, nef)

    return features, cnn_code


# ---------------------------------------------------------------------------

if __name__ == "__main__":
    nef = 32  # small "hidden" size (cfg.TRAIN.FLAG path: nef passed in)
    key = jax.random.PRNGKey(0)
    kx, kp = jax.random.split(key)

    # PyTorch-style NCHW image input; forward upsamples to 299x299 internally.
    x = jax.random.normal(kx, (2, 3, 16, 16), dtype=jnp.float32)
    params = init_params(kp, nef=nef)

    fwd = jax.jit(cnn_encoder_forward, static_argnames="nef")
    features, cnn_code = fwd(params, x, nef=nef)
    jax.block_until_ready((features, cnn_code))

    assert features.shape == (2, nef, 17, 17), features.shape
    assert cnn_code.shape == (2, nef), cnn_code.shape
    assert bool(jnp.all(jnp.isfinite(features))) and bool(jnp.all(jnp.isfinite(cnn_code)))

    print("KERNEL_OK")
</pallas_src>

<mosaic_0001>
module attributes {stable_mosaic.version = 11 : i64} {
  func.func @_pool_linear_kernel(%arg0: i32, %arg1: memref<2x64x2048xbf16, #tpu.memory_space<vmem>>, %arg2: memref<2048x128xbf16, #tpu.memory_space<vmem>>, %arg3: memref<1x128xf32, #tpu.memory_space<vmem>>, %arg4: memref<2x128xf32, #tpu.memory_space<vmem>>) attributes {dimension_semantics = [#tpu.dimension_semantics<arbitrary>], iteration_bounds = array<i64: 1>, scalar_prefetch = 0 : i64, scratch_operands = 0 : i64, tpu.core_type = #tpu.core_type<tc>, window_params = [{pipeline_mode = #tpu.pipeline_mode<synchronous>, transform_indices = @transform_0, window_bounds = array<i64: 2, 64, 2048>}, {pipeline_mode = #tpu.pipeline_mode<synchronous>, transform_indices = @transform_1, window_bounds = array<i64: 2048, 128>}, {pipeline_mode = #tpu.pipeline_mode<synchronous>, transform_indices = @transform_2, window_bounds = array<i64: 1, 128>}, {pipeline_mode = #tpu.pipeline_mode<synchronous>, transform_indices = @transform_3, window_bounds = array<i64: 2, 128>}]} {
    %c0 = arith.constant 0 : index
    %c0_0 = arith.constant 0 : index
    %c0_1 = arith.constant 0 : index
    %0 = vector.load %arg1[%c0, %c0_0, %c0_1] : memref<2x64x2048xbf16, #tpu.memory_space<vmem>>, vector<2x64x2048xbf16>
    %1 = arith.extf %0 : vector<2x64x2048xbf16> to vector<2x64x2048xf32>
    %cst = arith.constant dense<0.000000e+00> : vector<2x2048xf32>
    %2 = vector.multi_reduction <add>, %1, %cst [1] : vector<2x64x2048xf32> to vector<2x2048xf32>
    %cst_2 = arith.constant 6.400000e+01 : f32
    %3 = vector.broadcast %cst_2 : f32 to vector<2x2048xf32>
    %4 = arith.divf %2, %3 : vector<2x2048xf32>
    %5 = arith.truncf %4 : vector<2x2048xf32> to vector<2x2048xbf16>
    %c0_3 = arith.constant 0 : index
    %c0_4 = arith.constant 0 : index
    %6 = vector.load %arg2[%c0_3, %c0_4] : memref<2048x128xbf16, #tpu.memory_space<vmem>>, vector<2048x128xbf16>
    %cst_5 = arith.constant dense<0.000000e+00> : vector<2x128xf32>
    %7 = tpu.matmul %5, %6, %cst_5 {dimension_numbers = #tpu.dot_dimension_numbers<[1], [0], [0], [1], [0, 0, 1, 1], [], []>} : vector<2x2048xbf16>, vector<2048x128xbf16>, vector<2x128xf32> -> vector<2x128xf32>
    %c0_6 = arith.constant 0 : index
    %c0_7 = arith.constant 0 : index
    %8 = vector.load %arg3[%c0_6, %c0_7] : memref<1x128xf32, #tpu.memory_space<vmem>>, vector<1x128xf32>
    %9 = vector.broadcast %8 : vector<1x128xf32> to vector<2x128xf32>
    %10 = arith.addf %7, %9 : vector<2x128xf32>
    %c0_8 = arith.constant 0 : index
    %c0_9 = arith.constant 0 : index
    %11 = vector.load %arg4[%c0_8, %c0_9] : memref<2x128xf32, #tpu.memory_space<vmem>>, vector<2x128xf32>
    tpu.vector_store %arg4[%c0_8, %c0_9], %10 {strides = array<i32>} : memref<2x128xf32, #tpu.memory_space<vmem>>, vector<2x128xf32>,
    return
  }
  func.func @transform_0(%arg0: i32) -> (i32, i32, i32) {
    %c0_i32 = arith.constant 0 : i32
    %c0_i32_0 = arith.constant 0 : i32
    %c0_i32_1 = arith.constant 0 : i32
    %c0_i32_2 = arith.constant 0 : i32
    return %c0_i32, %c0_i32_0, %c0_i32_1 : i32, i32, i32
  }
  func.func @transform_1(%arg0: i32) -> (i32, i32) {
    %c0_i32 = arith.constant 0 : i32
    %c0_i32_0 = arith.constant 0 : i32
    %c0_i32_1 = arith.constant 0 : i32
    return %c0_i32, %c0_i32_0 : i32, i32
  }
  func.func @transform_2(%arg0: i32) -> (i32, i32) {
    %c0_i32 = arith.constant 0 : i32
    %c0_i32_0 = arith.constant 0 : i32
    %c0_i32_1 = arith.constant 0 : i32
    return %c0_i32, %c0_i32_0 : i32, i32
  }
  func.func @transform_3(%arg0: i32) -> (i32, i32) {
    %c0_i32 = arith.constant 0 : i32
    %c0_i32_0 = arith.constant 0 : i32
    %c0_i32_1 = arith.constant 0 : i32
    return %c0_i32, %c0_i32_0 : i32, i32
  }
}

module attributes {stable_mosaic.version = 11 : i64} {
  func.func @_matmul_bias_kernel(%arg0: i32, %arg1: memref<296x768xbf16, #tpu.memory_space<vmem>>, %arg2: memref<768x128xbf16, #tpu.memory_space<vmem>>, %arg3: memref<1x128xf32, #tpu.memory_space<vmem>>, %arg4: memref<296x128xf32, #tpu.memory_space<vmem>>) attributes {dimension_semantics = [#tpu.dimension_semantics<parallel>], iteration_bounds = array<i64: 2>, scalar_prefetch = 0 : i64, scratch_operands = 0 : i64, tpu.core_type = #tpu.core_type<tc>, window_params = [{transform_indices = @transform_0, window_bounds = array<i64: 296, 768>}, {pipeline_mode = #tpu.pipeline_mode<synchronous>, transform_indices = @transform_1, window_bounds = array<i64: 768, 128>}, {pipeline_mode = #tpu.pipeline_mode<synchronous>, transform_indices = @transform_2, window_bounds = array<i64: 1, 128>}, {transform_indices = @transform_3, window_bounds = array<i64: 296, 128>}]} {
    %c0 = arith.constant 0 : index
    %c0_0 = arith.constant 0 : index
    %0 = vector.load %arg1[%c0, %c0_0] : memref<296x768xbf16, #tpu.memory_space<vmem>>, vector<296x768xbf16>
    %c0_1 = arith.constant 0 : index
    %c0_2 = arith.constant 0 : index
    %1 = vector.load %arg2[%c0_1, %c0_2] : memref<768x128xbf16, #tpu.memory_space<vmem>>, vector<768x128xbf16>
    %cst = arith.constant dense<0.000000e+00> : vector<296x128xf32>
    %2 = tpu.matmul %0, %1, %cst {dimension_numbers = #tpu.dot_dimension_numbers<[1], [0], [0], [1], [0, 0, 1, 1], [], []>} : vector<296x768xbf16>, vector<768x128xbf16>, vector<296x128xf32> -> vector<296x128xf32>
    %c0_3 = arith.constant 0 : index
    %c0_4 = arith.constant 0 : index
    %3 = vector.load %arg3[%c0_3, %c0_4] : memref<1x128xf32, #tpu.memory_space<vmem>>, vector<1x128xf32>
    %4 = vector.broadcast %3 : vector<1x128xf32> to vector<296x128xf32>
    %5 = arith.addf %2, %4 : vector<296x128xf32>
    %c0_5 = arith.constant 0 : index
    %c0_6 = arith.constant 0 : index
    %6 = vector.load %arg4[%c0_5, %c0_6] : memref<296x128xf32, #tpu.memory_space<vmem>>, vector<296x128xf32>
    tpu.vector_store %arg4[%c0_5, %c0_6], %5 {strides = array<i32>} : memref<296x128xf32, #tpu.memory_space<vmem>>, vector<296x128xf32>,
    return
  }
  func.func @transform_0(%arg0: i32) -> (i32, i32) {
    %c0_i32 = arith.constant 0 : i32
    %c0_i32_0 = arith.constant 0 : i32
    return %arg0, %c0_i32 : i32, i32
  }
  func.func @transform_1(%arg0: i32) -> (i32, i32) {
    %c0_i32 = arith.constant 0 : i32
    %c0_i32_0 = arith.constant 0 : i32
    %c0_i32_1 = arith.constant 0 : i32
    return %c0_i32, %c0_i32_0 : i32, i32
  }
  func.func @transform_2(%arg0: i32) -> (i32, i32) {
    %c0_i32 = arith.constant 0 : i32
    %c0_i32_0 = arith.constant 0 : i32
    %c0_i32_1 = arith.constant 0 : i32
    return %c0_i32, %c0_i32_0 : i32, i32
  }
  func.func @transform_3(%arg0: i32) -> (i32, i32) {
    %c0_i32 = arith.constant 0 : i32
    %c0_i32_0 = arith.constant 0 : i32
    return %arg0, %c0_i32 : i32, i32
  }
}

</mosaic_0001>

<llo_original>
// kernel: cnn_encoder_forward.3
$region0: #{cnn_encoder_forward.3}
  #allocation0 [shape = 'u32[]', space=smem, size = 0x4, offset = 0x4, fixed_abs, tag = 'smem constant byte address 0x4 - core index']
  #allocation1 [shape = 'u32[144,128]{1,0:T(1,128)}', space=vmem, size = 0x12000, scoped, tag = 'internal scratch']
  %s0 = inlined_call_operand.vmem [shape: bf16[2,64,2048], index: 0, kind: input, shape index: {}]
  %s1 = inlined_call_operand.vmem [shape: bf16[2048,128], index: 1, kind: input, shape index: {}]
  %s2 = inlined_call_operand.vmem [shape: f32[1,128], index: 2, kind: input, shape index: {}]
  %s3 = inlined_call_operand.hbm [shape: f32[2,128], index: 3, kind: output, shape index: {}]
  %s4 = sld [smem:[#allocation0]]
  $region22: #{cnn_encoder_forward.3} parent=0
    _
  %s6 = ssub.s32 1, %s4
  %s7 = scalar_select 0, %s6, %s4
  $region1: #{cnn_encoder_forward.3} parent=0
    #allocation2 [shape = 'u8[1024]{0}', space=vmem, size = 0x400, scoped, tag = 'output window, operand 0, single buffered']
    #allocation3 [shape = 's32[1]{0}', space=sflag, size = 0x4, scoped, tag = 'scoped memory for cnn_encoder_forward.3']
    %8 = vsyncpa [#allocation3], 0
    // Predicated region
    $region2: #{cnn_encoder_forward.3} parent=1 // pred_check
      _
    $region3: #{cnn_encoder_forward.3} parent=1 // pred_check_branch
      %10 = sbr.rel (0) target = $region5
    $region4: #{cnn_encoder_forward.3} parent=1 // pred_region
      _
    $region5: #{cnn_encoder_forward.3} parent=1 // pred_fallthru
      _
    // Predicated region
    $region6: #{cnn_encoder_forward.3} parent=1 // pred_check
      _
    $region7: #{cnn_encoder_forward.3} parent=1 // pred_check_branch
      %12 = sbr.rel (0) target = $region9
    $region8: #{cnn_encoder_forward.3} parent=1 // pred_region
      _
    $region9: #{cnn_encoder_forward.3} parent=1 // pred_fallthru
      _
    // Predicated region
    $region10: #{cnn_encoder_forward.3} parent=1 // pred_check
      _
    $region11: #{cnn_encoder_forward.3} parent=1 // pred_check_branch
      %14 = sbr.rel (0) target = $region13
    $region12: #{cnn_encoder_forward.3} parent=1 // pred_region
      _
    $region13: #{cnn_encoder_forward.3} parent=1 // pred_fallthru
      _
    %v16 = vld [vmem:[%s0] sm:$0xff]
    %v17 = vld [vmem:[%s0 + $0x8] sm:$0xff]
    %v18 = vld [vmem:[%s0 + $0x10] sm:$0xff]
    %v19 = vld [vmem:[%s0 + $0x18] sm:$0xff]
    %v20 = vld [vmem:[%s0 + $0x20] sm:$0xff]
    %v21 = vld [vmem:[%s0 + $0x28] sm:$0xff]
    %v22 = vld [vmem:[%s0 + $0x30] sm:$0xff]
    %v23 = vld [vmem:[%s0 + $0x38] sm:$0xff]
    %v24 = vld [vmem:[%s0 + $0x40] sm:$0xff]
    %v25 = vld [vmem:[%s0 + $0x48] sm:$0xff]
    %v26 = vld [vmem:[%s0 + $0x50] sm:$0xff]
    %v27 = vld [vmem:[%s0 + $0x58] sm:$0xff]
    %v28 = vld [vmem:[%s0 + $0x60] sm:$0xff]
    %v29 = vld [vmem:[%s0 + $0x68] sm:$0xff]
    %v30 = vld [vmem:[%s0 + $0x70] sm:$0xff]
    %v31 = vld [vmem:[%s0 + $0x78] sm:$0xff]
    %v32 = vld [vmem:[%s0 + $0x80] sm:$0xff]
    %v33 = vld [vmem:[%s0 + $0x88] sm:$0xff]
    %v34 = vld [vmem:[%s0 + $0x90] sm:$0xff]
    %v35 = vld [vmem:[%s0 + $0x98] sm:$0xff]
    %v36 = vld [vmem:[%s0 + $0xa0] sm:$0xff]
    %v37 = vld [vmem:[%s0 + $0xa8] sm:$0xff]
    %v38 = vld [vmem:[%s0 + $0xb0] sm:$0xff]
    %v39 = vld [vmem:[%s0 + $0xb8] sm:$0xff]
    %v40 = vld [vmem:[%s0 + $0xc0] sm:$0xff]
    %v41 = vld [vmem:[%s0 + $0xc8] sm:$0xff]
    %v42 = vld [vmem:[%s0 + $0xd0] sm:$0xff]
    %v43 = vld [vmem:[%s0 + $0xd8] sm:$0xff]
    %v44 = vld [vmem:[%s0 + $0xe0] sm:$0xff]
    %v45 = vld [vmem:[%s0 + $0xe8] sm:$0xff]
    %v46 = vld [vmem:[%s0 + $0xf0] sm:$0xff]
    %v47 = vld [vmem:[%s0 + $0xf8] sm:$0xff]
    %v48 = vld [vmem:[%s0 + $0x100] sm:$0xff]
    %v49 = vld [vmem:[%s0 + $0x108] sm:$0xff]
    %v50 = vld [vmem:[%s0 + $0x110] sm:$0xff]
    %v51 = vld [vmem:[%s0 + $0x118] sm:$0xff]
    %v52 = vld [vmem:[%s0 + $0x120] sm:$0xff]
    %v53 = vld [vmem:[%s0 + $0x128] sm:$0xff]
    %v54 = vld [vmem:[%s0 + $0x130] sm:$0xff]
    %v55 = vld [vmem:[%s0 + $0x138] sm:$0xff]
    %v56 = vld [vmem:[%s0 + $0x140] sm:$0xff]
    %v57 = vld [vmem:[%s0 + $0x148] sm:$0xff]
    %v58 = vld [vmem:[%s0 + $0x150] sm:$0xff]
    %v59 = vld [vmem:[%s0 + $0x158] sm:$0xff]
    %v60 = vld [vmem:[%s0 + $0x160] sm:$0xff]
    %v61 = vld [vmem:[%s0 + $0x168] sm:$0xff]
    %v62 = vld [vmem:[%s0 + $0x170] sm:$0xff]
    %v63 = vld [vmem:[%s0 + $0x178] sm:$0xff]
    %v64 = vld [vmem:[%s0 + $0x180] sm:$0xff]
    %v65 = vld [vmem:[%s0 + $0x188] sm:$0xff]
    %v66 = vld [vmem:[%s0 + $0x190] sm:$0xff]
    %v67 = vld [vmem:[%s0 + $0x198] sm:$0xff]
    %v68 = vld [vmem:[%s0 + $0x1a0] sm:$0xff]
    %v69 = vld [vmem:[%s0 + $0x1a8] sm:$0xff]
    %v70 = vld [vmem:[%s0 + $0x1b0] sm:$0xff]
    %v71 = vld [vmem:[%s0 + $0x1b8] sm:$0xff]
    %v72 = vld [vmem:[%s0 + $0x1c0] sm:$0xff]
    %v73 = vld [vmem:[%s0 + $0x1c8] sm:$0xff]
    %v74 = vld [vmem:[%s0 + $0x1d0] sm:$0xff]
    %v75 = vld [vmem:[%s0 + $0x1d8] sm:$0xff]
    %v76 = vld [vmem:[%s0 + $0x1e0] sm:$0xff]
    %v77 = vld [vmem:[%s0 + $0x1e8] sm:$0xff]
    %v78 = vld [vmem:[%s0 + $0x1f0] sm:$0xff]
    %v79 = vld [vmem:[%s0 + $0x1f8] sm:$0xff]
    %v80 = vld [vmem:[%s0 + $0x200] sm:$0xff]
    %v81 = vld [vmem:[%s0 + $0x208] sm:$0xff]
    %v82 = vld [vmem:[%s0 + $0x210] sm:$0xff]
    %v83 = vld [vmem:[%s0 + $0x218] sm:$0xff]
    %v84 = vld [vmem:[%s0 + $0x220] sm:$0xff]
    %v85 = vld [vmem:[%s0 + $0x228] sm:$0xff]
    %v86 = vld [vmem:[%s0 + $0x230] sm:$0xff]
    %v87 = vld [vmem:[%s0 + $0x238] sm:$0xff]
    %v88 = vld [vmem:[%s0 + $0x240] sm:$0xff]
    %v89 = vld [vmem:[%s0 + $0x248] sm:$0xff]
    %v90 = vld [vmem:[%s0 + $0x250] sm:$0xff]
    %v91 = vld [vmem:[%s0 + $0x258] sm:$0xff]
    %v92 = vld [vmem:[%s0 + $0x260] sm:$0xff]
    %v93 = vld [vmem:[%s0 + $0x268] sm:$0xff]
    %v94 = vld [vmem:[%s0 + $0x270] sm:$0xff]
    %v95 = vld [vmem:[%s0 + $0x278] sm:$0xff]
    %v96 = vld [vmem:[%s0 + $0x280] sm:$0xff]
    %v97 = vld [vmem:[%s0 + $0x288] sm:$0xff]
    %v98 = vld [vmem:[%s0 + $0x290] sm:$0xff]
    %v99 = vld [vmem:[%s0 + $0x298] sm:$0xff]
    %v100 = vld [vmem:[%s0 + $0x2a0] sm:$0xff]
    %v101 = vld [vmem:[%s0 + $0x2a8] sm:$0xff]
    %v102 = vld [vmem:[%s0 + $0x2b0] sm:$0xff]
    %v103 = vld [vmem:[%s0 + $0x2b8] sm:$0xff]
    %v104 = vld [vmem:[%s0 + $0x2c0] sm:$0xff]
    %v105 = vld [vmem:[%s0 + $0x2c8] sm:$0xff]
    %v106 = vld [vmem:[%s0 + $0x2d0] sm:$0xff]
    %v107 = vld [vmem:[%s0 + $0x2d8] sm:$0xff]
    %v108 = vld [vmem:[%s0 + $0x2e0] sm:$0xff]
    %v109 = vld [vmem:[%s0 + $0x2e8] sm:$0xff]
    %v110 = vld [vmem:[%s0 + $0x2f0] sm:$0xff]
    %v111 = vld [vmem:[%s0 + $0x2f8] sm:$0xff]
    %v112 = vld [vmem:[%s0 + $0x300] sm:$0xff]
    %v113 = vld [vmem:[%s0 + $0x308] sm:$0xff]
    %v114 = vld [vmem:[%s0 + $0x310] sm:$0xff]
    %v115 = vld [vmem:[%s0 + $0x318] sm:$0xff]
    %v116 = vld [vmem:[%s0 + $0x320] sm:$0xff]
    %v117 = vld [vmem:[%s0 + $0x328] sm:$0xff]
    %v118 = vld [vmem:[%s0 + $0x330] sm:$0xff]
    %v119 = vld [vmem:[%s0 + $0x338] sm:$0xff]
    %v120 = vld [vmem:[%s0 + $0x340] sm:$0xff]
    %v121 = vld [vmem:[%s0 + $0x348] sm:$0xff]
    %v122 = vld [vmem:[%s0 + $0x350] sm:$0xff]
    %v123 = vld [vmem:[%s0 + $0x358] sm:$0xff]
    %v124 = vld [vmem:[%s0 + $0x360] sm:$0xff]
    %v125 = vld [vmem:[%s0 + $0x368] sm:$0xff]
    %v126 = vld [vmem:[%s0 + $0x370] sm:$0xff]
    %v127 = vld [vmem:[%s0 + $0x378] sm:$0xff]
    %v128 = vld [vmem:[%s0 + $0x380] sm:$0xff]
    %v129 = vld [vmem:[%s0 + $0x388] sm:$0xff]
    %v130 = vld [vmem:[%s0 + $0x390] sm:$0xff]
    %v131 = vld [vmem:[%s0 + $0x398] sm:$0xff]
    %v132 = vld [vmem:[%s0 + $0x3a0] sm:$0xff]
    %v133 = vld [vmem:[%s0 + $0x3a8] sm:$0xff]
    %v134 = vld [vmem:[%s0 + $0x3b0] sm:$0xff]
    %v135 = vld [vmem:[%s0 + $0x3b8] sm:$0xff]
    %v136 = vld [vmem:[%s0 + $0x3c0] sm:$0xff]
    %v137 = vld [vmem:[%s0 + $0x3c8] sm:$0xff]
    %v138 = vld [vmem:[%s0 + $0x3d0] sm:$0xff]
    %v139 = vld [vmem:[%s0 + $0x3d8] sm:$0xff]
    %v140 = vld [vmem:[%s0 + $0x3e0] sm:$0xff]
    %v141 = vld [vmem:[%s0 + $0x3e8] sm:$0xff]
    %v142 = vld [vmem:[%s0 + $0x3f0] sm:$0xff]
    %v143 = vld [vmem:[%s0 + $0x3f8] sm:$0xff]
    %v144 = vunpack.c.l.bf16 %v16
    %v145 = vunpack.c.h.bf16 %v16
    %v146 = vunpack.c.l.bf16 %v17
    %v147 = vunpack.c.h.bf16 %v17
    %v148 = vunpack.c.l.bf16 %v18
    %v149 = vunpack.c.h.bf16 %v18
    %v150 = vunpack.c.l.bf16 %v19
    %v151 = vunpack.c.h.bf16 %v19
    %v152 = vunpack.c.l.bf16 %v20
    %v153 = vunpack.c.h.bf16 %v20
    %v154 = vunpack.c.l.bf16 %v21
    %v155 = vunpack.c.h.bf16 %v21
    %v156 = vunpack.c.l.bf16 %v22
    %v157 = vunpack.c.h.bf16 %v22
    %v158 = vunpack.c.l.bf16 %v23
    %v159 = vunpack.c.h.bf16 %v23
    %v160 = vunpack.c.l.bf16 %v24
    %v161 = vunpack.c.h.bf16 %v24
    %v162 = vunpack.c.l.bf16 %v25
    %v163 = vunpack.c.h.bf16 %v25
    %v164 = vunpack.c.l.bf16 %v26
    %v165 = vunpack.c.h.bf16 %v26
    %v166 = vunpack.c.l.bf16 %v27
    %v167 = vunpack.c.h.bf16 %v27
    %v168 = vunpack.c.l.bf16 %v28
    %v169 = vunpack.c.h.bf16 %v28
    %v170 = vunpack.c.l.bf16 %v29
    %v171 = vunpack.c.h.bf16 %v29
    %v172 = vunpack.c.l.bf16 %v30
    %v173 = vunpack.c.h.bf16 %v30
    %v174 = vunpack.c.l.bf16 %v31
    %v175 = vunpack.c.h.bf16 %v31
    %v176 = vunpack.c.l.bf16 %v32
    %v177 = vunpack.c.h.bf16 %v32
    %v178 = vunpack.c.l.bf16 %v33
    %v179 = vunpack.c.h.bf16 %v33
    %v180 = vunpack.c.l.bf16 %v34
    %v181 = vunpack.c.h.bf16 %v34
    %v182 = vunpack.c.l.bf16 %v35
    %v183 = vunpack.c.h.bf16 %v35
    %v184 = vunpack.c.l.bf16 %v36
    %v185 = vunpack.c.h.bf16 %v36
    %v186 = vunpack.c.l.bf16 %v37
    %v187 = vunpack.c.h.bf16 %v37
    %v188 = vunpack.c.l.bf16 %v38
    %v189 = vunpack.c.h.bf16 %v38
    %v190 = vunpack.c.l.bf16 %v39
    %v191 = vunpack.c.h.bf16 %v39
    %v192 = vunpack.c.l.bf16 %v40
    %v193 = vunpack.c.h.bf16 %v40
    %v194 = vunpack.c.l.bf16 %v41
    %v195 = vunpack.c.h.bf16 %v41
    %v196 = vunpack.c.l.bf16 %v42
    %v197 = vunpack.c.h.bf16 %v42
    %v198 = vunpack.c.l.bf16 %v43
    %v199 = vunpack.c.h.bf16 %v43
    %v200 = vunpack.c.l.bf16 %v44
    %v201 = vunpack.c.h.bf16 %v44
    %v202 = vunpack.c.l.bf16 %v45
    %v203 = vunpack.c.h.bf16 %v45
    %v204 = vunpack.c.l.bf16 %v46
    %v205 = vunpack.c.h.bf16 %v46
    %v206 = vunpack.c.l.bf16 %v47
    %v207 = vunpack.c.h.bf16 %v47
    %v208 = vunpack.c.l.bf16 %v48
    %v209 = vunpack.c.h.bf16 %v48
    %v210 = vunpack.c.l.bf16 %v49
    %v211 = vunpack.c.h.bf16 %v49
    %v212 = vunpack.c.l.bf16 %v50
    %v213 = vunpack.c.h.bf16 %v50
    %v214 = vunpack.c.l.bf16 %v51
    %v215 = vunpack.c.h.bf16 %v51
    %v216 = vunpack.c.l.bf16 %v52
    %v217 = vunpack.c.h.bf16 %v52
    %v218 = vunpack.c.l.bf16 %v53
    %v219 = vunpack.c.h.bf16 %v53
    %v220 = vunpack.c.l.bf16 %v54
    %v221 = vunpack.c.h.bf16 %v54
    %v222 = vunpack.c.l.bf16 %v55
    %v223 = vunpack.c.h.bf16 %v55
    %v224 = vunpack.c.l.bf16 %v56
    %v225 = vunpack.c.h.bf16 %v56
    %v226 = vunpack.c.l.bf16 %v57
    %v227 = vunpack.c.h.bf16 %v57
    %v228 = vunpack.c.l.bf16 %v58
    %v229 = vunpack.c.h.bf16 %v58
    %v230 = vunpack.c.l.bf16 %v59
    %v231 = vunpack.c.h.bf16 %v59
    %v232 = vunpack.c.l.bf16 %v60
    %v233 = vunpack.c.h.bf16 %v60
    %v234 = vunpack.c.l.bf16 %v61
    %v235 = vunpack.c.h.bf16 %v61
    %v236 = vunpack.c.l.bf16 %v62
    %v237 = vunpack.c.h.bf16 %v62
    %v238 = vunpack.c.l.bf16 %v63
    %v239 = vunpack.c.h.bf16 %v63
    %v240 = vunpack.c.l.bf16 %v64
    %v241 = vunpack.c.h.bf16 %v64
    %v242 = vunpack.c.l.bf16 %v65
    %v243 = vunpack.c.h.bf16 %v65
    %v244 = vunpack.c.l.bf16 %v66
    %v245 = vunpack.c.h.bf16 %v66
    %v246 = vunpack.c.l.bf16 %v67
    %v247 = vunpack.c.h.bf16 %v67
    %v248 = vunpack.c.l.bf16 %v68
    %v249 = vunpack.c.h.bf16 %v68
    %v250 = vunpack.c.l.bf16 %v69
    %v251 = vunpack.c.h.bf16 %v69
    %v252 = vunpack.c.l.bf16 %v70
    %v253 = vunpack.c.h.bf16 %v70
    %v254 = vunpack.c.l.bf16 %v71
    %v255 = vunpack.c.h.bf16 %v71
    %v256 = vunpack.c.l.bf16 %v72
    %v257 = vunpack.c.h.bf16 %v72
    %v258 = vunpack.c.l.bf16 %v73
    %v259 = vunpack.c.h.bf16 %v73
    %v260 = vunpack.c.l.bf16 %v74
    %v261 = vunpack.c.h.bf16 %v74
    %v262 = vunpack.c.l.bf16 %v75
    %v263 = vunpack.c.h.bf16 %v75
    %v264 = vunpack.c.l.bf16 %v76
    %v265 = vunpack.c.h.bf16 %v76
    %v266 = vunpack.c.l.bf16 %v77
    %v267 = vunpack.c.h.bf16 %v77
    %v268 = vunpack.c.l.bf16 %v78
    %v269 = vunpack.c.h.bf16 %v78
    %v270 = vunpack.c.l.bf16 %v79
    %v271 = vunpack.c.h.bf16 %v79
    %v272 = vunpack.c.l.bf16 %v80
    %v273 = vunpack.c.h.bf16 %v80
    %v274 = vunpack.c.l.bf16 %v81
    %v275 = vunpack.c.h.bf16 %v81
    %v276 = vunpack.c.l.bf16 %v82
    %v277 = vunpack.c.h.bf16 %v82
    %v278 = vunpack.c.l.bf16 %v83
    %v279 = vunpack.c.h.bf16 %v83
    %v280 = vunpack.c.l.bf16 %v84
    %v281 = vunpack.c.h.bf16 %v84
    %v282 = vunpack.c.l.bf16 %v85
    %v283 = vunpack.c.h.bf16 %v85
    %v284 = vunpack.c.l.bf16 %v86
    %v285 = vunpack.c.h.bf16 %v86
    %v286 = vunpack.c.l.bf16 %v87
    %v287 = vunpack.c.h.bf16 %v87
    %v288 = vunpack.c.l.bf16 %v88
    %v289 = vunpack.c.h.bf16 %v88
    %v290 = vunpack.c.l.bf16 %v89
    %v291 = vunpack.c.h.bf16 %v89
    %v292 = vunpack.c.l.bf16 %v90
    %v293 = vunpack.c.h.bf16 %v90
    %v294 = vunpack.c.l.bf16 %v91
    %v295 = vunpack.c.h.bf16 %v91
    %v296 = vunpack.c.l.bf16 %v92
    %v297 = vunpack.c.h.bf16 %v92
    %v298 = vunpack.c.l.bf16 %v93
    %v299 = vunpack.c.h.bf16 %v93
    %v300 = vunpack.c.l.bf16 %v94
    %v301 = vunpack.c.h.bf16 %v94
    %v302 = vunpack.c.l.bf16 %v95
    %v303 = vunpack.c.h.bf16 %v95
    %v304 = vunpack.c.l.bf16 %v96
    %v305 = vunpack.c.h.bf16 %v96
    %v306 = vunpack.c.l.bf16 %v97
    %v307 = vunpack.c.h.bf16 %v97
    %v308 = vunpack.c.l.bf16 %v98
    %v309 = vunpack.c.h.bf16 %v98
    %v310 = vunpack.c.l.bf16 %v99
    %v311 = vunpack.c.h.bf16 %v99
    %v312 = vunpack.c.l.bf16 %v100
    %v313 = vunpack.c.h.bf16 %v100
    %v314 = vunpack.c.l.bf16 %v101
    %v315 = vunpack.c.h.bf16 %v101
    %v316 = vunpack.c.l.bf16 %v102
    %v317 = vunpack.c.h.bf16 %v102
    %v318 = vunpack.c.l.bf16 %v103
    %v319 = vunpack.c.h.bf16 %v103
    %v320 = vunpack.c.l.bf16 %v104
    %v321 = vunpack.c.h.bf16 %v104
    %v322 = vunpack.c.l.bf16 %v105
    %v323 = vunpack.c.h.bf16 %v105
    %v324 = vunpack.c.l.bf16 %v106
    %v325 = vunpack.c.h.bf16 %v106
    %v326 = vunpack.c.l.bf16 %v107
    %v327 = vunpack.c.h.bf16 %v107
    %v328 = vunpack.c.l.bf16 %v108
    %v329 = vunpack.c.h.bf16 %v108
    %v330 = vunpack.c.l.bf16 %v109
    %v331 = vunpack.c.h.bf16 %v109
    %v332 = vunpack.c.l.bf16 %v110
    %v333 = vunpack.c.h.bf16 %v110
    %v334 = vunpack.c.l.bf16 %v111
    %v335 = vunpack.c.h.bf16 %v111
    %v336 = vunpack.c.l.bf16 %v112
    %v337 = vunpack.c.h.bf16 %v112
    %v338 = vunpack.c.l.bf16 %v113
    %v339 = vunpack.c.h.bf16 %v113
    %v340 = vunpack.c.l.bf16 %v114
    %v341 = vunpack.c.h.bf16 %v114
    %v342 = vunpack.c.l.bf16 %v115
    %v343 = vunpack.c.h.bf16 %v115
    %v344 = vunpack.c.l.bf16 %v116
    %v345 = vunpack.c.h.bf16 %v116
    %v346 = vunpack.c.l.bf16 %v117
    %v347 = vunpack.c.h.bf16 %v117
    %v348 = vunpack.c.l.bf16 %v118
    %v349 = vunpack.c.h.bf16 %v118
    %v350 = vunpack.c.l.bf16 %v119
    %v351 = vunpack.c.h.bf16 %v119
    %v352 = vunpack.c.l.bf16 %v120
    %v353 = vunpack.c.h.bf16 %v120
    %v354 = vunpack.c.l.bf16 %v121
    %v355 = vunpack.c.h.bf16 %v121
    %v356 = vunpack.c.l.bf16 %v122
    %v357 = vunpack.c.h.bf16 %v122
    %v358 = vunpack.c.l.bf16 %v123
    %v359 = vunpack.c.h.bf16 %v123
    %v360 = vunpack.c.l.bf16 %v124
    %v361 = vunpack.c.h.bf16 %v124
    %v362 = vunpack.c.l.bf16 %v125
    %v363 = vunpack.c.h.bf16 %v125
    %v364 = vunpack.c.l.bf16 %v126
    %v365 = vunpack.c.h.bf16 %v126
    %v366 = vunpack.c.l.bf16 %v127
    %v367 = vunpack.c.h.bf16 %v127
    %v368 = vunpack.c.l.bf16 %v128
    %v369 = vunpack.c.h.bf16 %v128
    %v370 = vunpack.c.l.bf16 %v129
    %v371 = vunpack.c.h.bf16 %v129
    %v372 = vunpack.c.l.bf16 %v130
    %v373 = vunpack.c.h.bf16 %v130
    %v374 = vunpack.c.l.bf16 %v131
    %v375 = vunpack.c.h.bf16 %v131
    %v376 = vunpack.c.l.bf16 %v132
    %v377 = vunpack.c.h.bf16 %v132
    %v378 = vunpack.c.l.bf16 %v133
    %v379 = vunpack.c.h.bf16 %v133
    %v380 = vunpack.c.l.bf16 %v134
    %v381 = vunpack.c.h.bf16 %v134
    %v382 = vunpack.c.l.bf16 %v135
    %v383 = vunpack.c.h.bf16 %v135
    %v384 = vunpack.c.l.bf16 %v136
    %v385 = vunpack.c.h.bf16 %v136
    %v386 = vunpack.c.l.bf16 %v137
    %v387 = vunpack.c.h.bf16 %v137
    %v388 = vunpack.c.l.bf16 %v138
    %v389 = vunpack.c.h.bf16 %v138
    %v390 = vunpack.c.l.bf16 %v139
    %v391 = vunpack.c.h.bf16 %v139
    %v392 = vunpack.c.l.bf16 %v140
    %v393 = vunpack.c.h.bf16 %v140
    %v394 = vunpack.c.l.bf16 %v141
    %v395 = vunpack.c.h.bf16 %v141
    %v396 = vunpack.c.l.bf16 %v142
    %v397 = vunpack.c.h.bf16 %v142
    %v398 = vunpack.c.l.bf16 %v143
    %v399 = vunpack.c.h.bf16 %v143
    %v400 = vadd.f32 %v144, %v160
    %v401 = vadd.f32 %v400, %v176
    %v402 = vadd.f32 %v401, %v192
    %v403 = vadd.f32 %v402, %v208
    %v404 = vadd.f32 %v403, %v224
    %v405 = vadd.f32 %v404, %v240
    %v406 = vadd.f32 %v405, %v256
    %v407 = vrot.slane %v406, 4
    %v408 = vadd.f32 %v406, %v407
    %v409 = vrot.slane %v408, 2
    %v410 = vadd.f32 %v408, %v409
    %v411 = vrot.slane %v410, 1
    %v412 = vadd.f32 %v410, %v411
    %v413 = vadd.f32 %v145, %v161
    %v414 = vadd.f32 %v413, %v177
    %v415 = vadd.f32 %v414, %v193
    %v416 = vadd.f32 %v415, %v209
    %v417 = vadd.f32 %v416, %v225
    %v418 = vadd.f32 %v417, %v241
    %v419 = vadd.f32 %v418, %v257
    %v420 = vrot.slane %v419, 4
    %v421 = vadd.f32 %v419, %v420
    %v422 = vrot.slane %v421, 2
    %v423 = vadd.f32 %v421, %v422
    %v424 = vrot.slane %v423, 1
    %v425 = vadd.f32 %v423, %v424
    %v426 = vadd.f32 %v146, %v162
    %v427 = vadd.f32 %v426, %v178
    %v428 = vadd.f32 %v427, %v194
    %v429 = vadd.f32 %v428, %v210
    %v430 = vadd.f32 %v429, %v226
    %v431 = vadd.f32 %v430, %v242
    %v432 = vadd.f32 %v431, %v258
    %v433 = vrot.slane %v432, 4
    %v434 = vadd.f32 %v432, %v433
    %v435 = vrot.slane %v434, 2
    %v436 = vadd.f32 %v434, %v435
    %v437 = vrot.slane %v436, 1
    %v438 = vadd.f32 %v436, %v437
    %v439 = vadd.f32 %v147, %v163
    %v440 = vadd.f32 %v439, %v179
    %v441 = vadd.f32 %v440, %v195
    %v442 = vadd.f32 %v441, %v211
    %v443 = vadd.f32 %v442, %v227
    %v444 = vadd.f32 %v443, %v243
    %v445 = vadd.f32 %v444, %v259
    %v446 = vrot.slane %v445, 4
    %v447 = vadd.f32 %v445, %v446
    %v448 = vrot.slane %v447, 2
    %v449 = vadd.f32 %v447, %v448
    %v450 = vrot.slane %v449, 1
    %v451 = vadd.f32 %v449, %v450
    %v452 = vadd.f32 %v148, %v164
    %v453 = vadd.f32 %v452, %v180
    %v454 = vadd.f32 %v453, %v196
    %v455 = vadd.f32 %v454, %v212
    %v456 = vadd.f32 %v455, %v228
    %v457 = vadd.f32 %v456, %v244
    %v458 = vadd.f32 %v457, %v260
    %v459 = vrot.slane %v458, 4
    %v460 = vadd.f32 %v458, %v459
    %v461 = vrot.slane %v460, 2
    %v462 = vadd.f32 %v460, %v461
    %v463 = vrot.slane %v462, 1
    %v464 = vadd.f32 %v462, %v463
    %v465 = vadd.f32 %v149, %v165
    %v466 = vadd.f32 %v465, %v181
    %v467 = vadd.f32 %v466, %v197
    %v468 = vadd.f32 %v467, %v213
    %v469 = vadd.f32 %v468, %v229
    %v470 = vadd.f32 %v469, %v245
    %v471 = vadd.f32 %v470, %v261
    %v472 = vrot.slane %v471, 4
    %v473 = vadd.f32 %v471, %v472
    %v474 = vrot.slane %v473, 2
    %v475 = vadd.f32 %v473, %v474
    %v476 = vrot.slane %v475, 1
    %v477 = vadd.f32 %v475, %v476
    %v478 = vadd.f32 %v150, %v166
    %v479 = vadd.f32 %v478, %v182
    %v480 = vadd.f32 %v479, %v198
    %v481 = vadd.f32 %v480, %v214
    %v482 = vadd.f32 %v481, %v230
    %v483 = vadd.f32 %v482, %v246
    %v484 = vadd.f32 %v483, %v262
    %v485 = vrot.slane %v484, 4
    %v486 = vadd.f32 %v484, %v485
    %v487 = vrot.slane %v486, 2
    %v488 = vadd.f32 %v486, %v487
    %v489 = vrot.slane %v488, 1
    %v490 = vadd.f32 %v488, %v489
    %v491 = vadd.f32 %v151, %v167
    %v492 = vadd.f32 %v491, %v183
    %v493 = vadd.f32 %v492, %v199
    %v494 = vadd.f32 %v493, %v215
    %v495 = vadd.f32 %v494, %v231
    %v496 = vadd.f32 %v495, %v247
    %v497 = vadd.f32 %v496, %v263
    %v498 = vrot.slane %v497, 4
    %v499 = vadd.f32 %v497, %v498
    %v500 = vrot.slane %v499, 2
    %v501 = vadd.f32 %v499, %v500
    %v502 = vrot.slane %v501, 1
    %v503 = vadd.f32 %v501, %v502
    %v504 = vadd.f32 %v152, %v168
    %v505 = vadd.f32 %v504, %v184
    %v506 = vadd.f32 %v505, %v200
    %v507 = vadd.f32 %v506, %v216
    %v508 = vadd.f32 %v507, %v232
    %v509 = vadd.f32 %v508, %v248
    %v510 = vadd.f32 %v509, %v264
    %v511 = vrot.slane %v510, 4
    %v512 = vadd.f32 %v510, %v511
    %v513 = vrot.slane %v512, 2
    %v514 = vadd.f32 %v512, %v513
    %v515 = vrot.slane %v514, 1
    %v516 = vadd.f32 %v514, %v515
    %v517 = vadd.f32 %v153, %v169
    %v518 = vadd.f32 %v517, %v185
    %v519 = vadd.f32 %v518, %v201
    %v520 = vadd.f32 %v519, %v217
    %v521 = vadd.f32 %v520, %v233
    %v522 = vadd.f32 %v521, %v249
    %v523 = vadd.f32 %v522, %v265
    %v524 = vrot.slane %v523, 4
    %v525 = vadd.f32 %v523, %v524
    %v526 = vrot.slane %v525, 2
    %v527 = vadd.f32 %v525, %v526
    %v528 = vrot.slane %v527, 1
    %v529 = vadd.f32 %v527, %v528
    %v530 = vadd.f32 %v154, %v170
    %v531 = vadd.f32 %v530, %v186
    %v532 = vadd.f32 %v531, %v202
    %v533 = vadd.f32 %v532, %v218
    %v534 = vadd.f32 %v533, %v234
    %v535 = vadd.f32 %v534, %v250
    %v536 = vadd.f32 %v535, %v266
    %v537 = vrot.slane %v536, 4
    %v538 = vadd.f32 %v536, %v537
    %v539 = vrot.slane %v538, 2
    %v540 = vadd.f32 %v538, %v539
    %v541 = vrot.slane %v540, 1
    %v542 = vadd.f32 %v540, %v541
    %v543 = vadd.f32 %v155, %v171
    %v544 = vadd.f32 %v543, %v187
    %v545 = vadd.f32 %v544, %v203
    %v546 = vadd.f32 %v545, %v219
    %v547 = vadd.f32 %v546, %v235
    %v548 = vadd.f32 %v547, %v251
    %v549 = vadd.f32 %v548, %v267
    %v550 = vrot.slane %v549, 4
    %v551 = vadd.f32 %v549, %v550
    %v552 = vrot.slane %v551, 2
    %v553 = vadd.f32 %v551, %v552
    %v554 = vrot.slane %v553, 1
    %v555 = vadd.f32 %v553, %v554
    %v556 = vadd.f32 %v156, %v172
    %v557 = vadd.f32 %v556, %v188
    %v558 = vadd.f32 %v557, %v204
    %v559 = vadd.f32 %v558, %v220
    %v560 = vadd.f32 %v559, %v236
    %v561 = vadd.f32 %v560, %v252
    %v562 = vadd.f32 %v561, %v268
    %v563 = vrot.slane %v562, 4
    %v564 = vadd.f32 %v562, %v563
    %v565 = vrot.slane %v564, 2
    %v566 = vadd.f32 %v564, %v565
    %v567 = vrot.slane %v566, 1
    %v568 = vadd.f32 %v566, %v567
    %v569 = vadd.f32 %v157, %v173
    %v570 = vadd.f32 %v569, %v189
    %v571 = vadd.f32 %v570, %v205
    %v572 = vadd.f32 %v571, %v221
    %v573 = vadd.f32 %v572, %v237
    %v574 = vadd.f32 %v573, %v253
    %v575 = vadd.f32 %v574, %v269
    %v576 = vrot.slane %v575, 4
    %v577 = vadd.f32 %v575, %v576
    %v578 = vrot.slane %v577, 2
    %v579 = vadd.f32 %v577, %v578
    %v580 = vrot.slane %v579, 1
    %v581 = vadd.f32 %v579, %v580
    %v582 = vadd.f32 %v158, %v174
    %v583 = vadd.f32 %v582, %v190
    %v584 = vadd.f32 %v583, %v206
    %v585 = vadd.f32 %v584, %v222
    %v586 = vadd.f32 %v585, %v238
    %v587 = vadd.f32 %v586, %v254
    %v588 = vadd.f32 %v587, %v270
    %v589 = vrot.slane %v588, 4
    %v590 = vadd.f32 %v588, %v589
    %v591 = vrot.slane %v590, 2
    %v592 = vadd.f32 %v590, %v591
    %v593 = vrot.slane %v592, 1
    %v594 = vadd.f32 %v592, %v593
    %v595 = vadd.f32 %v159, %v175
    %v596 = vadd.f32 %v595, %v191
    %v597 = vadd.f32 %v596, %v207
    %v598 = vadd.f32 %v597, %v223
    %v599 = vadd.f32 %v598, %v239
    %v600 = vadd.f32 %v599, %v255
    %v601 = vadd.f32 %v600, %v271
    %v602 = vrot.slane %v601, 4
    %v603 = vadd.f32 %v601, %v602
    %v604 = vrot.slane %v603, 2
    %v605 = vadd.f32 %v603, %v604
    %v606 = vrot.slane %v605, 1
    %v607 = vadd.f32 %v605, %v606
    %v608 = vadd.f32 %v272, %v288
    %v609 = vadd.f32 %v608, %v304
    %v610 = vadd.f32 %v609, %v320
    %v611 = vadd.f32 %v610, %v336
    %v612 = vadd.f32 %v611, %v352
    %v613 = vadd.f32 %v612, %v368
    %v614 = vadd.f32 %v613, %v384
    %v615 = vrot.slane %v614, 4
    %v616 = vadd.f32 %v614, %v615
    %v617 = vrot.slane %v616, 2
    %v618 = vadd.f32 %v616, %v617
    %v619 = vrot.slane %v618, 1
    %v620 = vadd.f32 %v618, %v619
    %v621 = vadd.f32 %v273, %v289
    %v622 = vadd.f32 %v621, %v305
    %v623 = vadd.f32 %v622, %v321
    %v624 = vadd.f32 %v623, %v337
    %v625 = vadd.f32 %v624, %v353
    %v626 = vadd.f32 %v625, %v369
    %v627 = vadd.f32 %v626, %v385
    %v628 = vrot.slane %v627, 4
    %v629 = vadd.f32 %v627, %v628
    %v630 = vrot.slane %v629, 2
    %v631 = vadd.f32 %v629, %v630
    %v632 = vrot.slane %v631, 1
    %v633 = vadd.f32 %v631, %v632
    %v634 = vadd.f32 %v274, %v290
    %v635 = vadd.f32 %v634, %v306
    %v636 = vadd.f32 %v635, %v322
    %v637 = vadd.f32 %v636, %v338
    %v638 = vadd.f32 %v637, %v354
    %v639 = vadd.f32 %v638, %v370
    %v640 = vadd.f32 %v639, %v386
    %v641 = vrot.slane %v640, 4
    %v642 = vadd.f32 %v640, %v641
    %v643 = vrot.slane %v642, 2
    %v644 = vadd.f32 %v642, %v643
    %v645 = vrot.slane %v644, 1
    %v646 = vadd.f32 %v644, %v645
    %v647 = vadd.f32 %v275, %v291
    %v648 = vadd.f32 %v647, %v307
    %v649 = vadd.f32 %v648, %v323
    %v650 = vadd.f32 %v649, %v339
    %v651 = vadd.f32 %v650, %v355
    %v652 = vadd.f32 %v651, %v371
    %v653 = vadd.f32 %v652, %v387
    %v654 = vrot.slane %v653, 4
    %v655 = vadd.f32 %v653, %v654
    %v656 = vrot.slane %v655, 2
    %v657 = vadd.f32 %v655, %v656
    %v658 = vrot.slane %v657, 1
    %v659 = vadd.f32 %v657, %v658
    %v660 = vadd.f32 %v276, %v292
    %v661 = vadd.f32 %v660, %v308
    %v662 = vadd.f32 %v661, %v324
    %v663 = vadd.f32 %v662, %v340
    %v664 = vadd.f32 %v663, %v356
    %v665 = vadd.f32 %v664, %v372
    %v666 = vadd.f32 %v665, %v388
    %v667 = vrot.slane %v666, 4
    %v668 = vadd.f32 %v666, %v667
    %v669 = vrot.slane %v668, 2
    %v670 = vadd.f32 %v668, %v669
    %v671 = vrot.slane %v670, 1
    %v672 = vadd.f32 %v670, %v671
    %v673 = vadd.f32 %v277, %v293
    %v674 = vadd.f32 %v673, %v309
    %v675 = vadd.f32 %v674, %v325
    %v676 = vadd.f32 %v675, %v341
    %v677 = vadd.f32 %v676, %v357
    %v678 = vadd.f32 %v677, %v373
    %v679 = vadd.f32 %v678, %v389
    %v680 = vrot.slane %v679, 4
    %v681 = vadd.f32 %v679, %v680
    %v682 = vrot.slane %v681, 2
    %v683 = vadd.f32 %v681, %v682
    %v684 = vrot.slane %v683, 1
    %v685 = vadd.f32 %v683, %v684
    %v686 = vadd.f32 %v278, %v294
    %v687 = vadd.f32 %v686, %v310
    %v688 = vadd.f32 %v687, %v326
    %v689 = vadd.f32 %v688, %v342
    %v690 = vadd.f32 %v689, %v358
    %v691 = vadd.f32 %v690, %v374
    %v692 = vadd.f32 %v691, %v390
    %v693 = vrot.slane %v692, 4
    %v694 = vadd.f32 %v692, %v693
    %v695 = vrot.slane %v694, 2
    %v696 = vadd.f32 %v694, %v695
    %v697 = vrot.slane %v696, 1
    %v698 = vadd.f32 %v696, %v697
    %v699 = vadd.f32 %v279, %v295
    %v700 = vadd.f32 %v699, %v311
    %v701 = vadd.f32 %v700, %v327
    %v702 = vadd.f32 %v701, %v343
    %v703 = vadd.f32 %v702, %v359
    %v704 = vadd.f32 %v703, %v375
    %v705 = vadd.f32 %v704, %v391
    %v706 = vrot.slane %v705, 4
    %v707 = vadd.f32 %v705, %v706
    %v708 = vrot.slane %v707, 2
    %v709 = vadd.f32 %v707, %v708
    %v710 = vrot.slane %v709, 1
    %v711 = vadd.f32 %v709, %v710
    %v712 = vadd.f32 %v280, %v296
    %v713 = vadd.f32 %v712, %v312
    %v714 = vadd.f32 %v713, %v328
    %v715 = vadd.f32 %v714, %v344
    %v716 = vadd.f32 %v715, %v360
    %v717 = vadd.f32 %v716, %v376
    %v718 = vadd.f32 %v717, %v392
    %v719 = vrot.slane %v718, 4
    %v720 = vadd.f32 %v718, %v719
    %v721 = vrot.slane %v720, 2
    %v722 = vadd.f32 %v720, %v721
    %v723 = vrot.slane %v722, 1
    %v724 = vadd.f32 %v722, %v723
    %v725 = vadd.f32 %v281, %v297
    %v726 = vadd.f32 %v725, %v313
    %v727 = vadd.f32 %v726, %v329
    %v728 = vadd.f32 %v727, %v345
    %v729 = vadd.f32 %v728, %v361
    %v730 = vadd.f32 %v729, %v377
    %v731 = vadd.f32 %v730, %v393
    %v732 = vrot.slane %v731, 4
    %v733 = vadd.f32 %v731, %v732
    %v734 = vrot.slane %v733, 2
    %v735 = vadd.f32 %v733, %v734
    %v736 = vrot.slane %v735, 1
    %v737 = vadd.f32 %v735, %v736
    %v738 = vadd.f32 %v282, %v298
    %v739 = vadd.f32 %v738, %v314
    %v740 = vadd.f32 %v739, %v330
    %v741 = vadd.f32 %v740, %v346
    %v742 = vadd.f32 %v741, %v362
    %v743 = vadd.f32 %v742, %v378
    %v744 = vadd.f32 %v743, %v394
    %v745 = vrot.slane %v744, 4
    %v746 = vadd.f32 %v744, %v745
    %v747 = vrot.slane %v746, 2
    %v748 = vadd.f32 %v746, %v747
    %v749 = vrot.slane %v748, 1
    %v750 = vadd.f32 %v748, %v749
    %v751 = vadd.f32 %v283, %v299
    %v752 = vadd.f32 %v751, %v315
    %v753 = vadd.f32 %v752, %v331
    %v754 = vadd.f32 %v753, %v347
    %v755 = vadd.f32 %v754, %v363
    %v756 = vadd.f32 %v755, %v379
    %v757 = vadd.f32 %v756, %v395
    %v758 = vrot.slane %v757, 4
    %v759 = vadd.f32 %v757, %v758
    %v760 = vrot.slane %v759, 2
    %v761 = vadd.f32 %v759, %v760
    %v762 = vrot.slane %v761, 1
    %v763 = vadd.f32 %v761, %v762
    %v764 = vadd.f32 %v284, %v300
    %v765 = vadd.f32 %v764, %v316
    %v766 = vadd.f32 %v765, %v332
    %v767 = vadd.f32 %v766, %v348
    %v768 = vadd.f32 %v767, %v364
    %v769 = vadd.f32 %v768, %v380
    %v770 = vadd.f32 %v769, %v396
    %v771 = vrot.slane %v770, 4
    %v772 = vadd.f32 %v770, %v771
    %v773 = vrot.slane %v772, 2
    %v774 = vadd.f32 %v772, %v773
    %v775 = vrot.slane %v774, 1
    %v776 = vadd.f32 %v774, %v775
    %v777 = vadd.f32 %v285, %v301
    %v778 = vadd.f32 %v777, %v317
    %v779 = vadd.f32 %v778, %v333
    %v780 = vadd.f32 %v779, %v349
    %v781 = vadd.f32 %v780, %v365
    %v782 = vadd.f32 %v781, %v381
    %v783 = vadd.f32 %v782, %v397
    %v784 = vrot.slane %v783, 4
    %v785 = vadd.f32 %v783, %v784
    %v786 = vrot.slane %v785, 2
    %v787 = vadd.f32 %v785, %v786
    %v788 = vrot.slane %v787, 1
    %v789 = vadd.f32 %v787, %v788
    %v790 = vadd.f32 %v286, %v302
    %v791 = vadd.f32 %v790, %v318
    %v792 = vadd.f32 %v791, %v334
    %v793 = vadd.f32 %v792, %v350
    %v794 = vadd.f32 %v793, %v366
    %v795 = vadd.f32 %v794, %v382
    %v796 = vadd.f32 %v795, %v398
    %v797 = vrot.slane %v796, 4
    %v798 = vadd.f32 %v796, %v797
    %v799 = vrot.slane %v798, 2
    %v800 = vadd.f32 %v798, %v799
    %v801 = vrot.slane %v800, 1
    %v802 = vadd.f32 %v800, %v801
    %v803 = vadd.f32 %v287, %v303
    %v804 = vadd.f32 %v803, %v319
    %v805 = vadd.f32 %v804, %v335
    %v806 = vadd.f32 %v805, %v351
    %v807 = vadd.f32 %v806, %v367
    %v808 = vadd.f32 %v807, %v383
    %v809 = vadd.f32 %v808, %v399
    %v810 = vrot.slane %v809, 4
    %v811 = vadd.f32 %v809, %v810
    %v812 = vrot.slane %v811, 2
    %v813 = vadd.f32 %v811, %v812
    %v814 = vrot.slane %v813, 1
    %v815 = vadd.f32 %v813, %v814
    %v816 = vrcp.pop 64.0
    %v817 = vmul.f32 %v412, %v816
    %v818 = vmul.f32 %v425, %v816
    %v819 = vmul.f32 %v438, %v816
    %v820 = vmul.f32 %v451, %v816
    %v821 = vmul.f32 %v464, %v816
    %v822 = vmul.f32 %v477, %v816
    %v823 = vmul.f32 %v490, %v816
    %v824 = vmul.f32 %v503, %v816
    %v825 = vmul.f32 %v516, %v816
    %v826 = vmul.f32 %v529, %v816
    %v827 = vmul.f32 %v542, %v816
    %v828 = vmul.f32 %v555, %v816
    %v829 = vmul.f32 %v568, %v816
    %v830 = vmul.f32 %v581, %v816
    %v831 = vmul.f32 %v594, %v816
    %v832 = vmul.f32 %v607, %v816
    %v833 = vmul.f32 %v620, %v816
    %v834 = vmul.f32 %v633, %v816
    %v835 = vmul.f32 %v646, %v816
    %v836 = vmul.f32 %v659, %v816
    %v837 = vmul.f32 %v672, %v816
    %v838 = vmul.f32 %v685, %v816
    %v839 = vmul.f32 %v698, %v816
    %v840 = vmul.f32 %v711, %v816
    %v841 = vmul.f32 %v724, %v816
    %v842 = vmul.f32 %v737, %v816
    %v843 = vmul.f32 %v750, %v816
    %v844 = vmul.f32 %v763, %v816
    %v845 = vmul.f32 %v776, %v816
    %v846 = vmul.f32 %v789, %v816
    %v847 = vmul.f32 %v802, %v816
    %v848 = vmul.f32 %v815, %v816
    %v849 = vpack.c.bf16 %v817, %v817
    %v850 = vpack.c.bf16 %v818, %v818
    %v851 = vpack.c.bf16 %v819, %v819
    %v852 = vpack.c.bf16 %v820, %v820
    %v853 = vpack.c.bf16 %v821, %v821
    %v854 = vpack.c.bf16 %v822, %v822
    %v855 = vpack.c.bf16 %v823, %v823
    %v856 = vpack.c.bf16 %v824, %v824
    %v857 = vpack.c.bf16 %v825, %v825
    %v858 = vpack.c.bf16 %v826, %v826
    %v859 = vpack.c.bf16 %v827, %v827
    %v860 = vpack.c.bf16 %v828, %v828
    %v861 = vpack.c.bf16 %v829, %v829
    %v862 = vpack.c.bf16 %v830, %v830
    %v863 = vpack.c.bf16 %v831, %v831
    %v864 = vpack.c.bf16 %v832, %v832
    %v865 = vpack.c.bf16 %v833, %v833
    %v866 = vpack.c.bf16 %v834, %v834
    %v867 = vpack.c.bf16 %v835, %v835
    %v868 = vpack.c.bf16 %v836, %v836
    %v869 = vpack.c.bf16 %v837, %v837
    %v870 = vpack.c.bf16 %v838, %v838
    %v871 = vpack.c.bf16 %v839, %v839
    %v872 = vpack.c.bf16 %v840, %v840
    %v873 = vpack.c.bf16 %v841, %v841
    %v874 = vpack.c.bf16 %v842, %v842
    %v875 = vpack.c.bf16 %v843, %v843
    %v876 = vpack.c.bf16 %v844, %v844
    %v877 = vpack.c.bf16 %v845, %v845
    %v878 = vpack.c.bf16 %v846, %v846
    %v879 = vpack.c.bf16 %v847, %v847
    %v880 = vpack.c.bf16 %v848, %v848
    %v881 = vld [vmem:[%s1] sm:$0xf]
    %v882 = vld [vmem:[%s1 + $0x4] sm:$0xf]
    %v883 = vld [vmem:[%s1 + $0x8] sm:$0xf]
    %v884 = vld [vmem:[%s1 + $0xc] sm:$0xf]
    %v885 = vld [vmem:[%s1 + $0x10] sm:$0xf]
    %v886 = vld [vmem:[%s1 + $0x14] sm:$0xf]
    %v887 = vld [vmem:[%s1 + $0x18] sm:$0xf]
    %v888 = vld [vmem:[%s1 + $0x1c] sm:$0xf]
    %v889 = vld [vmem:[%s1 + $0x20] sm:$0xf]
    %v890 = vld [vmem:[%s1 + $0x24] sm:$0xf]
    %v891 = vld [vmem:[%s1 + $0x28] sm:$0xf]
    %v892 = vld [vmem:[%s1 + $0x2c] sm:$0xf]
    %v893 = vld [vmem:[%s1 + $0x30] sm:$0xf]
    %v894 = vld [vmem:[%s1 + $0x34] sm:$0xf]
    %v895 = vld [vmem:[%s1 + $0x38] sm:$0xf]
    %v896 = vld [vmem:[%s1 + $0x3c] sm:$0xf]
    %v897 = vld [vmem:[%s1 + $0x40] sm:$0xf]
    %v898 = vld [vmem:[%s1 + $0x44] sm:$0xf]
    %v899 = vld [vmem:[%s1 + $0x48] sm:$0xf]
    %v900 = vld [vmem:[%s1 + $0x4c] sm:$0xf]
    %v901 = vld [vmem:[%s1 + $0x50] sm:$0xf]
    %v902 = vld [vmem:[%s1 + $0x54] sm:$0xf]
    %v903 = vld [vmem:[%s1 + $0x58] sm:$0xf]
    %v904 = vld [vmem:[%s1 + $0x5c] sm:$0xf]
    %v905 = vld [vmem:[%s1 + $0x60] sm:$0xf]
    %v906 = vld [vmem:[%s1 + $0x64] sm:$0xf]
    %v907 = vld [vmem:[%s1 + $0x68] sm:$0xf]
    %v908 = vld [vmem:[%s1 + $0x6c] sm:$0xf]
    %v909 = vld [vmem:[%s1 + $0x70] sm:$0xf]
    %v910 = vld [vmem:[%s1 + $0x74] sm:$0xf]
    %v911 = vld [vmem:[%s1 + $0x78] sm:$0xf]
    %v912 = vld [vmem:[%s1 + $0x7c] sm:$0xf]
    %v913 = vld [vmem:[%s1 + $0x80] sm:$0xf]
    %v914 = vld [vmem:[%s1 + $0x84] sm:$0xf]
    %v915 = vld [vmem:[%s1 + $0x88] sm:$0xf]
    %v916 = vld [vmem:[%s1 + $0x8c] sm:$0xf]
    %v917 = vld [vmem:[%s1 + $0x90] sm:$0xf]
    %v918 = vld [vmem:[%s1 + $0x94] sm:$0xf]
    %v919 = vld [vmem:[%s1 + $0x98] sm:$0xf]
    %v920 = vld [vmem:[%s1 + $0x9c] sm:$0xf]
    %v921 = vld [vmem:[%s1 + $0xa0] sm:$0xf]
    %v922 = vld [vmem:[%s1 + $0xa4] sm:$0xf]
    %v923 = vld [vmem:[%s1 + $0xa8] sm:$0xf]
    %v924 = vld [vmem:[%s1 + $0xac] sm:$0xf]
    %v925 = vld [vmem:[%s1 + $0xb0] sm:$0xf]
    %v926 = vld [vmem:[%s1 + $0xb4] sm:$0xf]
    %v927 = vld [vmem:[%s1 + $0xb8] sm:$0xf]
    %v928 = vld [vmem:[%s1 + $0xbc] sm:$0xf]
    %v929 = vld [vmem:[%s1 + $0xc0] sm:$0xf]
    %v930 = vld [vmem:[%s1 + $0xc4] sm:$0xf]
    %v931 = vld [vmem:[%s1 + $0xc8] sm:$0xf]
    %v932 = vld [vmem:[%s1 + $0xcc] sm:$0xf]
    %v933 = vld [vmem:[%s1 + $0xd0] sm:$0xf]
    %v934 = vld [vmem:[%s1 + $0xd4] sm:$0xf]
    %v935 = vld [vmem:[%s1 + $0xd8] sm:$0xf]
    %v936 = vld [vmem:[%s1 + $0xdc] sm:$0xf]
    %v937 = vld [vmem:[%s1 + $0xe0] sm:$0xf]
    %v938 = vld [vmem:[%s1 + $0xe4] sm:$0xf]
    %v939 = vld [vmem:[%s1 + $0xe8] sm:$0xf]
    %v940 = vld [vmem:[%s1 + $0xec] sm:$0xf]
    %v941 = vld [vmem:[%s1 + $0xf0] sm:$0xf]
    %v942 = vld [vmem:[%s1 + $0xf4] sm:$0xf]
    %v943 = vld [vmem:[%s1 + $0xf8] sm:$0xf]
    %v944 = vld [vmem:[%s1 + $0xfc] sm:$0xf]
    %v945 = vld [vmem:[%s1 + $0x100] sm:$0xf]
    %v946 = vld [vmem:[%s1 + $0x104] sm:$0xf]
    %v947 = vld [vmem:[%s1 + $0x108] sm:$0xf]
    %v948 = vld [vmem:[%s1 + $0x10c] sm:$0xf]
    %v949 = vld [vmem:[%s1 + $0x110] sm:$0xf]
    %v950 = vld [vmem:[%s1 + $0x114] sm:$0xf]
    %v951 = vld [vmem:[%s1 + $0x118] sm:$0xf]
    %v952 = vld [vmem:[%s1 + $0x11c] sm:$0xf]
    %v953 = vld [vmem:[%s1 + $0x120] sm:$0xf]
    %v954 = vld [vmem:[%s1 + $0x124] sm:$0xf]
    %v955 = vld [vmem:[%s1 + $0x128] sm:$0xf]
    %v956 = vld [vmem:[%s1 + $0x12c] sm:$0xf]
    %v957 = vld [vmem:[%s1 + $0x130] sm:$0xf]
    %v958 = vld [vmem:[%s1 + $0x134] sm:$0xf]
    %v959 = vld [vmem:[%s1 + $0x138] sm:$0xf]
    %v960 = vld [vmem:[%s1 + $0x13c] sm:$0xf]
    %v961 = vld [vmem:[%s1 + $0x140] sm:$0xf]
    %v962 = vld [vmem:[%s1 + $0x144] sm:$0xf]
    %v963 = vld [vmem:[%s1 + $0x148] sm:$0xf]
    %v964 = vld [vmem:[%s1 + $0x14c] sm:$0xf]
    %v965 = vld [vmem:[%s1 + $0x150] sm:$0xf]
    %v966 = vld [vmem:[%s1 + $0x154] sm:$0xf]
    %v967 = vld [vmem:[%s1 + $0x158] sm:$0xf]
    %v968 = vld [vmem:[%s1 + $0x15c] sm:$0xf]
    %v969 = vld [vmem:[%s1 + $0x160] sm:$0xf]
    %v970 = vld [vmem:[%s1 + $0x164] sm:$0xf]
    %v971 = vld [vmem:[%s1 + $0x168] sm:$0xf]
    %v972 = vld [vmem:[%s1 + $0x16c] sm:$0xf]
    %v973 = vld [vmem:[%s1 + $0x170] sm:$0xf]
    %v974 = vld [vmem:[%s1 + $0x174] sm:$0xf]
    %v975 = vld [vmem:[%s1 + $0x178] sm:$0xf]
    %v976 = vld [vmem:[%s1 + $0x17c] sm:$0xf]
    %v977 = vld [vmem:[%s1 + $0x180] sm:$0xf]
    %v978 = vld [vmem:[%s1 + $0x184] sm:$0xf]
    %v979 = vld [vmem:[%s1 + $0x188] sm:$0xf]
    %v980 = vld [vmem:[%s1 + $0x18c] sm:$0xf]
    %v981 = vld [vmem:[%s1 + $0x190] sm:$0xf]
    %v982 = vld [vmem:[%s1 + $0x194] sm:$0xf]
    %v983 = vld [vmem:[%s1 + $0x198] sm:$0xf]
    %v984 = vld [vmem:[%s1 + $0x19c] sm:$0xf]
    %v985 = vld [vmem:[%s1 + $0x1a0] sm:$0xf]
    %v986 = vld [vmem:[%s1 + $0x1a4] sm:$0xf]
    %v987 = vld [vmem:[%s1 + $0x1a8] sm:$0xf]
    %v988 = vld [vmem:[%s1 + $0x1ac] sm:$0xf]
    %v989 = vld [vmem:[%s1 + $0x1b0] sm:$0xf]
    %v990 = vld [vmem:[%s1 + $0x1b4] sm:$0xf]
    %v991 = vld [vmem:[%s1 + $0x1b8] sm:$0xf]
    %v992 = vld [vmem:[%s1 + $0x1bc] sm:$0xf]
    %v993 = vld [vmem:[%s1 + $0x1c0] sm:$0xf]
    %v994 = vld [vmem:[%s1 + $0x1c4] sm:$0xf]
    %v995 = vld [vmem:[%s1 + $0x1c8] sm:$0xf]
    %v996 = vld [vmem:[%s1 + $0x1cc] sm:$0xf]
    %v997 = vld [vmem:[%s1 + $0x1d0] sm:$0xf]
    %v998 = vld [vmem:[%s1 + $0x1d4] sm:$0xf]
    %v999 = vld [vmem:[%s1 + $0x1d8] sm:$0xf]
    %v1000 = vld [vmem:[%s1 + $0x1dc] sm:$0xf]
    %v1001 = vld [vmem:[%s1 + $0x1e0] sm:$0xf]
    %v1002 = vld [vmem:[%s1 + $0x1e4] sm:$0xf]
    %v1003 = vld [vmem:[%s1 + $0x1e8] sm:$0xf]
    %v1004 = vld [vmem:[%s1 + $0x1ec] sm:$0xf]
    %v1005 = vld [vmem:[%s1 + $0x1f0] sm:$0xf]
    %v1006 = vld [vmem:[%s1 + $0x1f4] sm:$0xf]
    %v1007 = vld [vmem:[%s1 + $0x1f8] sm:$0xf]
    %v1008 = vld [vmem:[%s1 + $0x1fc] sm:$0xf]
    %v1009 = vld [vmem:[%s1 + $0x200] sm:$0xf]
    %v1010 = vld [vmem:[%s1 + $0x204] sm:$0xf]
    %v1011 = vld [vmem:[%s1 + $0x208] sm:$0xf]
    %v1012 = vld [vmem:[%s1 + $0x20c] sm:$0xf]
    %v1013 = vld [vmem:[%s1 + $0x210] sm:$0xf]
    %v1014 = vld [vmem:[%s1 + $0x214] sm:$0xf]
    %v1015 = vld [vmem:[%s1 + $0x218] sm:$0xf]
    %v1016 = vld [vmem:[%s1 + $0x21c] sm:$0xf]
    %v1017 = vld [vmem:[%s1 + $0x220] sm:$0xf]
    %v1018 = vld [vmem:[%s1 + $0x224] sm:$0xf]
    %v1019 = vld [vmem:[%s1 + $0x228] sm:$0xf]
    %v1020 = vld [vmem:[%s1 + $0x22c] sm:$0xf]
    %v1021 = vld [vmem:[%s1 + $0x230] sm:$0xf]
    %v1022 = vld [vmem:[%s1 + $0x234] sm:$0xf]
    %v1023 = vld [vmem:[%s1 + $0x238] sm:$0xf]
    %v1024 = vld [vmem:[%s1 + $0x23c] sm:$0xf]
    %v1025 = vld [vmem:[%s1 + $0x240] sm:$0xf]
    %v1026 = vld [vmem:[%s1 + $0x244] sm:$0xf]
    %v1027 = vld [vmem:[%s1 + $0x248] sm:$0xf]
    %v1028 = vld [vmem:[%s1 + $0x24c] sm:$0xf]
    %v1029 = vld [vmem:[%s1 + $0x250] sm:$0xf]
    %v1030 = vld [vmem:[%s1 + $0x254] sm:$0xf]
    %v1031 = vld [vmem:[%s1 + $0x258] sm:$0xf]
    %v1032 = vld [vmem:[%s1 + $0x25c] sm:$0xf]
    %v1033 = vld [vmem:[%s1 + $0x260] sm:$0xf]
    %v1034 = vld [vmem:[%s1 + $0x264] sm:$0xf]
    %v1035 = vld [vmem:[%s1 + $0x268] sm:$0xf]
    %v1036 = vld [vmem:[%s1 + $0x26c] sm:$0xf]
    %v1037 = vld [vmem:[%s1 + $0x270] sm:$0xf]
    %v1038 = vld [vmem:[%s1 + $0x274] sm:$0xf]
    %v1039 = vld [vmem:[%s1 + $0x278] sm:$0xf]
    %v1040 = vld [vmem:[%s1 + $0x27c] sm:$0xf]
    %v1041 = vld [vmem:[%s1 + $0x280] sm:$0xf]
    %v1042 = vld [vmem:[%s1 + $0x284] sm:$0xf]
    %v1043 = vld [vmem:[%s1 + $0x288] sm:$0xf]
    %v1044 = vld [vmem:[%s1 + $0x28c] sm:$0xf]
    %v1045 = vld [vmem:[%s1 + $0x290] sm:$0xf]
    %v1046 = vld [vmem:[%s1 + $0x294] sm:$0xf]
    %v1047 = vld [vmem:[%s1 + $0x298] sm:$0xf]
    %v1048 = vld [vmem:[%s1 + $0x29c] sm:$0xf]
    %v1049 = vld [vmem:[%s1 + $0x2a0] sm:$0xf]
    %v1050 = vld [vmem:[%s1 + $0x2a4] sm:$0xf]
    %v1051 = vld [vmem:[%s1 + $0x2a8] sm:$0xf]
    %v1052 = vld [vmem:[%s1 + $0x2ac] sm:$0xf]
    %v1053 = vld [vmem:[%s1 + $0x2b0] sm:$0xf]
    %v1054 = vld [vmem:[%s1 + $0x2b4] sm:$0xf]
    %v1055 = vld [vmem:[%s1 + $0x2b8] sm:$0xf]
    %v1056 = vld [vmem:[%s1 + $0x2bc] sm:$0xf]
    %v1057 = vld [vmem:[%s1 + $0x2c0] sm:$0xf]
    %v1058 = vld [vmem:[%s1 + $0x2c4] sm:$0xf]
    %v1059 = vld [vmem:[%s1 + $0x2c8] sm:$0xf]
    %v1060 = vld [vmem:[%s1 + $0x2cc] sm:$0xf]
    %v1061 = vld [vmem:[%s1 + $0x2d0] sm:$0xf]
    %v1062 = vld [vmem:[%s1 + $0x2d4] sm:$0xf]
    %v1063 = vld [vmem:[%s1 + $0x2d8] sm:$0xf]
    %v1064 = vld [vmem:[%s1 + $0x2dc] sm:$0xf]
    %v1065 = vld [vmem:[%s1 + $0x2e0] sm:$0xf]
    %v1066 = vld [vmem:[%s1 + $0x2e4] sm:$0xf]
    %v1067 = vld [vmem:[%s1 + $0x2e8] sm:$0xf]
    %v1068 = vld [vmem:[%s1 + $0x2ec] sm:$0xf]
    %v1069 = vld [vmem:[%s1 + $0x2f0] sm:$0xf]
    %v1070 = vld [vmem:[%s1 + $0x2f4] sm:$0xf]
    %v1071 = vld [vmem:[%s1 + $0x2f8] sm:$0xf]
    %v1072 = vld [vmem:[%s1 + $0x2fc] sm:$0xf]
    %v1073 = vld [vmem:[%s1 + $0x300] sm:$0xf]
    %v1074 = vld [vmem:[%s1 + $0x304] sm:$0xf]
    %v1075 = vld [vmem:[%s1 + $0x308] sm:$0xf]
    %v1076 = vld [vmem:[%s1 + $0x30c] sm:$0xf]
    %v1077 = vld [vmem:[%s1 + $0x310] sm:$0xf]
    %v1078 = vld [vmem:[%s1 + $0x314] sm:$0xf]
    %v1079 = vld [vmem:[%s1 + $0x318] sm:$0xf]
    %v1080 = vld [vmem:[%s1 + $0x31c] sm:$0xf]
    %v1081 = vld [vmem:[%s1 + $0x320] sm:$0xf]
    %v1082 = vld [vmem:[%s1 + $0x324] sm:$0xf]
    %v1083 = vld [vmem:[%s1 + $0x328] sm:$0xf]
    %v1084 = vld [vmem:[%s1 + $0x32c] sm:$0xf]
    %v1085 = vld [vmem:[%s1 + $0x330] sm:$0xf]
    %v1086 = vld [vmem:[%s1 + $0x334] sm:$0xf]
    %v1087 = vld [vmem:[%s1 + $0x338] sm:$0xf]
    %v1088 = vld [vmem:[%s1 + $0x33c] sm:$0xf]
    %v1089 = vld [vmem:[%s1 + $0x340] sm:$0xf]
    %v1090 = vld [vmem:[%s1 + $0x344] sm:$0xf]
    %v1091 = vld [vmem:[%s1 + $0x348] sm:$0xf]
    %v1092 = vld [vmem:[%s1 + $0x34c] sm:$0xf]
    %v1093 = vld [vmem:[%s1 + $0x350] sm:$0xf]
    %v1094 = vld [vmem:[%s1 + $0x354] sm:$0xf]
    %v1095 = vld [vmem:[%s1 + $0x358] sm:$0xf]
    %v1096 = vld [vmem:[%s1 + $0x35c] sm:$0xf]
    %v1097 = vld [vmem:[%s1 + $0x360] sm:$0xf]
    %v1098 = vld [vmem:[%s1 + $0x364] sm:$0xf]
    %v1099 = vld [vmem:[%s1 + $0x368] sm:$0xf]
    %v1100 = vld [vmem:[%s1 + $0x36c] sm:$0xf]
    %v1101 = vld [vmem:[%s1 + $0x370] sm:$0xf]
    %v1102 = vld [vmem:[%s1 + $0x374] sm:$0xf]
    %v1103 = vld [vmem:[%s1 + $0x378] sm:$0xf]
    %v1104 = vld [vmem:[%s1 + $0x37c] sm:$0xf]
    %v1105 = vld [vmem:[%s1 + $0x380] sm:$0xf]
    %v1106 = vld [vmem:[%s1 + $0x384] sm:$0xf]
    %v1107 = vld [vmem:[%s1 + $0x388] sm:$0xf]
    %v1108 = vld [vmem:[%s1 + $0x38c] sm:$0xf]
    %v1109 = vld [vmem:[%s1 + $0x390] sm:$0xf]
    %v1110 = vld [vmem:[%s1 + $0x394] sm:$0xf]
    %v1111 = vld [vmem:[%s1 + $0x398] sm:$0xf]
    %v1112 = vld [vmem:[%s1 + $0x39c] sm:$0xf]
    %v1113 = vld [vmem:[%s1 + $0x3a0] sm:$0xf]
    %v1114 = vld [vmem:[%s1 + $0x3a4] sm:$0xf]
    %v1115 = vld [vmem:[%s1 + $0x3a8] sm:$0xf]
    %v1116 = vld [vmem:[%s1 + $0x3ac] sm:$0xf]
    %v1117 = vld [vmem:[%s1 + $0x3b0] sm:$0xf]
    %v1118 = vld [vmem:[%s1 + $0x3b4] sm:$0xf]
    %v1119 = vld [vmem:[%s1 + $0x3b8] sm:$0xf]
    %v1120 = vld [vmem:[%s1 + $0x3bc] sm:$0xf]
    %v1121 = vld [vmem:[%s1 + $0x3c0] sm:$0xf]
    %v1122 = vld [vmem:[%s1 + $0x3c4] sm:$0xf]
    %v1123 = vld [vmem:[%s1 + $0x3c8] sm:$0xf]
    %v1124 = vld [vmem:[%s1 + $0x3cc] sm:$0xf]
    %v1125 = vld [vmem:[%s1 + $0x3d0] sm:$0xf]
    %v1126 = vld [vmem:[%s1 + $0x3d4] sm:$0xf]
    %v1127 = vld [vmem:[%s1 + $0x3d8] sm:$0xf]
    %v1128 = vld [vmem:[%s1 + $0x3dc] sm:$0xf]
    %v1129 = vld [vmem:[%s1 + $0x3e0] sm:$0xf]
    %v1130 = vld [vmem:[%s1 + $0x3e4] sm:$0xf]
    %v1131 = vld [vmem:[%s1 + $0x3e8] sm:$0xf]
    %v1132 = vld [vmem:[%s1 + $0x3ec] sm:$0xf]
    %v1133 = vld [vmem:[%s1 + $0x3f0] sm:$0xf]
    %v1134 = vld [vmem:[%s1 + $0x3f4] sm:$0xf]
    %v1135 = vld [vmem:[%s1 + $0x3f8] sm:$0xf]
    %v1136 = vld [vmem:[%s1 + $0x3fc] sm:$0xf]
    %v1137 = vld [vmem:[%s2] sm:$0x1]
    %v1139 = vlaneseq
    %v1140 = vshrl.u32 %v1139, 7
    %v1141 = vsub.s32 0, %v1140
    %v1142 = vrot.slane %v1137, %v1141
    %v1176 = vunpack.c.l.b16 %v849
    %v1177 = vunpack.c.l.b16 %v850
    %v1178 = vunpack.c.l.b16 %v851
    %v1179 = vunpack.c.l.b16 %v852
    %v1180 = vunpack.c.l.b16 %v853
    %v1181 = vunpack.c.l.b16 %v854
    %v1182 = vunpack.c.l.b16 %v855
    %v1183 = vunpack.c.l.b16 %v856
    %v1184 = vunpack.c.l.b16 %v857
    %v1185 = vunpack.c.l.b16 %v858
    %v1186 = vunpack.c.l.b16 %v859
    %v1187 = vunpack.c.l.b16 %v860
    %v1188 = vunpack.c.l.b16 %v861
    %v1189 = vunpack.c.l.b16 %v862
    %v1190 = vunpack.c.l.b16 %v863
    %v1191 = vunpack.c.l.b16 %v864
    %v1192 = vunpack.c.l.b16 %v865
    %v1193 = vunpack.c.l.b16 %v866
    %v1194 = vunpack.c.l.b16 %v867
    %v1195 = vunpack.c.l.b16 %v868
    %v1196 = vunpack.c.l.b16 %v869
    %v1197 = vunpack.c.l.b16 %v870
    %v1198 = vunpack.c.l.b16 %v871
    %v1199 = vunpack.c.l.b16 %v872
    %v1200 = vunpack.c.l.b16 %v873
    %v1201 = vunpack.c.l.b16 %v874
    %v1202 = vunpack.c.l.b16 %v875
    %v1203 = vunpack.c.l.b16 %v876
    %v1204 = vunpack.c.l.b16 %v877
    %v1205 = vunpack.c.l.b16 %v878
    %v1206 = vunpack.c.l.b16 %v879
    %v1207 = vunpack.c.l.b16 %v880
    %vm1208 = vcmask 1041409
    %v1209 = vsel %vm1208, %v1192, %v1176
    %v1210 = vsel %vm1208, %v1193, %v1177
    %v1211 = vsel %vm1208, %v1194, %v1178
    %v1212 = vsel %vm1208, %v1195, %v1179
    %v1213 = vsel %vm1208, %v1196, %v1180
    %v1214 = vsel %vm1208, %v1197, %v1181
    %v1215 = vsel %vm1208, %v1198, %v1182
    %v1216 = vsel %vm1208, %v1199, %v1183
    %v1217 = vsel %vm1208, %v1200, %v1184
    %v1218 = vsel %vm1208, %v1201, %v1185
    %v1219 = vsel %vm1208, %v1202, %v1186
    %v1220 = vsel %vm1208, %v1203, %v1187
    %v1221 = vsel %vm1208, %v1204, %v1188
    %v1222 = vsel %vm1208, %v1205, %v1189
    %v1223 = vsel %vm1208, %v1206, %v1190
    %v1224 = vsel %vm1208, %v1207, %v1191
    %v1225 = vpack.c.b16 %v1209, %v1209
    %v1226 = vpack.c.b16 %v1210, %v1210
    %v1227 = vpack.c.b16 %v1211, %v1211
    %v1228 = vpack.c.b16 %v1212, %v1212
    %v1229 = vpack.c.b16 %v1213, %v1213
    %v1230 = vpack.c.b16 %v1214, %v1214
    %v1231 = vpack.c.b16 %v1215, %v1215
    %v1232 = vpack.c.b16 %v1216, %v1216
    %v1233 = vpack.c.b16 %v1217, %v1217
    %v1234 = vpack.c.b16 %v1218, %v1218
    %v1235 = vpack.c.b16 %v1219, %v1219
    %v1236 = vpack.c.b16 %v1220, %v1220
    %v1237 = vpack.c.b16 %v1221, %v1221
    %v1238 = vpack.c.b16 %v1222, %v1222
    %v1239 = vpack.c.b16 %v1223, %v1223
    %v1240 = vpack.c.b16 %v1224, %v1224
    %v1513 = vunpack.c.l.b16 %v881
    %v1514 = vunpack.c.l.b16 %v882
    %v1515 = vunpack.c.l.b16 %v883
    %v1516 = vunpack.c.l.b16 %v884
    %v1517 = vunpack.c.l.b16 %v885
    %v1518 = vunpack.c.l.b16 %v886
    %v1519 = vunpack.c.l.b16 %v887
    %v1520 = vunpack.c.l.b16 %v888
    %v1521 = vunpack.c.l.b16 %v889
    %v1522 = vunpack.c.l.b16 %v890
    %v1523 = vunpack.c.l.b16 %v891
    %v1524 = vunpack.c.l.b16 %v892
    %v1525 = vunpack.c.l.b16 %v893
    %v1526 = vunpack.c.l.b16 %v894
    %v1527 = vunpack.c.l.b16 %v895
    %v1528 = vunpack.c.l.b16 %v896
    %v1529 = vunpack.c.l.b16 %v897
    %v1530 = vunpack.c.l.b16 %v898
    %v1531 = vunpack.c.l.b16 %v899
    %v1532 = vunpack.c.l.b16 %v900
    %v1533 = vunpack.c.l.b16 %v901
    %v1534 = vunpack.c.l.b16 %v902
    %v1535 = vunpack.c.l.b16 %v903
    %v1536 = vunpack.c.l.b16 %v904
    %v1537 = vunpack.c.l.b16 %v905
    %v1538 = vunpack.c.l.b16 %v906
    %v1539 = vunpack.c.l.b16 %v907
    %v1540 = vunpack.c.l.b16 %v908
    %v1541 = vunpack.c.l.b16 %v909
    %v1542 = vunpack.c.l.b16 %v910
    %v1543 = vunpack.c.l.b16 %v911
    %v1544 = vunpack.c.l.b16 %v912
    %v1545 = vunpack.c.l.b16 %v913
    %v1546 = vunpack.c.l.b16 %v914
    %v1547 = vunpack.c.l.b16 %v915
    %v1548 = vunpack.c.l.b16 %v916
    %v1549 = vunpack.c.l.b16 %v917
    %v1550 = vunpack.c.l.b16 %v918
    %v1551 = vunpack.c.l.b16 %v919
    %v1552 = vunpack.c.l.b16 %v920
    %v1553 = vunpack.c.l.b16 %v921
    %v1554 = vunpack.c.l.b16 %v922
    %v1555 = vunpack.c.l.b16 %v923
    %v1556 = vunpack.c.l.b16 %v924
    %v1557 = vunpack.c.l.b16 %v925
    %v1558 = vunpack.c.l.b16 %v926
    %v1559 = vunpack.c.l.b16 %v927
    %v1560 = vunpack.c.l.b16 %v928
    %v1561 = vunpack.c.l.b16 %v929
    %v1562 = vunpack.c.l.b16 %v930
    %v1563 = vunpack.c.l.b16 %v931
    %v1564 = vunpack.c.l.b16 %v932
    %v1565 = vunpack.c.l.b16 %v933
    %v1566 = vunpack.c.l.b16 %v934
    %v1567 = vunpack.c.l.b16 %v935
    %v1568 = vunpack.c.l.b16 %v936
    %v1569 = vunpack.c.l.b16 %v937
    %v1570 = vunpack.c.l.b16 %v938
    %v1571 = vunpack.c.l.b16 %v939
    %v1572 = vunpack.c.l.b16 %v940
    %v1573 = vunpack.c.l.b16 %v941
    %v1574 = vunpack.c.l.b16 %v942
    %v1575 = vunpack.c.l.b16 %v943
    %v1576 = vunpack.c.l.b16 %v944
    %v1577 = vunpack.c.l.b16 %v945
    %v1578 = vunpack.c.l.b16 %v946
    %v1579 = vunpack.c.l.b16 %v947
    %v1580 = vunpack.c.l.b16 %v948
    %v1581 = vunpack.c.l.b16 %v949
    %v1582 = vunpack.c.l.b16 %v950
    %v1583 = vunpack.c.l.b16 %v951
    %v1584 = vunpack.c.l.b16 %v952
    %v1585 = vunpack.c.l.b16 %v953
    %v1586 = vunpack.c.l.b16 %v954
    %v1587 = vunpack.c.l.b16 %v955
    %v1588 = vunpack.c.l.b16 %v956
    %v1589 = vunpack.c.l.b16 %v957
    %v1590 = vunpack.c.l.b16 %v958
    %v1591 = vunpack.c.l.b16 %v959
    %v1592 = vunpack.c.l.b16 %v960
    %v1593 = vunpack.c.l.b16 %v961
    %v1594 = vunpack.c.l.b16 %v962
    %v1595 = vunpack.c.l.b16 %v963
    %v1596 = vunpack.c.l.b16 %v964
    %v1597 = vunpack.c.l.b16 %v965
    %v1598 = vunpack.c.l.b16 %v966
    %v1599 = vunpack.c.l.b16 %v967
    %v1600 = vunpack.c.l.b16 %v968
    %v1601 = vunpack.c.l.b16 %v969
    %v1602 = vunpack.c.l.b16 %v970
    %v1603 = vunpack.c.l.b16 %v971
    %v1604 = vunpack.c.l.b16 %v972
    %v1605 = vunpack.c.l.b16 %v973
    %v1606 = vunpack.c.l.b16 %v974
    %v1607 = vunpack.c.l.b16 %v975
    %v1608 = vunpack.c.l.b16 %v976
    %v1609 = vunpack.c.l.b16 %v977
    %v1610 = vunpack.c.l.b16 %v978
    %v1611 = vunpack.c.l.b16 %v979
    %v1612 = vunpack.c.l.b16 %v980
    %v1613 = vunpack.c.l.b16 %v981
    %v1614 = vunpack.c.l.b16 %v982
    %v1615 = vunpack.c.l.b16 %v983
    %v1616 = vunpack.c.l.b16 %v984
    %v1617 = vunpack.c.l.b16 %v985
    %v1618 = vunpack.c.l.b16 %v986
    %v1619 = vunpack.c.l.b16 %v987
    %v1620 = vunpack.c.l.b16 %v988
    %v1621 = vunpack.c.l.b16 %v989
    %v1622 = vunpack.c.l.b16 %v990
    %v1623 = vunpack.c.l.b16 %v991
    %v1624 = vunpack.c.l.b16 %v992
    %v1625 = vunpack.c.l.b16 %v993
    %v1626 = vunpack.c.l.b16 %v994
    %v1627 = vunpack.c.l.b16 %v995
    %v1628 = vunpack.c.l.b16 %v996
    %v1629 = vunpack.c.l.b16 %v997
    %v1630 = vunpack.c.l.b16 %v998
    %v1631 = vunpack.c.l.b16 %v999
    %v1632 = vunpack.c.l.b16 %v1000
    %v1633 = vunpack.c.l.b16 %v1001
    %v1634 = vunpack.c.l.b16 %v1002
    %v1635 = vunpack.c.l.b16 %v1003
    %v1636 = vunpack.c.l.b16 %v1004
    %v1637 = vunpack.c.l.b16 %v1005
    %v1638 = vunpack.c.l.b16 %v1006
    %v1639 = vunpack.c.l.b16 %v1007
    %v1640 = vunpack.c.l.b16 %v1008
    %v1641 = vunpack.c.l.b16 %v1009
    %v1642 = vunpack.c.l.b16 %v1010
    %v1643 = vunpack.c.l.b16 %v1011
    %v1644 = vunpack.c.l.b16 %v1012
    %v1645 = vunpack.c.l.b16 %v1013
    %v1646 = vunpack.c.l.b16 %v1014
    %v1647 = vunpack.c.l.b16 %v1015
    %v1648 = vunpack.c.l.b16 %v1016
    %v1649 = vunpack.c.l.b16 %v1017
    %v1650 = vunpack.c.l.b16 %v1018
    %v1651 = vunpack.c.l.b16 %v1019
    %v1652 = vunpack.c.l.b16 %v1020
    %v1653 = vunpack.c.l.b16 %v1021
    %v1654 = vunpack.c.l.b16 %v1022
    %v1655 = vunpack.c.l.b16 %v1023
    %v1656 = vunpack.c.l.b16 %v1024
    %v1657 = vunpack.c.l.b16 %v1025
    %v1658 = vunpack.c.l.b16 %v1026
    %v1659 = vunpack.c.l.b16 %v1027
    %v1660 = vunpack.c.l.b16 %v1028
    %v1661 = vunpack.c.l.b16 %v1029
    %v1662 = vunpack.c.l.b16 %v1030
    %v1663 = vunpack.c.l.b16 %v1031
    %v1664 = vunpack.c.l.b16 %v1032
    %v1665 = vunpack.c.l.b16 %v1033
    %v1666 = vunpack.c.l.b16 %v1034
    %v1667 = vunpack.c.l.b16 %v1035
    %v1668 = vunpack.c.l.b16 %v1036
    %v1669 = vunpack.c.l.b16 %v1037
    %v1670 = vunpack.c.l.b16 %v1038
    %v1671 = vunpack.c.l.b16 %v1039
    %v1672 = vunpack.c.l.b16 %v1040
    %v1673 = vunpack.c.l.b16 %v1041
    %v1674 = vunpack.c.l.b16 %v1042
    %v1675 = vunpack.c.l.b16 %v1043
    %v1676 = vunpack.c.l.b16 %v1044
    %v1677 = vunpack.c.l.b16 %v1045
    %v1678 = vunpack.c.l.b16 %v1046
    %v1679 = vunpack.c.l.b16 %v1047
    %v1680 = vunpack.c.l.b16 %v1048
    %v1681 = vunpack.c.l.b16 %v1049
    %v1682 = vunpack.c.l.b16 %v1050
    %v1683 = vunpack.c.l.b16 %v1051
    %v1684 = vunpack.c.l.b16 %v1052
    %v1685 = vunpack.c.l.b16 %v1053
    %v1686 = vunpack.c.l.b16 %v1054
    %v1687 = vunpack.c.l.b16 %v1055
    %v1688 = vunpack.c.l.b16 %v1056
    %v1689 = vunpack.c.l.b16 %v1057
    %v1690 = vunpack.c.l.b16 %v1058
    %v1691 = vunpack.c.l.b16 %v1059
    %v1692 = vunpack.c.l.b16 %v1060
    %v1693 = vunpack.c.l.b16 %v1061
    %v1694 = vunpack.c.l.b16 %v1062
    %v1695 = vunpack.c.l.b16 %v1063
    %v1696 = vunpack.c.l.b16 %v1064
    %v1697 = vunpack.c.l.b16 %v1065
    %v1698 = vunpack.c.l.b16 %v1066
    %v1699 = vunpack.c.l.b16 %v1067
    %v1700 = vunpack.c.l.b16 %v1068
    %v1701 = vunpack.c.l.b16 %v1069
    %v1702 = vunpack.c.l.b16 %v1070
    %v1703 = vunpack.c.l.b16 %v1071
    %v1704 = vunpack.c.l.b16 %v1072
    %v1705 = vunpack.c.l.b16 %v1073
    %v1706 = vunpack.c.l.b16 %v1074
    %v1707 = vunpack.c.l.b16 %v1075
    %v1708 = vunpack.c.l.b16 %v1076
    %v1709 = vunpack.c.l.b16 %v1077
    %v1710 = vunpack.c.l.b16 %v1078
    %v1711 = vunpack.c.l.b16 %v1079
    %v1712 = vunpack.c.l.b16 %v1080
    %v1713 = vunpack.c.l.b16 %v1081
    %v1714 = vunpack.c.l.b16 %v1082
    %v1715 = vunpack.c.l.b16 %v1083
    %v1716 = vunpack.c.l.b16 %v1084
    %v1717 = vunpack.c.l.b16 %v1085
    %v1718 = vunpack.c.l.b16 %v1086
    %v1719 = vunpack.c.l.b16 %v1087
    %v1720 = vunpack.c.l.b16 %v1088
    %v1721 = vunpack.c.l.b16 %v1089
    %v1722 = vunpack.c.l.b16 %v1090
    %v1723 = vunpack.c.l.b16 %v1091
    %v1724 = vunpack.c.l.b16 %v1092
    %v1725 = vunpack.c.l.b16 %v1093
    %v1726 = vunpack.c.l.b16 %v1094
    %v1727 = vunpack.c.l.b16 %v1095
    %v1728 = vunpack.c.l.b16 %v1096
    %v1729 = vunpack.c.l.b16 %v1097
    %v1730 = vunpack.c.l.b16 %v1098
    %v1731 = vunpack.c.l.b16 %v1099
    %v1732 = vunpack.c.l.b16 %v1100
    %v1733 = vunpack.c.l.b16 %v1101
    %v1734 = vunpack.c.l.b16 %v1102
    %v1735 = vunpack.c.l.b16 %v1103
    %v1736 = vunpack.c.l.b16 %v1104
    %v1737 = vunpack.c.l.b16 %v1105
    %v1738 = vunpack.c.l.b16 %v1106
    %v1739 = vunpack.c.l.b16 %v1107
    %v1740 = vunpack.c.l.b16 %v1108
    %v1741 = vunpack.c.l.b16 %v1109
    %v1742 = vunpack.c.l.b16 %v1110
    %v1743 = vunpack.c.l.b16 %v1111
    %v1744 = vunpack.c.l.b16 %v1112
    %v1745 = vunpack.c.l.b16 %v1113
    %v1746 = vunpack.c.l.b16 %v1114
    %v1747 = vunpack.c.l.b16 %v1115
    %v1748 = vunpack.c.l.b16 %v1116
    %v1749 = vunpack.c.l.b16 %v1117
    %v1750 = vunpack.c.l.b16 %v1118
    %v1751 = vunpack.c.l.b16 %v1119
    %v1752 = vunpack.c.l.b16 %v1120
    %v1753 = vunpack.c.l.b16 %v1121
    %v1754 = vunpack.c.l.b16 %v1122
    %v1755 = vunpack.c.l.b16 %v1123
    %v1756 = vunpack.c.l.b16 %v1124
    %v1757 = vunpack.c.l.b16 %v1125
    %v1758 = vunpack.c.l.b16 %v1126
    %v1759 = vunpack.c.l.b16 %v1127
    %v1760 = vunpack.c.l.b16 %v1128
    %v1761 = vunpack.c.l.b16 %v1129
    %v1762 = vunpack.c.l.b16 %v1130
    %v1763 = vunpack.c.l.b16 %v1131
    %v1764 = vunpack.c.l.b16 %v1132
    %v1765 = vunpack.c.l.b16 %v1133
    %v1766 = vunpack.c.l.b16 %v1134
    %v1767 = vunpack.c.l.b16 %v1135
    %v1768 = vunpack.c.l.b16 %v1136
    %v1769 = vpack.c.b16 %v1514, %v1513
    %v1770 = vpack.c.b16 %v1516, %v1515
    %v1771 = vpack.c.b16 %v1518, %v1517
    %v1772 = vpack.c.b16 %v1520, %v1519
    %v1773 = vpack.c.b16 %v1522, %v1521
    %v1774 = vpack.c.b16 %v1524, %v1523
    %v1775 = vpack.c.b16 %v1526, %v1525
    %v1776 = vpack.c.b16 %v1528, %v1527
    %v1777 = vpack.c.b16 %v1530, %v1529
    %v1778 = vpack.c.b16 %v1532, %v1531
    %v1779 = vpack.c.b16 %v1534, %v1533
    %v1780 = vpack.c.b16 %v1536, %v1535
    %v1781 = vpack.c.b16 %v1538, %v1537
    %v1782 = vpack.c.b16 %v1540, %v1539
    %v1783 = vpack.c.b16 %v1542, %v1541
    %v1784 = vpack.c.b16 %v1544, %v1543
    %v1785 = vpack.c.b16 %v1546, %v1545
    %v1786 = vpack.c.b16 %v1548, %v1547
    %v1787 = vpack.c.b16 %v1550, %v1549
    %v1788 = vpack.c.b16 %v1552, %v1551
    %v1789 = vpack.c.b16 %v1554, %v1553
    %v1790 = vpack.c.b16 %v1556, %v1555
    %v1791 = vpack.c.b16 %v1558, %v1557
    %v1792 = vpack.c.b16 %v1560, %v1559
    %v1793 = vpack.c.b16 %v1562, %v1561
    %v1794 = vpack.c.b16 %v1564, %v1563
    %v1795 = vpack.c.b16 %v1566, %v1565
    %v1796 = vpack.c.b16 %v1568, %v1567
    %v1797 = vpack.c.b16 %v1570, %v1569
    %v1798 = vpack.c.b16 %v1572, %v1571
    %v1799 = vpack.c.b16 %v1574, %v1573
    %v1800 = vpack.c.b16 %v1576, %v1575
    %v1801 = vpack.c.b16 %v1578, %v1577
    %v1802 = vpack.c.b16 %v1580, %v1579
    %v1803 = vpack.c.b16 %v1582, %v1581
    %v1804 = vpack.c.b16 %v1584, %v1583
    %v1805 = vpack.c.b16 %v1586, %v1585
    %v1806 = vpack.c.b16 %v1588, %v1587
    %v1807 = vpack.c.b16 %v1590, %v1589
    %v1808 = vpack.c.b16 %v1592, %v1591
    %v1809 = vpack.c.b16 %v1594, %v1593
    %v1810 = vpack.c.b16 %v1596, %v1595
    %v1811 = vpack.c.b16 %v1598, %v1597
    %v1812 = vpack.c.b16 %v1600, %v1599
    %v1813 = vpack.c.b16 %v1602, %v1601
    %v1814 = vpack.c.b16 %v1604, %v1603
    %v1815 = vpack.c.b16 %v1606, %v1605
    %v1816 = vpack.c.b16 %v1608, %v1607
    %v1817 = vpack.c.b16 %v1610, %v1609
    %v1818 = vpack.c.b16 %v1612, %v1611
    %v1819 = vpack.c.b16 %v1614, %v1613
    %v1820 = vpack.c.b16 %v1616, %v1615
    %v1821 = vpack.c.b16 %v1618, %v1617
    %v1822 = vpack.c.b16 %v1620, %v1619
    %v1823 = vpack.c.b16 %v1622, %v1621
    %v1824 = vpack.c.b16 %v1624, %v1623
    %v1825 = vpack.c.b16 %v1626, %v1625
    %v1826 = vpack.c.b16 %v1628, %v1627
    %v1827 = vpack.c.b16 %v1630, %v1629
    %v1828 = vpack.c.b16 %v1632, %v1631
    %v1829 = vpack.c.b16 %v1634, %v1633
    %v1830 = vpack.c.b16 %v1636, %v1635
    %v1831 = vpack.c.b16 %v1638, %v1637
    %v1832 = vpack.c.b16 %v1640, %v1639
    %v1833 = vpack.c.b16 %v1642, %v1641
    %v1834 = vpack.c.b16 %v1644, %v1643
    %v1835 = vpack.c.b16 %v1646, %v1645
    %v1836 = vpack.c.b16 %v1648, %v1647
    %v1837 = vpack.c.b16 %v1650, %v1649
    %v1838 = vpack.c.b16 %v1652, %v1651
    %v1839 = vpack.c.b16 %v1654, %v1653
    %v1840 = vpack.c.b16 %v1656, %v1655
    %v1841 = vpack.c.b16 %v1658, %v1657
    %v1842 = vpack.c.b16 %v1660, %v1659
    %v1843 = vpack.c.b16 %v1662, %v1661
    %v1844 = vpack.c.b16 %v1664, %v1663
    %v1845 = vpack.c.b16 %v1666, %v1665
    %v1846 = vpack.c.b16 %v1668, %v1667
    %v1847 = vpack.c.b16 %v1670, %v1669
    %v1848 = vpack.c.b16 %v1672, %v1671
    %v1849 = vpack.c.b16 %v1674, %v1673
    %v1850 = vpack.c.b16 %v1676, %v1675
    %v1851 = vpack.c.b16 %v1678, %v1677
    %v1852 = vpack.c.b16 %v1680, %v1679
    %v1853 = vpack.c.b16 %v1682, %v1681
    %v1854 = vpack.c.b16 %v1684, %v1683
    %v1855 = vpack.c.b16 %v1686, %v1685
    %v1856 = vpack.c.b16 %v1688, %v1687
    %v1857 = vpack.c.b16 %v1690, %v1689
    %v1858 = vpack.c.b16 %v1692, %v1691
    %v1859 = vpack.c.b16 %v1694, %v1693
    %v1860 = vpack.c.b16 %v1696, %v1695
    %v1861 = vpack.c.b16 %v1698, %v1697
    %v1862 = vpack.c.b16 %v1700, %v1699
    %v1863 = vpack.c.b16 %v1702, %v1701
    %v1864 = vpack.c.b16 %v1704, %v1703
    %v1865 = vpack.c.b16 %v1706, %v1705
    %v1866 = vpack.c.b16 %v1708, %v1707
    %v1867 = vpack.c.b16 %v1710, %v1709
    %v1868 = vpack.c.b16 %v1712, %v1711
    %v1869 = vpack.c.b16 %v1714, %v1713
    %v1870 = vpack.c.b16 %v1716, %v1715
    %v1871 = vpack.c.b16 %v1718, %v1717
    %v1872 = vpack.c.b16 %v1720, %v1719
    %v1873 = vpack.c.b16 %v1722, %v1721
    %v1874 = vpack.c.b16 %v1724, %v1723
    %v1875 = vpack.c.b16 %v1726, %v1725
    %v1876 = vpack.c.b16 %v1728, %v1727
    %v1877 = vpack.c.b16 %v1730, %v1729
    %v1878 = vpack.c.b16 %v1732, %v1731
    %v1879 = vpack.c.b16 %v1734, %v1733
    %v1880 = vpack.c.b16 %v1736, %v1735
    %v1881 = vpack.c.b16 %v1738, %v1737
    %v1882 = vpack.c.b16 %v1740, %v1739
    %v1883 = vpack.c.b16 %v1742, %v1741
    %v1884 = vpack.c.b16 %v1744, %v1743
    %v1885 = vpack.c.b16 %v1746, %v1745
    %v1886 = vpack.c.b16 %v1748, %v1747
    %v1887 = vpack.c.b16 %v1750, %v1749
    %v1888 = vpack.c.b16 %v1752, %v1751
    %v1889 = vpack.c.b16 %v1754, %v1753
    %v1890 = vpack.c.b16 %v1756, %v1755
    %v1891 = vpack.c.b16 %v1758, %v1757
    %v1892 = vpack.c.b16 %v1760, %v1759
    %v1893 = vpack.c.b16 %v1762, %v1761
    %v1894 = vpack.c.b16 %v1764, %v1763
    %v1895 = vpack.c.b16 %v1766, %v1765
    %v1896 = vpack.c.b16 %v1768, %v1767
    %2025 = vmatprep.subr.bf16.mxu0 0
    %2026 = vmatpush1.bf16.msra.mxu0 %v1769
    %2027 = vmatprep.subr.bf16.mxu0 0
    %2028 = vmatpush1.bf16.msra.mxu0 %v1770
    %2029 = vmatprep.subr.bf16.mxu0 0
    %2030 = vmatpush1.bf16.msra.mxu0 %v1771
    %2031 = vmatprep.subr.bf16.mxu0 0
    %2032 = vmatpush1.bf16.msra.mxu0 %v1772
    %2033 = vmatprep.subr.bf16.mxu0 0
    %2034 = vmatpush1.bf16.msra.mxu0 %v1773
    %2035 = vmatprep.subr.bf16.mxu0 0
    %2036 = vmatpush1.bf16.msra.mxu0 %v1774
    %2037 = vmatprep.subr.bf16.mxu0 0
    %2038 = vmatpush1.bf16.msra.mxu0 %v1775
    %2039 = vmatprep.subr.bf16.mxu0 0
    %2040 = vmatpush1.bf16.msra.mxu0 %v1776
    %2041 = vmatprep.subr.bf16.mxu0 0
    %2042 = vmatpush1.bf16.msra.mxu0 %v1777
    %2043 = vmatprep.subr.bf16.mxu0 0
    %2044 = vmatpush1.bf16.msra.mxu0 %v1778
    %2045 = vmatprep.subr.bf16.mxu0 0
    %2046 = vmatpush1.bf16.msra.mxu0 %v1779
    %2047 = vmatprep.subr.bf16.mxu0 0
    %2048 = vmatpush1.bf16.msra.mxu0 %v1780
    %2049 = vmatprep.subr.bf16.mxu0 0
    %2050 = vmatpush1.bf16.msra.mxu0 %v1781
    %2051 = vmatprep.subr.bf16.mxu0 0
    %2052 = vmatpush1.bf16.msra.mxu0 %v1782
    %2053 = vmatprep.subr.bf16.mxu0 0
    %2054 = vmatpush1.bf16.msra.mxu0 %v1783
    %2055 = vmatprep.subr.bf16.mxu0 0
    %2056 = vmatpush1.bf16.msra.mxu0 %v1784
    %2057 = vmatprep.mubr.bf16.mxu0 %v1226
    %2058 = vmatmul.mubr.bf16.gmra.mrb[0].mxu0 %v1225
    %v2059 = vpop.f32.mrb[0].mxu0
    %v2060 = vadd.f32 %v1142, %v2059
    %v2061 = vpop.f32.mrb[0].mxu0
    %v2062 = vpop.f32.mrb[0].mxu0
    %v2063 = vpop.f32.mrb[0].mxu0
    %2064 = vdwg.mxu0
    %2065 = vmatprep.subr.bf16.mxu0 0
    %2066 = vmatpush1.bf16.msra.mxu0 %v1785
    %2067 = vmatprep.subr.bf16.mxu0 0
    %2068 = vmatpush1.bf16.msra.mxu0 %v1786
    %2069 = vmatprep.subr.bf16.mxu0 0
    %2070 = vmatpush1.bf16.msra.mxu0 %v1787
    %2071 = vmatprep.subr.bf16.mxu0 0
    %2072 = vmatpush1.bf16.msra.mxu0 %v1788
    %2073 = vmatprep.subr.bf16.mxu0 0
    %2074 = vmatpush1.bf16.msra.mxu0 %v1789
    %2075 = vmatprep.subr.bf16.mxu0 0
    %2076 = vmatpush1.bf16.msra.mxu0 %v1790
    %2077 = vmatprep.subr.bf16.mxu0 0
    %2078 = vmatpush1.bf16.msra.mxu0 %v1791
    %2079 = vmatprep.subr.bf16.mxu0 0
    %2080 = vmatpush1.bf16.msra.mxu0 %v1792
    %2081 = vmatprep.subr.bf16.mxu0 0
    %2082 = vmatpush1.bf16.msra.mxu0 %v1793
    %2083 = vmatprep.subr.bf16.mxu0 0
    %2084 = vmatpush1.bf16.msra.mxu0 %v1794
    %2085 = vmatprep.subr.bf16.mxu0 0
    %2086 = vmatpush1.bf16.msra.mxu0 %v1795
    %2087 = vmatprep.subr.bf16.mxu0 0
    %2088 = vmatpush1.bf16.msra.mxu0 %v1796
    %2089 = vmatprep.subr.bf16.mxu0 0
    %2090 = vmatpush1.bf16.msra.mxu0 %v1797
    %2091 = vmatprep.subr.bf16.mxu0 0
    %2092 = vmatpush1.bf16.msra.mxu0 %v1798
    %2093 = vmatprep.subr.bf16.mxu0 0
    %2094 = vmatpush1.bf16.msra.mxu0 %v1799
    %2095 = vmatprep.subr.bf16.mxu0 0
    %2096 = vmatpush1.bf16.msra.mxu0 %v1800
    %2097 = vmatprep.mubr.bf16.mxu0 %v1228
    %2098 = vmatmul.mubr.bf16.gmra.mrb[0].mxu0 %v1227
    %v2099 = vpop.f32.mrb[0].mxu0
    %v2100 = vadd.f32 %v2060, %v2099
    %v2101 = vpop.f32.mrb[0].mxu0
    %v2102 = vpop.f32.mrb[0].mxu0
    %v2103 = vpop.f32.mrb[0].mxu0
    %2104 = vdwg.mxu0
    %2105 = vmatprep.subr.bf16.mxu0 0
    %2106 = vmatpush1.bf16.msra.mxu0 %v1801
    %2107 = vmatprep.subr.bf16.mxu0 0
    %2108 = vmatpush1.bf16.msra.mxu0 %v1802
    %2109 = vmatprep.subr.bf16.mxu0 0
    %2110 = vmatpush1.bf16.msra.mxu0 %v1803
    %2111 = vmatprep.subr.bf16.mxu0 0
    %2112 = vmatpush1.bf16.msra.mxu0 %v1804
    %2113 = vmatprep.subr.bf16.mxu0 0
    %2114 = vmatpush1.bf16.msra.mxu0 %v1805
    %2115 = vmatprep.subr.bf16.mxu0 0
    %2116 = vmatpush1.bf16.msra.mxu0 %v1806
    %2117 = vmatprep.subr.bf16.mxu0 0
    %2118 = vmatpush1.bf16.msra.mxu0 %v1807
    %2119 = vmatprep.subr.bf16.mxu0 0
    %2120 = vmatpush1.bf16.msra.mxu0 %v1808
    %2121 = vmatprep.subr.bf16.mxu0 0
    %2122 = vmatpush1.bf16.msra.mxu0 %v1809
    %2123 = vmatprep.subr.bf16.mxu0 0
    %2124 = vmatpush1.bf16.msra.mxu0 %v1810
    %2125 = vmatprep.subr.bf16.mxu0 0
    %2126 = vmatpush1.bf16.msra.mxu0 %v1811
    %2127 = vmatprep.subr.bf16.mxu0 0
    %2128 = vmatpush1.bf16.msra.mxu0 %v1812
    %2129 = vmatprep.subr.bf16.mxu0 0
    %2130 = vmatpush1.bf16.msra.mxu0 %v1813
    %2131 = vmatprep.subr.bf16.mxu0 0
    %2132 = vmatpush1.bf16.msra.mxu0 %v1814
    %2133 = vmatprep.subr.bf16.mxu0 0
    %2134 = vmatpush1.bf16.msra.mxu0 %v1815
    %2135 = vmatprep.subr.bf16.mxu0 0
    %2136 = vmatpush1.bf16.msra.mxu0 %v1816
    %2137 = vmatprep.mubr.bf16.mxu0 %v1230
    %2138 = vmatmul.mubr.bf16.gmra.mrb[0].mxu0 %v1229
    %v2139 = vpop.f32.mrb[0].mxu0
    %v2140 = vadd.f32 %v2100, %v2139
    %v2141 = vpop.f32.mrb[0].mxu0
    %v2142 = vpop.f32.mrb[0].mxu0
    %v2143 = vpop.f32.mrb[0].mxu0
    %2144 = vdwg.mxu0
    %2145 = vmatprep.subr.bf16.mxu0 0
    %2146 = vmatpush1.bf16.msra.mxu0 %v1817
    %2147 = vmatprep.subr.bf16.mxu0 0
    %2148 = vmatpush1.bf16.msra.mxu0 %v1818
    %2149 = vmatprep.subr.bf16.mxu0 0
    %2150 = vmatpush1.bf16.msra.mxu0 %v1819
    %2151 = vmatprep.subr.bf16.mxu0 0
    %2152 = vmatpush1.bf16.msra.mxu0 %v1820
    %2153 = vmatprep.subr.bf16.mxu0 0
    %2154 = vmatpush1.bf16.msra.mxu0 %v1821
    %2155 = vmatprep.subr.bf16.mxu0 0
    %2156 = vmatpush1.bf16.msra.mxu0 %v1822
    %2157 = vmatprep.subr.bf16.mxu0 0
    %2158 = vmatpush1.bf16.msra.mxu0 %v1823
    %2159 = vmatprep.subr.bf16.mxu0 0
    %2160 = vmatpush1.bf16.msra.mxu0 %v1824
    %2161 = vmatprep.subr.bf16.mxu0 0
    %2162 = vmatpush1.bf16.msra.mxu0 %v1825
    %2163 = vmatprep.subr.bf16.mxu0 0
    %2164 = vmatpush1.bf16.msra.mxu0 %v1826
    %2165 = vmatprep.subr.bf16.mxu0 0
    %2166 = vmatpush1.bf16.msra.mxu0 %v1827
    %2167 = vmatprep.subr.bf16.mxu0 0
    %2168 = vmatpush1.bf16.msra.mxu0 %v1828
    %2169 = vmatprep.subr.bf16.mxu0 0
    %2170 = vmatpush1.bf16.msra.mxu0 %v1829
    %2171 = vmatprep.subr.bf16.mxu0 0
    %2172 = vmatpush1.bf16.msra.mxu0 %v1830
    %2173 = vmatprep.subr.bf16.mxu0 0
    %2174 = vmatpush1.bf16.msra.mxu0 %v1831
    %2175 = vmatprep.subr.bf16.mxu0 0
    %2176 = vmatpush1.bf16.msra.mxu0 %v1832
    %2177 = vmatprep.mubr.bf16.mxu0 %v1232
    %2178 = vmatmul.mubr.bf16.gmra.mrb[0].mxu0 %v1231
    %v2179 = vpop.f32.mrb[0].mxu0
    %v2180 = vadd.f32 %v2140, %v2179
    %v2181 = vpop.f32.mrb[0].mxu0
    %v2182 = vpop.f32.mrb[0].mxu0
    %v2183 = vpop.f32.mrb[0].mxu0
    %2184 = vdwg.mxu0
    %2185 = vmatprep.subr.bf16.mxu0 0
    %2186 = vmatpush1.bf16.msra.mxu0 %v1833
    %2187 = vmatprep.subr.bf16.mxu0 0
    %2188 = vmatpush1.bf16.msra.mxu0 %v1834
    %2189 = vmatprep.subr.bf16.mxu0 0
    %2190 = vmatpush1.bf16.msra.mxu0 %v1835
    %2191 = vmatprep.subr.bf16.mxu0 0
    %2192 = vmatpush1.bf16.msra.mxu0 %v1836
    %2193 = vmatprep.subr.bf16.mxu0 0
    %2194 = vmatpush1.bf16.msra.mxu0 %v1837
    %2195 = vmatprep.subr.bf16.mxu0 0
    %2196 = vmatpush1.bf16.msra.mxu0 %v1838
    %2197 = vmatprep.subr.bf16.mxu0 0
    %2198 = vmatpush1.bf16.msra.mxu0 %v1839
    %2199 = vmatprep.subr.bf16.mxu0 0
    %2200 = vmatpush1.bf16.msra.mxu0 %v1840
    %2201 = vmatprep.subr.bf16.mxu0 0
    %2202 = vmatpush1.bf16.msra.mxu0 %v1841
    %2203 = vmatprep.subr.bf16.mxu0 0
    %2204 = vmatpush1.bf16.msra.mxu0 %v1842
    %2205 = vmatprep.subr.bf16.mxu0 0
    %2206 = vmatpush1.bf16.msra.mxu0 %v1843
    %2207 = vmatprep.subr.bf16.mxu0 0
    %2208 = vmatpush1.bf16.msra.mxu0 %v1844
    %2209 = vmatprep.subr.bf16.mxu0 0
    %2210 = vmatpush1.bf16.msra.mxu0 %v1845
    %2211 = vmatprep.subr.bf16.mxu0 0
    %2212 = vmatpush1.bf16.msra.mxu0 %v1846
    %2213 = vmatprep.subr.bf16.mxu0 0
    %2214 = vmatpush1.bf16.msra.mxu0 %v1847
    %2215 = vmatprep.subr.bf16.mxu0 0
    %2216 = vmatpush1.bf16.msra.mxu0 %v1848
    %2217 = vmatprep.mubr.bf16.mxu0 %v1234
    %2218 = vmatmul.mubr.bf16.gmra.mrb[0].mxu0 %v1233
    %v2219 = vpop.f32.mrb[0].mxu0
    %v2220 = vadd.f32 %v2180, %v2219
    %v2221 = vpop.f32.mrb[0].mxu0
    %v2222 = vpop.f32.mrb[0].mxu0
    %v2223 = vpop.f32.mrb[0].mxu0
    %2224 = vdwg.mxu0
    %2225 = vmatprep.subr.bf16.mxu0 0
    %2226 = vmatpush1.bf16.msra.mxu0 %v1849
    %2227 = vmatprep.subr.bf16.mxu0 0
    %2228 = vmatpush1.bf16.msra.mxu0 %v1850
    %2229 = vmatprep.subr.bf16.mxu0 0
    %2230 = vmatpush1.bf16.msra.mxu0 %v1851
    %2231 = vmatprep.subr.bf16.mxu0 0
    %2232 = vmatpush1.bf16.msra.mxu0 %v1852
    %2233 = vmatprep.subr.bf16.mxu0 0
    %2234 = vmatpush1.bf16.msra.mxu0 %v1853
    %2235 = vmatprep.subr.bf16.mxu0 0
    %2236 = vmatpush1.bf16.msra.mxu0 %v1854
    %2237 = vmatprep.subr.bf16.mxu0 0
    %2238 = vmatpush1.bf16.msra.mxu0 %v1855
    %2239 = vmatprep.subr.bf16.mxu0 0
    %2240 = vmatpush1.bf16.msra.mxu0 %v1856
    %2241 = vmatprep.subr.bf16.mxu0 0
    %2242 = vmatpush1.bf16.msra.mxu0 %v1857
    %2243 = vmatprep.subr.bf16.mxu0 0
    %2244 = vmatpush1.bf16.msra.mxu0 %v1858
    %2245 = vmatprep.subr.bf16.mxu0 0
    %2246 = vmatpush1.bf16.msra.mxu0 %v1859
    %2247 = vmatprep.subr.bf16.mxu0 0
    %2248 = vmatpush1.bf16.msra.mxu0 %v1860
    %2249 = vmatprep.subr.bf16.mxu0 0
    %2250 = vmatpush1.bf16.msra.mxu0 %v1861
    %2251 = vmatprep.subr.bf16.mxu0 0
    %2252 = vmatpush1.bf16.msra.mxu0 %v1862
    %2253 = vmatprep.subr.bf16.mxu0 0
    %2254 = vmatpush1.bf16.msra.mxu0 %v1863
    %2255 = vmatprep.subr.bf16.mxu0 0
    %2256 = vmatpush1.bf16.msra.mxu0 %v1864
    %2257 = vmatprep.mubr.bf16.mxu0 %v1236
    %2258 = vmatmul.mubr.bf16.gmra.mrb[0].mxu0 %v1235
    %v2259 = vpop.f32.mrb[0].mxu0
    %v2260 = vadd.f32 %v2220, %v2259
    %v2261 = vpop.f32.mrb[0].mxu0
    %v2262 = vpop.f32.mrb[0].mxu0
    %v2263 = vpop.f32.mrb[0].mxu0
    %2264 = vdwg.mxu0
    %2265 = vmatprep.subr.bf16.mxu0 0
    %2266 = vmatpush1.bf16.msra.mxu0 %v1865
    %2267 = vmatprep.subr.bf16.mxu0 0
    %2268 = vmatpush1.bf16.msra.mxu0 %v1866
    %2269 = vmatprep.subr.bf16.mxu0 0
    %2270 = vmatpush1.bf16.msra.mxu0 %v1867
    %2271 = vmatprep.subr.bf16.mxu0 0
    %2272 = vmatpush1.bf16.msra.mxu0 %v1868
    %2273 = vmatprep.subr.bf16.mxu0 0
    %2274 = vmatpush1.bf16.msra.mxu0 %v1869
    %2275 = vmatprep.subr.bf16.mxu0 0
    %2276 = vmatpush1.bf16.msra.mxu0 %v1870
    %2277 = vmatprep.subr.bf16.mxu0 0
    %2278 = vmatpush1.bf16.msra.mxu0 %v1871
    %2279 = vmatprep.subr.bf16.mxu0 0
    %2280 = vmatpush1.bf16.msra.mxu0 %v1872
    %2281 = vmatprep.subr.bf16.mxu0 0
    %2282 = vmatpush1.bf16.msra.mxu0 %v1873
    %2283 = vmatprep.subr.bf16.mxu0 0
    %2284 = vmatpush1.bf16.msra.mxu0 %v1874
    %2285 = vmatprep.subr.bf16.mxu0 0
    %2286 = vmatpush1.bf16.msra.mxu0 %v1875
    %2287 = vmatprep.subr.bf16.mxu0 0
    %2288 = vmatpush1.bf16.msra.mxu0 %v1876
    %2289 = vmatprep.subr.bf16.mxu0 0
    %2290 = vmatpush1.bf16.msra.mxu0 %v1877
    %2291 = vmatprep.subr.bf16.mxu0 0
    %2292 = vmatpush1.bf16.msra.mxu0 %v1878
    %2293 = vmatprep.subr.bf16.mxu0 0
    %2294 = vmatpush1.bf16.msra.mxu0 %v1879
    %2295 = vmatprep.subr.bf16.mxu0 0
    %2296 = vmatpush1.bf16.msra.mxu0 %v1880
    %2297 = vmatprep.mubr.bf16.mxu0 %v1238
    %2298 = vmatmul.mubr.bf16.gmra.mrb[0].mxu0 %v1237
    %v2299 = vpop.f32.mrb[0].mxu0
    %v2300 = vadd.f32 %v2260, %v2299
    %v2301 = vpop.f32.mrb[0].mxu0
    %v2302 = vpop.f32.mrb[0].mxu0
    %v2303 = vpop.f32.mrb[0].mxu0
    %2304 = vdwg.mxu0
    %2305 = vmatprep.subr.bf16.mxu0 0
    %2306 = vmatpush1.bf16.msra.mxu0 %v1881
    %2307 = vmatprep.subr.bf16.mxu0 0
    %2308 = vmatpush1.bf16.msra.mxu0 %v1882
    %2309 = vmatprep.subr.bf16.mxu0 0
    %2310 = vmatpush1.bf16.msra.mxu0 %v1883
    %2311 = vmatprep.subr.bf16.mxu0 0
    %2312 = vmatpush1.bf16.msra.mxu0 %v1884
    %2313 = vmatprep.subr.bf16.mxu0 0
    %2314 = vmatpush1.bf16.msra.mxu0 %v1885
    %2315 = vmatprep.subr.bf16.mxu0 0
    %2316 = vmatpush1.bf16.msra.mxu0 %v1886
    %2317 = vmatprep.subr.bf16.mxu0 0
    %2318 = vmatpush1.bf16.msra.mxu0 %v1887
    %2319 = vmatprep.subr.bf16.mxu0 0
    %2320 = vmatpush1.bf16.msra.mxu0 %v1888
    %2321 = vmatprep.subr.bf16.mxu0 0
    %2322 = vmatpush1.bf16.msra.mxu0 %v1889
    %2323 = vmatprep.subr.bf16.mxu0 0
    %2324 = vmatpush1.bf16.msra.mxu0 %v1890
    %2325 = vmatprep.subr.bf16.mxu0 0
    %2326 = vmatpush1.bf16.msra.mxu0 %v1891
    %2327 = vmatprep.subr.bf16.mxu0 0
    %2328 = vmatpush1.bf16.msra.mxu0 %v1892
    %2329 = vmatprep.subr.bf16.mxu0 0
    %2330 = vmatpush1.bf16.msra.mxu0 %v1893
    %2331 = vmatprep.subr.bf16.mxu0 0
    %2332 = vmatpush1.bf16.msra.mxu0 %v1894
    %2333 = vmatprep.subr.bf16.mxu0 0
    %2334 = vmatpush1.bf16.msra.mxu0 %v1895
    %2335 = vmatprep.subr.bf16.mxu0 0
    %2336 = vmatpush1.bf16.msra.mxu0 %v1896
    %2337 = vmatprep.mubr.bf16.mxu0 %v1240
    %2338 = vmatmul.mubr.bf16.gmra.mrb[0].mxu0 %v1239
    %v2339 = vpop.f32.mrb[0].mxu0
    %v2340 = vadd.f32 %v2300, %v2339
    %v2341 = vpop.f32.mrb[0].mxu0
    %v2342 = vpop.f32.mrb[0].mxu0
    %v2343 = vpop.f32.mrb[0].mxu0
    %2344 = vdwg.mxu0
    %2345 = vst [vmem:[#allocation2] sm:$0x3] %v2340
    // Predicated region
    $region14: #{cnn_encoder_forward.3} parent=1 // pred_check
      _
    $region15: #{cnn_encoder_forward.3} parent=1 // pred_check_branch
      %2347 = sbr.rel (0) target = $region17
    $region16: #{cnn_encoder_forward.3} parent=1 // pred_region
      %s2349 = ssub.s32 32, 32
      %2350 = vsyncadd [#allocation3], %s2349
      %s2352 = sshll.u32 [#allocation2], 4
      %s2353 = int_to_ptr.vmem [resolvable:$true] %s2352
      %2355 = dma.vmem_to_hbm [thread:$0]  %s2353, 32, %s3, [#allocation3]
    $region17: #{cnn_encoder_forward.3} parent=1 // pred_fallthru
      _
    // Predicated region
    $region18: #{cnn_encoder_forward.3} parent=1 // pred_check
      _
    $region19: #{cnn_encoder_forward.3} parent=1 // pred_check_branch
      %2357 = sbr.rel (0) target = $region21
    $region20: #{cnn_encoder_forward.3} parent=1 // pred_region
      %2358 = dma.done [#allocation3], 32
    $region21: #{cnn_encoder_forward.3} parent=1 // pred_fallthru
      _
    %2359 = vsyncpa [#allocation3], 1

// kernel: cnn_encoder_forward.2
$region0: #{cnn_encoder_forward.2}
  #allocation0 [shape = 'u32[]', space=smem, size = 0x4, offset = 0x4, fixed_abs, tag = 'smem constant byte address 0x4 - core index']
  #allocation1 [shape = 'u32[144,128]{1,0:T(1,128)}', space=vmem, size = 0x12000, scoped, tag = 'internal scratch']
  %s0 = inlined_call_operand.vmem [shape: bf16[592,768], index: 0, kind: input, shape index: {}]
  %s1 = inlined_call_operand.vmem [shape: bf16[768,128], index: 1, kind: input, shape index: {}]
  %s2 = inlined_call_operand.vmem [shape: f32[1,128], index: 2, kind: input, shape index: {}]
  %s3 = inlined_call_operand.vmem [shape: f32[592,128], index: 3, kind: output, shape index: {}]
  %s4 = sld [smem:[#allocation0]]
  $region45: #{cnn_encoder_forward.2} parent=0
    _
  %s6 = ssub.s32 1, %s4
  %s7 = scalar_select 0, %s6, %s4
  loop: start=0, step=1, limit=4
  $region2: #{cnn_encoder_forward.2} parent=0 // loop_pre_header
    _
  $region3: #{cnn_encoder_forward.2} parent=0 // loop_header
    %s9 = sphi 0, %s13
    %p10 = scmp.ge.s32.totalorder %s9, 4
    %s19 = sphi 0, %s21
    %s22 = sphi 0, %s19
    %s23 = sphi 0, %s22
    %s39 = sphi 0, %s23
    %s43 = sphi 0, %s43
    %s45 = sphi 0, %s43
    %s46 = sphi 0, %s45
    %s60 = sphi 0, %s46
    %s64 = sphi 0, %s64
    %s66 = sphi 0, %s64
    %s67 = sphi 0, %s66
    %s81 = sphi 0, %s67
    %s87 = sphi 0, %s89
    %s90 = sphi 0, %s87
    %s91 = sphi 0, %s90
    %s107 = sphi 0, %s91
  $region4: #{cnn_encoder_forward.2} parent=0 // loop_header_branch
    %12 = sbr.rel (%p10) target = $region8
  $region5: #{cnn_encoder_forward.2} parent=0 // loop_body
    %s14 = ssub.s32 %s9, 1
    %s15 = ssub.s32 %s9, 2
    %s16 = sadd.s32 %s9, 1
    %s17 = ssub.s32 %s9, %s16
    %p18 = scmp.eq.s32.totalorder %s17, 0
    %s20 = sadd.s32 %s19, 1
    %s21 = scalar_select %p18, %s19, %s20
    %p24 = pneg %p18
    %p25 = scmp.eq.s32.totalorder %s9, 1
    %p26 = por %p24, %p25
    %p27 = scmp.ne.s32.totalorder %s19, %s22
    %p28 = scmp.eq.s32.totalorder %s9, 0
    %p29 = por %p27, %p28
    %p30 = scmp.ne.s32.totalorder %s19, %s22
    %p31 = scmp.eq.s32.totalorder %s14, 1
    %p32 = por %p30, %p31
    %p33 = scmp.ne.s32.totalorder %s22, %s23
    %p34 = scmp.eq.s32.totalorder %s14, 0
    %p35 = por %p33, %p34
    %p36 = scmp.ne.s32.totalorder %s22, %s23
    %p37 = scmp.eq.s32.totalorder %s15, 1
    %p38 = por %p36, %p37
    %p40 = scmp.ne.s32.totalorder %s23, %s39
    %p41 = scmp.eq.s32.totalorder %s15, 0
    %p42 = por %p40, %p41
    %s44 = sadd.s32 %s43, 1
    %p47 = scmp.eq.s32.totalorder %s9, 1
    %p48 = scmp.ne.s32.totalorder %s43, %s45
    %p49 = scmp.eq.s32.totalorder %s9, 0
    %p50 = por %p48, %p49
    %p51 = scmp.ne.s32.totalorder %s43, %s45
    %p52 = scmp.eq.s32.totalorder %s14, 1
    %p53 = por %p51, %p52
    %p54 = scmp.ne.s32.totalorder %s45, %s46
    %p55 = scmp.eq.s32.totalorder %s14, 0
    %p56 = por %p54, %p55
    %p57 = scmp.ne.s32.totalorder %s45, %s46
    %p58 = scmp.eq.s32.totalorder %s15, 1
    %p59 = por %p57, %p58
    %p61 = scmp.ne.s32.totalorder %s46, %s60
    %p62 = scmp.eq.s32.totalorder %s15, 0
    %p63 = por %p61, %p62
    %s65 = sadd.s32 %s64, 1
    %p68 = scmp.eq.s32.totalorder %s9, 1
    %p69 = scmp.ne.s32.totalorder %s64, %s66
    %p70 = scmp.eq.s32.totalorder %s9, 0
    %p71 = por %p69, %p70
    %p72 = scmp.ne.s32.totalorder %s64, %s66
    %p73 = scmp.eq.s32.totalorder %s14, 1
    %p74 = por %p72, %p73
    %p75 = scmp.ne.s32.totalorder %s66, %s67
    %p76 = scmp.eq.s32.totalorder %s14, 0
    %p77 = por %p75, %p76
    %p78 = scmp.ne.s32.totalorder %s66, %s67
    %p79 = scmp.eq.s32.totalorder %s15, 1
    %p80 = por %p78, %p79
    %p82 = scmp.ne.s32.totalorder %s67, %s81
    %p83 = scmp.eq.s32.totalorder %s15, 0
    %p84 = por %p82, %p83
    %s85 = ssub.s32 %s9, %s16
    %p86 = scmp.eq.s32.totalorder %s85, 0
    %s88 = sadd.s32 %s87, 1
    %s89 = scalar_select %p86, %s87, %s88
    %p92 = pneg %p86
    %p93 = scmp.eq.s32.totalorder %s9, 1
    %p94 = por %p92, %p93
    %p95 = scmp.ne.s32.totalorder %s87, %s90
    %p96 = scmp.eq.s32.totalorder %s9, 0
    %p97 = por %p95, %p96
    %p98 = scmp.ne.s32.totalorder %s87, %s90
    %p99 = scmp.eq.s32.totalorder %s14, 1
    %p100 = por %p98, %p99
    %p101 = scmp.ne.s32.totalorder %s90, %s91
    %p102 = scmp.eq.s32.totalorder %s14, 0
    %p103 = por %p101, %p102
    %p104 = scmp.ne.s32.totalorder %s90, %s91
    %p105 = scmp.eq.s32.totalorder %s15, 1
    %p106 = por %p104, %p105
    %p108 = scmp.ne.s32.totalorder %s91, %s107
    %p109 = scmp.eq.s32.totalorder %s15, 0
    %p110 = por %p108, %p109
    %p111 = scmp.le.s32.totalorder 1, %s9
    %p112 = scmp.lt.s32.totalorder %s9, 3
    %p113 = pnand %p111, %p112
    %p114 = pneg %p113
    // Predicated region
    $region9: #{cnn_encoder_forward.2} parent=5 // pred_check
      _
    $region10: #{cnn_encoder_forward.2} parent=5 // pred_check_branch
      %116 = sbr.rel (%p113) target = $region12
    $region11: #{cnn_encoder_forward.2} parent=5 // pred_region
      %s117 = ssub.s32 %s9, 1
      // Predicated region
      $region13: #{cnn_encoder_forward.2} parent=11 // pred_check
        %p118 = pneg %p56
      $region14: #{cnn_encoder_forward.2} parent=11 // pred_check_branch
        %120 = sbr.rel (%p118) target = $region16
      $region15: #{cnn_encoder_forward.2} parent=11 // pred_region
        _
      $region16: #{cnn_encoder_forward.2} parent=11 // pred_fallthru
        _
      // Predicated region
      $region17: #{cnn_encoder_forward.2} parent=11 // pred_check
        %p121 = pneg %p77
      $region18: #{cnn_encoder_forward.2} parent=11 // pred_check_branch
        %123 = sbr.rel (%p121) target = $region20
      $region19: #{cnn_encoder_forward.2} parent=11 // pred_region
        _
      $region20: #{cnn_encoder_forward.2} parent=11 // pred_fallthru
        _
    $region12: #{cnn_encoder_forward.2} parent=5 // pred_fallthru
      _
    %p124 = scmp.lt.s32.totalorder %s9, 2
    // Predicated region
    $region21: #{cnn_encoder_forward.2} parent=5 // pred_check
      %p125 = pneg %p124
    $region22: #{cnn_encoder_forward.2} parent=5 // pred_check_branch
      %127 = sbr.rel (%p125) target = $region24
    $region23: #{cnn_encoder_forward.2} parent=5 // pred_region
      // Predicated region
      $region25: #{cnn_encoder_forward.2} parent=23 // pred_check
        %p128 = pneg %p29
      $region26: #{cnn_encoder_forward.2} parent=23 // pred_check_branch
        %130 = sbr.rel (%p128) target = $region28
      $region27: #{cnn_encoder_forward.2} parent=23 // pred_region
        %s131 = smul.u32 37, %s9
        %p132 = scmp.lt.s32.totalorder %s131, 73
        %s133 = scalar_select %p132, %s131, 73
        %s134 = smul.addr %s133, 6
        %s135 = smul.addr %s134, 4
        %s136 = scalar_lea.vmem %s0, %s135
        %s137 = smul.u32 37, %s9
      $region28: #{cnn_encoder_forward.2} parent=23 // pred_fallthru
        _
    $region24: #{cnn_encoder_forward.2} parent=5 // pred_fallthru
      _
    %p138 = scmp.le.s32.totalorder 1, %s9
    %p139 = scmp.lt.s32.totalorder %s9, 3
    %p140 = pnand %p138, %p139
    %p141 = pneg %p140
    // Predicated region
    $region29: #{cnn_encoder_forward.2} parent=5 // pred_check
      _
    $region30: #{cnn_encoder_forward.2} parent=5 // pred_check_branch
      %143 = sbr.rel (%p140) target = $region32
    $region31: #{cnn_encoder_forward.2} parent=5 // pred_region
      %s144 = ssub.s32 %s9, 1
      %s145 = smul.u32 37, %s14
      %p146 = scmp.lt.s32.totalorder %s145, 73
      %s147 = scalar_select %p146, %s145, 73
      %s148 = smul.addr %s147, 6
      %s149 = smul.addr %s148, 4
      %s150 = scalar_lea.vmem %s0, %s149
      %p151 = pneg %p35
      %p152 = pneg %p32
      %p153 = pneg %p56
      %p154 = pneg %p53
      %p155 = pneg %p77
      %p156 = pneg %p74
      %p157 = pneg %p103
      %p158 = pneg %p100
      %s159 = smul.u32 37, %s14
      %p160 = scmp.lt.s32.totalorder %s159, 73
      %s161 = scalar_select %p160, %s159, 73
      %s162 = smul.addr %s161, 8
      %s163 = scalar_lea.vmem %s3, %s162
      %s164 = smul.u32 37, %s14
      %p165 = scmp.lt.s32.totalorder %s164, 73
      %s166 = scalar_select %p165, %s164, 73
      %s167 = smul.addr %s166, 6
      %s168 = smul.addr %s167, 4
      %s169 = scalar_lea.vmem %s0, %s168
      %s170 = smul.u32 37, %s14
      %s171 = smul.u32 37, %s14
      %p172 = scmp.lt.s32.totalorder %s171, 73
      %s173 = scalar_select %p172, %s171, 73
      %s174 = smul.addr %s173, 8
      %s175 = scalar_lea.vmem %s3, %s174
      %s176 = smul.u32 37, %s14
      %v178 = vld [vmem:[%s169] sm:$0xff]
      %v179 = vld [vmem:[%s169 + $0x8] sm:$0xff]
      %v180 = vld [vmem:[%s169 + $0x10] sm:$0xff]
      %v181 = vld [vmem:[%s169 + $0x18] sm:$0xff]
      %v182 = vld [vmem:[%s169 + $0x20] sm:$0xff]
      %v183 = vld [vmem:[%s169 + $0x28] sm:$0xff]
      %v184 = vld [vmem:[%s169 + $0x30] sm:$0xff]
      %v185 = vld [vmem:[%s169 + $0x38] sm:$0xff]
      %v186 = vld [vmem:[%s169 + $0x40] sm:$0xff]
      %v187 = vld [vmem:[%s169 + $0x48] sm:$0xff]
      %v188 = vld [vmem:[%s169 + $0x50] sm:$0xff]
      %v189 = vld [vmem:[%s169 + $0x58] sm:$0xff]
      %v190 = vld [vmem:[%s169 + $0x60] sm:$0xff]
      %v191 = vld [vmem:[%s169 + $0x68] sm:$0xff]
      %v192 = vld [vmem:[%s169 + $0x70] sm:$0xff]
      %v193 = vld [vmem:[%s169 + $0x78] sm:$0xff]
      %v194 = vld [vmem:[%s169 + $0x80] sm:$0xff]
      %v195 = vld [vmem:[%s169 + $0x88] sm:$0xff]
      %v196 = vld [vmem:[%s169 + $0x90] sm:$0xff]
      %v197 = vld [vmem:[%s169 + $0x98] sm:$0xff]
      %v198 = vld [vmem:[%s169 + $0xa0] sm:$0xff]
      %v199 = vld [vmem:[%s169 + $0xa8] sm:$0xff]
      %v200 = vld [vmem:[%s169 + $0xb0] sm:$0xff]
      %v201 = vld [vmem:[%s169 + $0xb8] sm:$0xff]
      %v202 = vld [vmem:[%s169 + $0xc0] sm:$0xff]
      %v203 = vld [vmem:[%s169 + $0xc8] sm:$0xff]
      %v204 = vld [vmem:[%s169 + $0xd0] sm:$0xff]
      %v205 = vld [vmem:[%s169 + $0xd8] sm:$0xff]
      %v206 = vld [vmem:[%s169 + $0xe0] sm:$0xff]
      %v207 = vld [vmem:[%s169 + $0xe8] sm:$0xff]
      %v208 = vld [vmem:[%s169 + $0xf0] sm:$0xff]
      %v209 = vld [vmem:[%s169 + $0xf8] sm:$0xff]
      %v210 = vld [vmem:[%s169 + $0x100] sm:$0xff]
      %v211 = vld [vmem:[%s169 + $0x108] sm:$0xff]
      %v212 = vld [vmem:[%s169 + $0x110] sm:$0xff]
      %v213 = vld [vmem:[%s169 + $0x118] sm:$0xff]
      %v214 = vld [vmem:[%s169 + $0x120] sm:$0xff]
      %v215 = vld [vmem:[%s169 + $0x128] sm:$0xff]
      %v216 = vld [vmem:[%s169 + $0x130] sm:$0xff]
      %v217 = vld [vmem:[%s169 + $0x138] sm:$0xff]
      %v218 = vld [vmem:[%s169 + $0x140] sm:$0xff]
      %v219 = vld [vmem:[%s169 + $0x148] sm:$0xff]
      %v220 = vld [vmem:[%s169 + $0x150] sm:$0xff]
      %v221 = vld [vmem:[%s169 + $0x158] sm:$0xff]
      %v222 = vld [vmem:[%s169 + $0x160] sm:$0xff]
      %v223 = vld [vmem:[%s169 + $0x168] sm:$0xff]
      %v224 = vld [vmem:[%s169 + $0x170] sm:$0xff]
      %v225 = vld [vmem:[%s169 + $0x178] sm:$0xff]
      %v226 = vld [vmem:[%s169 + $0x180] sm:$0xff]
      %v227 = vld [vmem:[%s169 + $0x188] sm:$0xff]
      %v228 = vld [vmem:[%s169 + $0x190] sm:$0xff]
      %v229 = vld [vmem:[%s169 + $0x198] sm:$0xff]
      %v230 = vld [vmem:[%s169 + $0x1a0] sm:$0xff]
      %v231 = vld [vmem:[%s169 + $0x1a8] sm:$0xff]
      %v232 = vld [vmem:[%s169 + $0x1b0] sm:$0xff]
      %v233 = vld [vmem:[%s169 + $0x1b8] sm:$0xff]
      %v234 = vld [vmem:[%s169 + $0x1c0] sm:$0xff]
      %v235 = vld [vmem:[%s169 + $0x1c8] sm:$0xff]
      %v236 = vld [vmem:[%s169 + $0x1d0] sm:$0xff]
      %v237 = vld [vmem:[%s169 + $0x1d8] sm:$0xff]
      %v238 = vld [vmem:[%s169 + $0x1e0] sm:$0xff]
      %v239 = vld [vmem:[%s169 + $0x1e8] sm:$0xff]
      %v240 = vld [vmem:[%s169 + $0x1f0] sm:$0xff]
      %v241 = vld [vmem:[%s169 + $0x1f8] sm:$0xff]
      %v242 = vld [vmem:[%s169 + $0x200] sm:$0xff]
      %v243 = vld [vmem:[%s169 + $0x208] sm:$0xff]
      %v244 = vld [vmem:[%s169 + $0x210] sm:$0xff]
      %v245 = vld [vmem:[%s169 + $0x218] sm:$0xff]
      %v246 = vld [vmem:[%s169 + $0x220] sm:$0xff]
      %v247 = vld [vmem:[%s169 + $0x228] sm:$0xff]
      %v248 = vld [vmem:[%s169 + $0x230] sm:$0xff]
      %v249 = vld [vmem:[%s169 + $0x238] sm:$0xff]
      %v250 = vld [vmem:[%s169 + $0x240] sm:$0xff]
      %v251 = vld [vmem:[%s169 + $0x248] sm:$0xff]
      %v252 = vld [vmem:[%s169 + $0x250] sm:$0xff]
      %v253 = vld [vmem:[%s169 + $0x258] sm:$0xff]
      %v254 = vld [vmem:[%s169 + $0x260] sm:$0xff]
      %v255 = vld [vmem:[%s169 + $0x268] sm:$0xff]
      %v256 = vld [vmem:[%s169 + $0x270] sm:$0xff]
      %v257 = vld [vmem:[%s169 + $0x278] sm:$0xff]
      %v258 = vld [vmem:[%s169 + $0x280] sm:$0xff]
      %v259 = vld [vmem:[%s169 + $0x288] sm:$0xff]
      %v260 = vld [vmem:[%s169 + $0x290] sm:$0xff]
      %v261 = vld [vmem:[%s169 + $0x298] sm:$0xff]
      %v262 = vld [vmem:[%s169 + $0x2a0] sm:$0xff]
      %v263 = vld [vmem:[%s169 + $0x2a8] sm:$0xff]
      %v264 = vld [vmem:[%s169 + $0x2b0] sm:$0xff]
      %v265 = vld [vmem:[%s169 + $0x2b8] sm:$0xff]
      %v266 = vld [vmem:[%s169 + $0x2c0] sm:$0xff]
      %v267 = vld [vmem:[%s169 + $0x2c8] sm:$0xff]
      %v268 = vld [vmem:[%s169 + $0x2d0] sm:$0xff]
      %v269 = vld [vmem:[%s169 + $0x2d8] sm:$0xff]
      %v270 = vld [vmem:[%s169 + $0x2e0] sm:$0xff]
      %v271 = vld [vmem:[%s169 + $0x2e8] sm:$0xff]
      %v272 = vld [vmem:[%s169 + $0x2f0] sm:$0xff]
      %v273 = vld [vmem:[%s169 + $0x2f8] sm:$0xff]
      %v274 = vld [vmem:[%s169 + $0x300] sm:$0xff]
      %v275 = vld [vmem:[%s169 + $0x308] sm:$0xff]
      %v276 = vld [vmem:[%s169 + $0x310] sm:$0xff]
      %v277 = vld [vmem:[%s169 + $0x318] sm:$0xff]
      %v278 = vld [vmem:[%s169 + $0x320] sm:$0xff]
      %v279 = vld [vmem:[%s169 + $0x328] sm:$0xff]
      %v280 = vld [vmem:[%s169 + $0x330] sm:$0xff]
      %v281 = vld [vmem:[%s169 + $0x338] sm:$0xff]
      %v282 = vld [vmem:[%s169 + $0x340] sm:$0xff]
      %v283 = vld [vmem:[%s169 + $0x348] sm:$0xff]
      %v284 = vld [vmem:[%s169 + $0x350] sm:$0xff]
      %v285 = vld [vmem:[%s169 + $0x358] sm:$0xff]
      %v286 = vld [vmem:[%s169 + $0x360] sm:$0xff]
      %v287 = vld [vmem:[%s169 + $0x368] sm:$0xff]
      %v288 = vld [vmem:[%s169 + $0x370] sm:$0xff]
      %v289 = vld [vmem:[%s1] sm:$0xf]
      %v290 = vld [vmem:[%s1 + $0x4] sm:$0xf]
      %v291 = vld [vmem:[%s1 + $0x8] sm:$0xf]
      %v292 = vld [vmem:[%s1 + $0xc] sm:$0xf]
      %v293 = vld [vmem:[%s1 + $0x10] sm:$0xf]
      %v294 = vld [vmem:[%s1 + $0x14] sm:$0xf]
      %v295 = vld [vmem:[%s1 + $0x18] sm:$0xf]
      %v296 = vld [vmem:[%s1 + $0x1c] sm:$0xf]
      %v297 = vld [vmem:[%s1 + $0x20] sm:$0xf]
      %v298 = vld [vmem:[%s1 + $0x24] sm:$0xf]
      %v299 = vld [vmem:[%s1 + $0x28] sm:$0xf]
      %v300 = vld [vmem:[%s1 + $0x2c] sm:$0xf]
      %v301 = vld [vmem:[%s1 + $0x30] sm:$0xf]
      %v302 = vld [vmem:[%s1 + $0x34] sm:$0xf]
      %v303 = vld [vmem:[%s1 + $0x38] sm:$0xf]
      %v304 = vld [vmem:[%s1 + $0x3c] sm:$0xf]
      %v305 = vld [vmem:[%s1 + $0x40] sm:$0xf]
      %v306 = vld [vmem:[%s1 + $0x44] sm:$0xf]
      %v307 = vld [vmem:[%s1 + $0x48] sm:$0xf]
      %v308 = vld [vmem:[%s1 + $0x4c] sm:$0xf]
      %v309 = vld [vmem:[%s1 + $0x50] sm:$0xf]
      %v310 = vld [vmem:[%s1 + $0x54] sm:$0xf]
      %v311 = vld [vmem:[%s1 + $0x58] sm:$0xf]
      %v312 = vld [vmem:[%s1 + $0x5c] sm:$0xf]
      %v313 = vld [vmem:[%s1 + $0x60] sm:$0xf]
      %v314 = vld [vmem:[%s1 + $0x64] sm:$0xf]
      %v315 = vld [vmem:[%s1 + $0x68] sm:$0xf]
      %v316 = vld [vmem:[%s1 + $0x6c] sm:$0xf]
      %v317 = vld [vmem:[%s1 + $0x70] sm:$0xf]
      %v318 = vld [vmem:[%s1 + $0x74] sm:$0xf]
      %v319 = vld [vmem:[%s1 + $0x78] sm:$0xf]
      %v320 = vld [vmem:[%s1 + $0x7c] sm:$0xf]
      %v321 = vld [vmem:[%s1 + $0x80] sm:$0xf]
      %v322 = vld [vmem:[%s1 + $0x84] sm:$0xf]
      %v323 = vld [vmem:[%s1 + $0x88] sm:$0xf]
      %v324 = vld [vmem:[%s1 + $0x8c] sm:$0xf]
      %v325 = vld [vmem:[%s1 + $0x90] sm:$0xf]
      %v326 = vld [vmem:[%s1 + $0x94] sm:$0xf]
      %v327 = vld [vmem:[%s1 + $0x98] sm:$0xf]
      %v328 = vld [vmem:[%s1 + $0x9c] sm:$0xf]
      %v329 = vld [vmem:[%s1 + $0xa0] sm:$0xf]
      %v330 = vld [vmem:[%s1 + $0xa4] sm:$0xf]
      %v331 = vld [vmem:[%s1 + $0xa8] sm:$0xf]
      %v332 = vld [vmem:[%s1 + $0xac] sm:$0xf]
      %v333 = vld [vmem:[%s1 + $0xb0] sm:$0xf]
      %v334 = vld [vmem:[%s1 + $0xb4] sm:$0xf]
      %v335 = vld [vmem:[%s1 + $0xb8] sm:$0xf]
      %v336 = vld [vmem:[%s1 + $0xbc] sm:$0xf]
      %v337 = vld [vmem:[%s1 + $0xc0] sm:$0xf]
      %v338 = vld [vmem:[%s1 + $0xc4] sm:$0xf]
      %v339 = vld [vmem:[%s1 + $0xc8] sm:$0xf]
      %v340 = vld [vmem:[%s1 + $0xcc] sm:$0xf]
      %v341 = vld [vmem:[%s1 + $0xd0] sm:$0xf]
      %v342 = vld [vmem:[%s1 + $0xd4] sm:$0xf]
      %v343 = vld [vmem:[%s1 + $0xd8] sm:$0xf]
      %v344 = vld [vmem:[%s1 + $0xdc] sm:$0xf]
      %v345 = vld [vmem:[%s1 + $0xe0] sm:$0xf]
      %v346 = vld [vmem:[%s1 + $0xe4] sm:$0xf]
      %v347 = vld [vmem:[%s1 + $0xe8] sm:$0xf]
      %v348 = vld [vmem:[%s1 + $0xec] sm:$0xf]
      %v349 = vld [vmem:[%s1 + $0xf0] sm:$0xf]
      %v350 = vld [vmem:[%s1 + $0xf4] sm:$0xf]
      %v351 = vld [vmem:[%s1 + $0xf8] sm:$0xf]
      %v352 = vld [vmem:[%s1 + $0xfc] sm:$0xf]
      %v353 = vld [vmem:[%s1 + $0x100] sm:$0xf]
      %v354 = vld [vmem:[%s1 + $0x104] sm:$0xf]
      %v355 = vld [vmem:[%s1 + $0x108] sm:$0xf]
      %v356 = vld [vmem:[%s1 + $0x10c] sm:$0xf]
      %v357 = vld [vmem:[%s1 + $0x110] sm:$0xf]
      %v358 = vld [vmem:[%s1 + $0x114] sm:$0xf]
      %v359 = vld [vmem:[%s1 + $0x118] sm:$0xf]
      %v360 = vld [vmem:[%s1 + $0x11c] sm:$0xf]
      %v361 = vld [vmem:[%s1 + $0x120] sm:$0xf]
      %v362 = vld [vmem:[%s1 + $0x124] sm:$0xf]
      %v363 = vld [vmem:[%s1 + $0x128] sm:$0xf]
      %v364 = vld [vmem:[%s1 + $0x12c] sm:$0xf]
      %v365 = vld [vmem:[%s1 + $0x130] sm:$0xf]
      %v366 = vld [vmem:[%s1 + $0x134] sm:$0xf]
      %v367 = vld [vmem:[%s1 + $0x138] sm:$0xf]
      %v368 = vld [vmem:[%s1 + $0x13c] sm:$0xf]
      %v369 = vld [vmem:[%s1 + $0x140] sm:$0xf]
      %v370 = vld [vmem:[%s1 + $0x144] sm:$0xf]
      %v371 = vld [vmem:[%s1 + $0x148] sm:$0xf]
      %v372 = vld [vmem:[%s1 + $0x14c] sm:$0xf]
      %v373 = vld [vmem:[%s1 + $0x150] sm:$0xf]
      %v374 = vld [vmem:[%s1 + $0x154] sm:$0xf]
      %v375 = vld [vmem:[%s1 + $0x158] sm:$0xf]
      %v376 = vld [vmem:[%s1 + $0x15c] sm:$0xf]
      %v377 = vld [vmem:[%s1 + $0x160] sm:$0xf]
      %v378 = vld [vmem:[%s1 + $0x164] sm:$0xf]
      %v379 = vld [vmem:[%s1 + $0x168] sm:$0xf]
      %v380 = vld [vmem:[%s1 + $0x16c] sm:$0xf]
      %v381 = vld [vmem:[%s1 + $0x170] sm:$0xf]
      %v382 = vld [vmem:[%s1 + $0x174] sm:$0xf]
      %v383 = vld [vmem:[%s1 + $0x178] sm:$0xf]
      %v384 = vld [vmem:[%s1 + $0x17c] sm:$0xf]
      %v385 = vld [vmem:[%s2] sm:$0x1]
      %v387 = vlaneseq
      %v388 = vshrl.u32 %v387, 7
      %v389 = vsub.s32 0, %v388
      %v390 = vrot.slane %v385, %v389
      %v503 = vunpack.c.l.b16 %v178
      %v504 = vunpack.c.h.b16 %v178
      %v505 = vunpack.c.l.b16 %v179
      %v506 = vunpack.c.h.b16 %v179
      %v507 = vunpack.c.l.b16 %v180
      %v508 = vunpack.c.h.b16 %v180
      %v509 = vunpack.c.l.b16 %v181
      %v510 = vunpack.c.h.b16 %v181
      %v511 = vunpack.c.l.b16 %v182
      %v512 = vunpack.c.h.b16 %v182
      %v513 = vunpack.c.l.b16 %v183
      %v514 = vunpack.c.h.b16 %v183
      %v515 = vunpack.c.l.b16 %v184
      %v516 = vunpack.c.h.b16 %v184
      %v517 = vunpack.c.l.b16 %v185
      %v518 = vunpack.c.h.b16 %v185
      %v519 = vunpack.c.l.b16 %v186
      %v520 = vunpack.c.h.b16 %v186
      %v521 = vunpack.c.l.b16 %v187
      %v522 = vunpack.c.h.b16 %v187
      %v523 = vunpack.c.l.b16 %v188
      %v524 = vunpack.c.h.b16 %v188
      %v525 = vunpack.c.l.b16 %v189
      %v526 = vunpack.c.h.b16 %v189
      %v527 = vunpack.c.l.b16 %v190
      %v528 = vunpack.c.h.b16 %v190
      %v529 = vunpack.c.l.b16 %v191
      %v530 = vunpack.c.h.b16 %v191
      %v531 = vunpack.c.l.b16 %v192
      %v532 = vunpack.c.h.b16 %v192
      %v533 = vunpack.c.l.b16 %v193
      %v534 = vunpack.c.h.b16 %v193
      %v535 = vunpack.c.l.b16 %v194
      %v536 = vunpack.c.h.b16 %v194
      %v537 = vunpack.c.l.b16 %v195
      %v538 = vunpack.c.h.b16 %v195
      %v539 = vunpack.c.l.b16 %v196
      %v540 = vunpack.c.h.b16 %v196
      %v541 = vunpack.c.l.b16 %v197
      %v542 = vunpack.c.h.b16 %v197
      %v543 = vunpack.c.l.b16 %v198
      %v544 = vunpack.c.h.b16 %v198
      %v545 = vunpack.c.l.b16 %v199
      %v546 = vunpack.c.h.b16 %v199
      %v547 = vunpack.c.l.b16 %v200
      %v548 = vunpack.c.h.b16 %v200
      %v549 = vunpack.c.l.b16 %v201
      %v550 = vunpack.c.h.b16 %v201
      %v551 = vunpack.c.l.b16 %v202
      %v552 = vunpack.c.h.b16 %v202
      %v553 = vunpack.c.l.b16 %v203
      %v554 = vunpack.c.h.b16 %v203
      %v555 = vunpack.c.l.b16 %v204
      %v556 = vunpack.c.h.b16 %v204
      %v557 = vunpack.c.l.b16 %v205
      %v558 = vunpack.c.h.b16 %v205
      %v559 = vunpack.c.l.b16 %v206
      %v560 = vunpack.c.h.b16 %v206
      %v561 = vunpack.c.l.b16 %v207
      %v562 = vunpack.c.h.b16 %v207
      %v563 = vunpack.c.l.b16 %v208
      %v564 = vunpack.c.h.b16 %v208
      %v565 = vunpack.c.l.b16 %v209
      %v566 = vunpack.c.h.b16 %v209
      %v567 = vunpack.c.l.b16 %v210
      %v568 = vunpack.c.h.b16 %v210
      %v569 = vunpack.c.l.b16 %v211
      %v570 = vunpack.c.h.b16 %v211
      %v571 = vunpack.c.l.b16 %v212
      %v572 = vunpack.c.h.b16 %v212
      %v573 = vunpack.c.l.b16 %v213
      %v574 = vunpack.c.h.b16 %v213
      %v575 = vunpack.c.l.b16 %v214
      %v576 = vunpack.c.h.b16 %v214
      %v577 = vunpack.c.l.b16 %v215
      %v578 = vunpack.c.h.b16 %v215
      %v579 = vunpack.c.l.b16 %v216
      %v580 = vunpack.c.h.b16 %v216
      %v581 = vunpack.c.l.b16 %v217
      %v582 = vunpack.c.h.b16 %v217
      %v583 = vunpack.c.l.b16 %v218
      %v584 = vunpack.c.h.b16 %v218
      %v585 = vunpack.c.l.b16 %v219
      %v586 = vunpack.c.h.b16 %v219
      %v587 = vunpack.c.l.b16 %v220
      %v588 = vunpack.c.h.b16 %v220
      %v589 = vunpack.c.l.b16 %v221
      %v590 = vunpack.c.h.b16 %v221
      %v591 = vunpack.c.l.b16 %v222
      %v592 = vunpack.c.h.b16 %v222
      %v593 = vunpack.c.l.b16 %v223
      %v594 = vunpack.c.h.b16 %v223
      %v595 = vunpack.c.l.b16 %v224
      %v596 = vunpack.c.h.b16 %v224
      %v597 = vunpack.c.l.b16 %v225
      %v598 = vunpack.c.h.b16 %v225
      %v599 = vunpack.c.l.b16 %v226
      %v600 = vunpack.c.h.b16 %v226
      %v601 = vunpack.c.l.b16 %v227
      %v602 = vunpack.c.h.b16 %v227
      %v603 = vunpack.c.l.b16 %v228
      %v604 = vunpack.c.h.b16 %v228
      %v605 = vunpack.c.l.b16 %v229
      %v606 = vunpack.c.h.b16 %v229
      %v607 = vunpack.c.l.b16 %v230
      %v608 = vunpack.c.h.b16 %v230
      %v609 = vunpack.c.l.b16 %v231
      %v610 = vunpack.c.h.b16 %v231
      %v611 = vunpack.c.l.b16 %v232
      %v612 = vunpack.c.h.b16 %v232
      %v613 = vunpack.c.l.b16 %v233
      %v614 = vunpack.c.h.b16 %v233
      %v615 = vunpack.c.l.b16 %v234
      %v616 = vunpack.c.h.b16 %v234
      %v617 = vunpack.c.l.b16 %v235
      %v618 = vunpack.c.h.b16 %v235
      %v619 = vunpack.c.l.b16 %v236
      %v620 = vunpack.c.h.b16 %v236
      %v621 = vunpack.c.l.b16 %v237
      %v622 = vunpack.c.h.b16 %v237
      %v623 = vunpack.c.l.b16 %v238
      %v624 = vunpack.c.h.b16 %v238
      %v625 = vunpack.c.l.b16 %v239
      %v626 = vunpack.c.h.b16 %v239
      %v627 = vunpack.c.l.b16 %v240
      %v628 = vunpack.c.h.b16 %v240
      %v629 = vunpack.c.l.b16 %v241
      %v630 = vunpack.c.h.b16 %v241
      %v631 = vunpack.c.l.b16 %v242
      %v632 = vunpack.c.h.b16 %v242
      %v633 = vunpack.c.l.b16 %v243
      %v634 = vunpack.c.h.b16 %v243
      %v635 = vunpack.c.l.b16 %v244
      %v636 = vunpack.c.h.b16 %v244
      %v637 = vunpack.c.l.b16 %v245
      %v638 = vunpack.c.h.b16 %v245
      %v639 = vunpack.c.l.b16 %v246
      %v640 = vunpack.c.h.b16 %v246
      %v641 = vunpack.c.l.b16 %v247
      %v642 = vunpack.c.h.b16 %v247
      %v643 = vunpack.c.l.b16 %v248
      %v644 = vunpack.c.h.b16 %v248
      %v645 = vunpack.c.l.b16 %v249
      %v646 = vunpack.c.h.b16 %v249
      %v647 = vunpack.c.l.b16 %v250
      %v648 = vunpack.c.h.b16 %v250
      %v649 = vunpack.c.l.b16 %v251
      %v650 = vunpack.c.h.b16 %v251
      %v651 = vunpack.c.l.b16 %v252
      %v652 = vunpack.c.h.b16 %v252
      %v653 = vunpack.c.l.b16 %v253
      %v654 = vunpack.c.h.b16 %v253
      %v655 = vunpack.c.l.b16 %v254
      %v656 = vunpack.c.h.b16 %v254
      %v657 = vunpack.c.l.b16 %v255
      %v658 = vunpack.c.h.b16 %v255
      %v659 = vunpack.c.l.b16 %v256
      %v660 = vunpack.c.h.b16 %v256
      %v661 = vunpack.c.l.b16 %v257
      %v662 = vunpack.c.h.b16 %v257
      %v663 = vunpack.c.l.b16 %v258
      %v664 = vunpack.c.h.b16 %v258
      %v665 = vunpack.c.l.b16 %v259
      %v666 = vunpack.c.h.b16 %v259
      %v667 = vunpack.c.l.b16 %v260
      %v668 = vunpack.c.h.b16 %v260
      %v669 = vunpack.c.l.b16 %v261
      %v670 = vunpack.c.h.b16 %v261
      %v671 = vunpack.c.l.b16 %v262
      %v672 = vunpack.c.h.b16 %v262
      %v673 = vunpack.c.l.b16 %v263
      %v674 = vunpack.c.h.b16 %v263
      %v675 = vunpack.c.l.b16 %v264
      %v676 = vunpack.c.h.b16 %v264
      %v677 = vunpack.c.l.b16 %v265
      %v678 = vunpack.c.h.b16 %v265
      %v679 = vunpack.c.l.b16 %v266
      %v680 = vunpack.c.h.b16 %v266
      %v681 = vunpack.c.l.b16 %v267
      %v682 = vunpack.c.h.b16 %v267
      %v683 = vunpack.c.l.b16 %v268
      %v684 = vunpack.c.h.b16 %v268
      %v685 = vunpack.c.l.b16 %v269
      %v686 = vunpack.c.h.b16 %v269
      %v687 = vunpack.c.l.b16 %v270
      %v688 = vunpack.c.h.b16 %v270
      %v689 = vunpack.c.l.b16 %v271
      %v690 = vunpack.c.h.b16 %v271
      %v691 = vunpack.c.l.b16 %v272
      %v692 = vunpack.c.h.b16 %v272
      %v693 = vunpack.c.l.b16 %v273
      %v694 = vunpack.c.h.b16 %v273
      %v695 = vunpack.c.l.b16 %v274
      %v696 = vunpack.c.h.b16 %v274
      %v697 = vunpack.c.l.b16 %v275
      %v698 = vunpack.c.h.b16 %v275
      %v699 = vunpack.c.l.b16 %v276
      %v700 = vunpack.c.h.b16 %v276
      %v701 = vunpack.c.l.b16 %v277
      %v702 = vunpack.c.h.b16 %v277
      %v703 = vunpack.c.l.b16 %v278
      %v704 = vunpack.c.h.b16 %v278
      %v705 = vunpack.c.l.b16 %v279
      %v706 = vunpack.c.h.b16 %v279
      %v707 = vunpack.c.l.b16 %v280
      %v708 = vunpack.c.h.b16 %v280
      %v709 = vunpack.c.l.b16 %v281
      %v710 = vunpack.c.h.b16 %v281
      %v711 = vunpack.c.l.b16 %v282
      %v712 = vunpack.c.h.b16 %v282
      %v713 = vunpack.c.l.b16 %v283
      %v714 = vunpack.c.h.b16 %v283
      %v715 = vunpack.c.l.b16 %v284
      %v716 = vunpack.c.h.b16 %v284
      %v717 = vunpack.c.l.b16 %v285
      %v718 = vunpack.c.h.b16 %v285
      %v719 = vunpack.c.l.b16 %v286
      %v720 = vunpack.c.h.b16 %v286
      %v721 = vunpack.c.l.b16 %v287
      %v722 = vunpack.c.h.b16 %v287
      %v723 = vunpack.c.l.b16 %v288
      %v724 = vunpack.c.h.b16 %v288
      %v725 = vpack.c.b16 %v509, %v503
      %v726 = vpack.c.b16 %v510, %v504
      %v727 = vpack.c.b16 %v511, %v505
      %v728 = vpack.c.b16 %v512, %v506
      %v729 = vpack.c.b16 %v513, %v507
      %v730 = vpack.c.b16 %v514, %v508
      %v731 = vpack.c.b16 %v521, %v515
      %v732 = vpack.c.b16 %v522, %v516
      %v733 = vpack.c.b16 %v523, %v517
      %v734 = vpack.c.b16 %v524, %v518
      %v735 = vpack.c.b16 %v525, %v519
      %v736 = vpack.c.b16 %v526, %v520
      %v737 = vpack.c.b16 %v533, %v527
      %v738 = vpack.c.b16 %v534, %v528
      %v739 = vpack.c.b16 %v535, %v529
      %v740 = vpack.c.b16 %v536, %v530
      %v741 = vpack.c.b16 %v537, %v531
      %v742 = vpack.c.b16 %v538, %v532
      %v743 = vpack.c.b16 %v545, %v539
      %v744 = vpack.c.b16 %v546, %v540
      %v745 = vpack.c.b16 %v547, %v541
      %v746 = vpack.c.b16 %v548, %v542
      %v747 = vpack.c.b16 %v549, %v543
      %v748 = vpack.c.b16 %v550, %v544
      %v749 = vpack.c.b16 %v557, %v551
      %v750 = vpack.c.b16 %v558, %v552
      %v751 = vpack.c.b16 %v559, %v553
      %v752 = vpack.c.b16 %v560, %v554
      %v753 = vpack.c.b16 %v561, %v555
      %v754 = vpack.c.b16 %v562, %v556
      %v755 = vpack.c.b16 %v569, %v563
      %v756 = vpack.c.b16 %v570, %v564
      %v757 = vpack.c.b16 %v571, %v565
      %v758 = vpack.c.b16 %v572, %v566
      %v759 = vpack.c.b16 %v573, %v567
      %v760 = vpack.c.b16 %v574, %v568
      %v761 = vpack.c.b16 %v581, %v575
      %v762 = vpack.c.b16 %v582, %v576
      %v763 = vpack.c.b16 %v583, %v577
      %v764 = vpack.c.b16 %v584, %v578
      %v765 = vpack.c.b16 %v585, %v579
      %v766 = vpack.c.b16 %v586, %v580
      %v767 = vpack.c.b16 %v593, %v587
      %v768 = vpack.c.b16 %v594, %v588
      %v769 = vpack.c.b16 %v595, %v589
      %v770 = vpack.c.b16 %v596, %v590
      %v771 = vpack.c.b16 %v597, %v591
      %v772 = vpack.c.b16 %v598, %v592
      %v773 = vpack.c.b16 %v605, %v599
      %v774 = vpack.c.b16 %v606, %v600
      %v775 = vpack.c.b16 %v607, %v601
      %v776 = vpack.c.b16 %v608, %v602
      %v777 = vpack.c.b16 %v609, %v603
      %v778 = vpack.c.b16 %v610, %v604
      %v779 = vpack.c.b16 %v617, %v611
      %v780 = vpack.c.b16 %v618, %v612
      %v781 = vpack.c.b16 %v619, %v613
      %v782 = vpack.c.b16 %v620, %v614
      %v783 = vpack.c.b16 %v621, %v615
      %v784 = vpack.c.b16 %v622, %v616
      %v785 = vpack.c.b16 %v629, %v623
      %v786 = vpack.c.b16 %v630, %v624
      %v787 = vpack.c.b16 %v631, %v625
      %v788 = vpack.c.b16 %v632, %v626
      %v789 = vpack.c.b16 %v633, %v627
      %v790 = vpack.c.b16 %v634, %v628
      %v791 = vpack.c.b16 %v641, %v635
      %v792 = vpack.c.b16 %v642, %v636
      %v793 = vpack.c.b16 %v643, %v637
      %v794 = vpack.c.b16 %v644, %v638
      %v795 = vpack.c.b16 %v645, %v639
      %v796 = vpack.c.b16 %v646, %v640
      %v797 = vpack.c.b16 %v653, %v647
      %v798 = vpack.c.b16 %v654, %v648
      %v799 = vpack.c.b16 %v655, %v649
      %v800 = vpack.c.b16 %v656, %v650
      %v801 = vpack.c.b16 %v657, %v651
      %v802 = vpack.c.b16 %v658, %v652
      %v803 = vpack.c.b16 %v665, %v659
      %v804 = vpack.c.b16 %v666, %v660
      %v805 = vpack.c.b16 %v667, %v661
      %v806 = vpack.c.b16 %v668, %v662
      %v807 = vpack.c.b16 %v669, %v663
      %v808 = vpack.c.b16 %v670, %v664
      %v809 = vpack.c.b16 %v677, %v671
      %v810 = vpack.c.b16 %v678, %v672
      %v811 = vpack.c.b16 %v679, %v673
      %v812 = vpack.c.b16 %v680, %v674
      %v813 = vpack.c.b16 %v681, %v675
      %v814 = vpack.c.b16 %v682, %v676
      %v815 = vpack.c.b16 %v689, %v683
      %v816 = vpack.c.b16 %v690, %v684
      %v817 = vpack.c.b16 %v691, %v685
      %v818 = vpack.c.b16 %v692, %v686
      %v819 = vpack.c.b16 %v693, %v687
      %v820 = vpack.c.b16 %v694, %v688
      %v821 = vpack.c.b16 %v701, %v695
      %v822 = vpack.c.b16 %v702, %v696
      %v823 = vpack.c.b16 %v703, %v697
      %v824 = vpack.c.b16 %v704, %v698
      %v825 = vpack.c.b16 %v705, %v699
      %v826 = vpack.c.b16 %v706, %v700
      %v827 = vpack.c.b16 %v713, %v707
      %v828 = vpack.c.b16 %v714, %v708
      %v829 = vpack.c.b16 %v715, %v709
      %v830 = vpack.c.b16 %v716, %v710
      %v831 = vpack.c.b16 %v717, %v711
      %v832 = vpack.c.b16 %v718, %v712
      %v833 = vpack.c.b16 %v719, %v719
      %v834 = vpack.c.b16 %v720, %v720
      %v835 = vpack.c.b16 %v721, %v721
      %v836 = vpack.c.b16 %v722, %v722
      %v837 = vpack.c.b16 %v723, %v723
      %v838 = vpack.c.b16 %v724, %v724
      %v1049 = vunpack.c.l.b16 %v289
      %v1050 = vunpack.c.l.b16 %v290
      %v1051 = vunpack.c.l.b16 %v291
      %v1052 = vunpack.c.l.b16 %v292
      %v1053 = vunpack.c.l.b16 %v293
      %v1054 = vunpack.c.l.b16 %v294
      %v1055 = vunpack.c.l.b16 %v295
      %v1056 = vunpack.c.l.b16 %v296
      %v1057 = vunpack.c.l.b16 %v297
      %v1058 = vunpack.c.l.b16 %v298
      %v1059 = vunpack.c.l.b16 %v299
      %v1060 = vunpack.c.l.b16 %v300
      %v1061 = vunpack.c.l.b16 %v301
      %v1062 = vunpack.c.l.b16 %v302
      %v1063 = vunpack.c.l.b16 %v303
      %v1064 = vunpack.c.l.b16 %v304
      %v1065 = vunpack.c.l.b16 %v305
      %v1066 = vunpack.c.l.b16 %v306
      %v1067 = vunpack.c.l.b16 %v307
      %v1068 = vunpack.c.l.b16 %v308
      %v1069 = vunpack.c.l.b16 %v309
      %v1070 = vunpack.c.l.b16 %v310
      %v1071 = vunpack.c.l.b16 %v311
      %v1072 = vunpack.c.l.b16 %v312
      %v1073 = vunpack.c.l.b16 %v313
      %v1074 = vunpack.c.l.b16 %v314
      %v1075 = vunpack.c.l.b16 %v315
      %v1076 = vunpack.c.l.b16 %v316
      %v1077 = vunpack.c.l.b16 %v317
      %v1078 = vunpack.c.l.b16 %v318
      %v1079 = vunpack.c.l.b16 %v319
      %v1080 = vunpack.c.l.b16 %v320
      %v1081 = vunpack.c.l.b16 %v321
      %v1082 = vunpack.c.l.b16 %v322
      %v1083 = vunpack.c.l.b16 %v323
      %v1084 = vunpack.c.l.b16 %v324
      %v1085 = vunpack.c.l.b16 %v325
      %v1086 = vunpack.c.l.b16 %v326
      %v1087 = vunpack.c.l.b16 %v327
      %v1088 = vunpack.c.l.b16 %v328
      %v1089 = vunpack.c.l.b16 %v329
      %v1090 = vunpack.c.l.b16 %v330
      %v1091 = vunpack.c.l.b16 %v331
      %v1092 = vunpack.c.l.b16 %v332
      %v1093 = vunpack.c.l.b16 %v333
      %v1094 = vunpack.c.l.b16 %v334
      %v1095 = vunpack.c.l.b16 %v335
      %v1096 = vunpack.c.l.b16 %v336
      %v1097 = vunpack.c.l.b16 %v337
      %v1098 = vunpack.c.l.b16 %v338
      %v1099 = vunpack.c.l.b16 %v339
      %v1100 = vunpack.c.l.b16 %v340
      %v1101 = vunpack.c.l.b16 %v341
      %v1102 = vunpack.c.l.b16 %v342
      %v1103 = vunpack.c.l.b16 %v343
      %v1104 = vunpack.c.l.b16 %v344
      %v1105 = vunpack.c.l.b16 %v345
      %v1106 = vunpack.c.l.b16 %v346
      %v1107 = vunpack.c.l.b16 %v347
      %v1108 = vunpack.c.l.b16 %v348
      %v1109 = vunpack.c.l.b16 %v349
      %v1110 = vunpack.c.l.b16 %v350
      %v1111 = vunpack.c.l.b16 %v351
      %v1112 = vunpack.c.l.b16 %v352
      %v1113 = vunpack.c.l.b16 %v353
      %v1114 = vunpack.c.l.b16 %v354
      %v1115 = vunpack.c.l.b16 %v355
      %v1116 = vunpack.c.l.b16 %v356
      %v1117 = vunpack.c.l.b16 %v357
      %v1118 = vunpack.c.l.b16 %v358
      %v1119 = vunpack.c.l.b16 %v359
      %v1120 = vunpack.c.l.b16 %v360
      %v1121 = vunpack.c.l.b16 %v361
      %v1122 = vunpack.c.l.b16 %v362
      %v1123 = vunpack.c.l.b16 %v363
      %v1124 = vunpack.c.l.b16 %v364
      %v1125 = vunpack.c.l.b16 %v365
      %v1126 = vunpack.c.l.b16 %v366
      %v1127 = vunpack.c.l.b16 %v367
      %v1128 = vunpack.c.l.b16 %v368
      %v1129 = vunpack.c.l.b16 %v369
      %v1130 = vunpack.c.l.b16 %v370
      %v1131 = vunpack.c.l.b16 %v371
      %v1132 = vunpack.c.l.b16 %v372
      %v1133 = vunpack.c.l.b16 %v373
      %v1134 = vunpack.c.l.b16 %v374
      %v1135 = vunpack.c.l.b16 %v375
      %v1136 = vunpack.c.l.b16 %v376
      %v1137 = vunpack.c.l.b16 %v377
      %v1138 = vunpack.c.l.b16 %v378
      %v1139 = vunpack.c.l.b16 %v379
      %v1140 = vunpack.c.l.b16 %v380
      %v1141 = vunpack.c.l.b16 %v381
      %v1142 = vunpack.c.l.b16 %v382
      %v1143 = vunpack.c.l.b16 %v383
      %v1144 = vunpack.c.l.b16 %v384
      %v1145 = vpack.c.b16 %v1050, %v1049
      %v1146 = vpack.c.b16 %v1052, %v1051
      %v1147 = vpack.c.b16 %v1054, %v1053
      %v1148 = vpack.c.b16 %v1056, %v1055
      %v1149 = vpack.c.b16 %v1058, %v1057
      %v1150 = vpack.c.b16 %v1060, %v1059
      %v1151 = vpack.c.b16 %v1062, %v1061
      %v1152 = vpack.c.b16 %v1064, %v1063
      %v1153 = vpack.c.b16 %v1066, %v1065
      %v1154 = vpack.c.b16 %v1068, %v1067
      %v1155 = vpack.c.b16 %v1070, %v1069
      %v1156 = vpack.c.b16 %v1072, %v1071
      %v1157 = vpack.c.b16 %v1074, %v1073
      %v1158 = vpack.c.b16 %v1076, %v1075
      %v1159 = vpack.c.b16 %v1078, %v1077
      %v1160 = vpack.c.b16 %v1080, %v1079
      %v1161 = vpack.c.b16 %v1082, %v1081
      %v1162 = vpack.c.b16 %v1084, %v1083
      %v1163 = vpack.c.b16 %v1086, %v1085
      %v1164 = vpack.c.b16 %v1088, %v1087
      %v1165 = vpack.c.b16 %v1090, %v1089
      %v1166 = vpack.c.b16 %v1092, %v1091
      %v1167 = vpack.c.b16 %v1094, %v1093
      %v1168 = vpack.c.b16 %v1096, %v1095
      %v1169 = vpack.c.b16 %v1098, %v1097
      %v1170 = vpack.c.b16 %v1100, %v1099
      %v1171 = vpack.c.b16 %v1102, %v1101
      %v1172 = vpack.c.b16 %v1104, %v1103
      %v1173 = vpack.c.b16 %v1106, %v1105
      %v1174 = vpack.c.b16 %v1108, %v1107
      %v1175 = vpack.c.b16 %v1110, %v1109
      %v1176 = vpack.c.b16 %v1112, %v1111
      %v1177 = vpack.c.b16 %v1114, %v1113
      %v1178 = vpack.c.b16 %v1116, %v1115
      %v1179 = vpack.c.b16 %v1118, %v1117
      %v1180 = vpack.c.b16 %v1120, %v1119
      %v1181 = vpack.c.b16 %v1122, %v1121
      %v1182 = vpack.c.b16 %v1124, %v1123
      %v1183 = vpack.c.b16 %v1126, %v1125
      %v1184 = vpack.c.b16 %v1128, %v1127
      %v1185 = vpack.c.b16 %v1130, %v1129
      %v1186 = vpack.c.b16 %v1132, %v1131
      %v1187 = vpack.c.b16 %v1134, %v1133
      %v1188 = vpack.c.b16 %v1136, %v1135
      %v1189 = vpack.c.b16 %v1138, %v1137
      %v1190 = vpack.c.b16 %v1140, %v1139
      %v1191 = vpack.c.b16 %v1142, %v1141
      %v1192 = vpack.c.b16 %v1144, %v1143
      %1241 = vmatprep.subr.bf16.mxu0 0
      %1242 = vmatpush1.bf16.msra.mxu0 %v1145
      %1243 = vmatprep.subr.bf16.mxu0 0
      %1244 = vmatpush1.bf16.msra.mxu0 %v1146
      %1245 = vmatprep.subr.bf16.mxu0 0
      %1246 = vmatpush1.bf16.msra.mxu0 %v1147
      %1247 = vmatprep.subr.bf16.mxu0 0
      %1248 = vmatpush1.bf16.msra.mxu0 %v1148
      %1249 = vmatprep.subr.bf16.mxu0 0
      %1250 = vmatpush1.bf16.msra.mxu0 %v1149
      %1251 = vmatprep.subr.bf16.mxu0 0
      %1252 = vmatpush1.bf16.msra.mxu0 %v1150
      %1253 = vmatprep.subr.bf16.mxu0 0
      %1254 = vmatpush1.bf16.msra.mxu0 %v1151
      %1255 = vmatprep.subr.bf16.mxu0 0
      %1256 = vmatpush1.bf16.msra.mxu0 %v1152
      %1257 = vmatprep.subr.bf16.mxu0 0
      %1258 = vmatpush1.bf16.msra.mxu0 %v1153
      %1259 = vmatprep.subr.bf16.mxu0 0
      %1260 = vmatpush1.bf16.msra.mxu0 %v1154
      %1261 = vmatprep.subr.bf16.mxu0 0
      %1262 = vmatpush1.bf16.msra.mxu0 %v1155
      %1263 = vmatprep.subr.bf16.mxu0 0
      %1264 = vmatpush1.bf16.msra.mxu0 %v1156
      %1265 = vmatprep.subr.bf16.mxu0 0
      %1266 = vmatpush1.bf16.msra.mxu0 %v1157
      %1267 = vmatprep.subr.bf16.mxu0 0
      %1268 = vmatpush1.bf16.msra.mxu0 %v1158
      %1269 = vmatprep.subr.bf16.mxu0 0
      %1270 = vmatpush1.bf16.msra.mxu0 %v1159
      %1271 = vmatprep.subr.bf16.mxu0 0
      %1272 = vmatpush1.bf16.msra.mxu0 %v1160
      %1273 = vmatprep.mubr.bf16.mxu0 %v726
      %1274 = vmatmul.mubr.bf16.gmra.mrb[0].mxu0 %v725
      %v1275 = vpop.f32.mrb[0].mxu0
      %v1276 = vadd.f32 %v390, %v1275
      %v1277 = vpop.f32.mrb[0].mxu0
      %v1278 = vpop.f32.mrb[0].mxu0
      %v1279 = vadd.f32 %v390, %v1278
      %v1280 = vpop.f32.mrb[0].mxu0
      %1281 = vmatprep.mubr.bf16.mxu0 %v732
      %1282 = vmatmul.mubr.bf16.gmra.mrb[0].mxu0 %v731
      %v1283 = vpop.f32.mrb[0].mxu0
      %v1284 = vadd.f32 %v390, %v1283
      %v1285 = vpop.f32.mrb[0].mxu0
      %v1286 = vpop.f32.mrb[0].mxu0
      %v1287 = vadd.f32 %v390, %v1286
      %v1288 = vpop.f32.mrb[0].mxu0
      %1289 = vmatprep.mubr.bf16.mxu0 %v738
      %1290 = vmatmul.mubr.bf16.gmra.mrb[0].mxu0 %v737
      %v1291 = vpop.f32.mrb[0].mxu0
      %v1292 = vadd.f32 %v390, %v1291
      %v1293 = vpop.f32.mrb[0].mxu0
      %v1294 = vpop.f32.mrb[0].mxu0
      %v1295 = vadd.f32 %v390, %v1294
      %v1296 = vpop.f32.mrb[0].mxu0
      %1297 = vmatprep.mubr.bf16.mxu0 %v744
      %1298 = vmatmul.mubr.bf16.gmra.mrb[0].mxu0 %v743
      %v1299 = vpop.f32.mrb[0].mxu0
      %v1300 = vadd.f32 %v390, %v1299
      %v1301 = vpop.f32.mrb[0].mxu0
      %v1302 = vpop.f32.mrb[0].mxu0
      %v1303 = vadd.f32 %v390, %v1302
      %v1304 = vpop.f32.mrb[0].mxu0
      %1305 = vmatprep.mubr.bf16.mxu0 %v750
      %1306 = vmatmul.mubr.bf16.gmra.mrb[0].mxu0 %v749
      %v1307 = vpop.f32.mrb[0].mxu0
      %v1308 = vadd.f32 %v390, %v1307
      %v1309 = vpop.f32.mrb[0].mxu0
      %v1310 = vpop.f32.mrb[0].mxu0
      %v1311 = vadd.f32 %v390, %v1310
      %v1312 = vpop.f32.mrb[0].mxu0
      %1313 = vmatprep.mubr.bf16.mxu0 %v756
      %1314 = vmatmul.mubr.bf16.gmra.mrb[0].mxu0 %v755
      %v1315 = vpop.f32.mrb[0].mxu0
      %v1316 = vadd.f32 %v390, %v1315
      %v1317 = vpop.f32.mrb[0].mxu0
      %v1318 = vpop.f32.mrb[0].mxu0
      %v1319 = vadd.f32 %v390, %v1318
      %v1320 = vpop.f32.mrb[0].mxu0
      %1321 = vmatprep.mubr.bf16.mxu0 %v762
      %1322 = vmatmul.mubr.bf16.gmra.mrb[0].mxu0 %v761
      %v1323 = vpop.f32.mrb[0].mxu0
      %v1324 = vadd.f32 %v390, %v1323
      %v1325 = vpop.f32.mrb[0].mxu0
      %v1326 = vpop.f32.mrb[0].mxu0
      %v1327 = vadd.f32 %v390, %v1326
      %v1328 = vpop.f32.mrb[0].mxu0
      %1329 = vmatprep.mubr.bf16.mxu0 %v768
      %1330 = vmatmul.mubr.bf16.gmra.mrb[0].mxu0 %v767
      %v1331 = vpop.f32.mrb[0].mxu0
      %v1332 = vadd.f32 %v390, %v1331
      %v1333 = vpop.f32.mrb[0].mxu0
      %v1334 = vpop.f32.mrb[0].mxu0
      %v1335 = vadd.f32 %v390, %v1334
      %v1336 = vpop.f32.mrb[0].mxu0
      %1337 = vmatprep.mubr.bf16.mxu0 %v774
      %1338 = vmatmul.mubr.bf16.gmra.mrb[0].mxu0 %v773
      %v1339 = vpop.f32.mrb[0].mxu0
      %v1340 = vadd.f32 %v390, %v1339
      %v1341 = vpop.f32.mrb[0].mxu0
      %v1342 = vpop.f32.mrb[0].mxu0
      %v1343 = vadd.f32 %v390, %v1342
      %v1344 = vpop.f32.mrb[0].mxu0
      %1345 = vmatprep.mubr.bf16.mxu0 %v780
      %1346 = vmatmul.mubr.bf16.gmra.mrb[0].mxu0 %v779
      %v1347 = vpop.f32.mrb[0].mxu0
      %v1348 = vadd.f32 %v390, %v1347
      %v1349 = vpop.f32.mrb[0].mxu0
      %v1350 = vpop.f32.mrb[0].mxu0
      %v1351 = vadd.f32 %v390, %v1350
      %v1352 = vpop.f32.mrb[0].mxu0
      %1353 = vmatprep.mubr.bf16.mxu0 %v786
      %1354 = vmatmul.mubr.bf16.gmra.mrb[0].mxu0 %v785
      %v1355 = vpop.f32.mrb[0].mxu0
      %v1356 = vadd.f32 %v390, %v1355
      %v1357 = vpop.f32.mrb[0].mxu0
      %v1358 = vpop.f32.mrb[0].mxu0
      %v1359 = vadd.f32 %v390, %v1358
      %v1360 = vpop.f32.mrb[0].mxu0
      %1361 = vmatprep.mubr.bf16.mxu0 %v792
      %1362 = vmatmul.mubr.bf16.gmra.mrb[0].mxu0 %v791
      %v1363 = vpop.f32.mrb[0].mxu0
      %v1364 = vadd.f32 %v390, %v1363
      %v1365 = vpop.f32.mrb[0].mxu0
      %v1366 = vpop.f32.mrb[0].mxu0
      %v1367 = vadd.f32 %v390, %v1366
      %v1368 = vpop.f32.mrb[0].mxu0
      %1369 = vmatprep.mubr.bf16.mxu0 %v798
      %1370 = vmatmul.mubr.bf16.gmra.mrb[0].mxu0 %v797
      %v1371 = vpop.f32.mrb[0].mxu0
      %v1372 = vadd.f32 %v390, %v1371
      %v1373 = vpop.f32.mrb[0].mxu0
      %v1374 = vpop.f32.mrb[0].mxu0
      %v1375 = vadd.f32 %v390, %v1374
      %v1376 = vpop.f32.mrb[0].mxu0
      %1377 = vmatprep.mubr.bf16.mxu0 %v804
      %1378 = vmatmul.mubr.bf16.gmra.mrb[0].mxu0 %v803
      %v1379 = vpop.f32.mrb[0].mxu0
      %v1380 = vadd.f32 %v390, %v1379
      %v1381 = vpop.f32.mrb[0].mxu0
      %v1382 = vpop.f32.mrb[0].mxu0
      %v1383 = vadd.f32 %v390, %v1382
      %v1384 = vpop.f32.mrb[0].mxu0
      %1385 = vmatprep.mubr.bf16.mxu0 %v810
      %1386 = vmatmul.mubr.bf16.gmra.mrb[0].mxu0 %v809
      %v1387 = vpop.f32.mrb[0].mxu0
      %v1388 = vadd.f32 %v390, %v1387
      %v1389 = vpop.f32.mrb[0].mxu0
      %v1390 = vpop.f32.mrb[0].mxu0
      %v1391 = vadd.f32 %v390, %v1390
      %v1392 = vpop.f32.mrb[0].mxu0
      %1393 = vmatprep.mubr.bf16.mxu0 %v816
      %1394 = vmatmul.mubr.bf16.gmra.mrb[0].mxu0 %v815
      %v1395 = vpop.f32.mrb[0].mxu0
      %v1396 = vadd.f32 %v390, %v1395
      %v1397 = vpop.f32.mrb[0].mxu0
      %v1398 = vpop.f32.mrb[0].mxu0
      %v1399 = vadd.f32 %v390, %v1398
      %v1400 = vpop.f32.mrb[0].mxu0
      %1401 = vmatprep.mubr.bf16.mxu0 %v822
      %1402 = vmatmul.mubr.bf16.gmra.mrb[0].mxu0 %v821
      %v1403 = vpop.f32.mrb[0].mxu0
      %v1404 = vadd.f32 %v390, %v1403
      %v1405 = vpop.f32.mrb[0].mxu0
      %v1406 = vpop.f32.mrb[0].mxu0
      %v1407 = vadd.f32 %v390, %v1406
      %v1408 = vpop.f32.mrb[0].mxu0
      %1409 = vmatprep.mubr.bf16.mxu0 %v828
      %1410 = vmatmul.mubr.bf16.gmra.mrb[0].mxu0 %v827
      %v1411 = vpop.f32.mrb[0].mxu0
      %v1412 = vadd.f32 %v390, %v1411
      %v1413 = vpop.f32.mrb[0].mxu0
      %v1414 = vpop.f32.mrb[0].mxu0
      %v1415 = vadd.f32 %v390, %v1414
      %v1416 = vpop.f32.mrb[0].mxu0
      %1417 = vmatprep.mubr.bf16.mxu0 %v834
      %1418 = vmatmul.mubr.bf16.gmra.mrb[0].mxu0 %v833
      %v1419 = vpop.f32.mrb[0].mxu0
      %v1420 = vadd.f32 %v390, %v1419
      %v1421 = vpop.f32.mrb[0].mxu0
      %v1422 = vpop.f32.mrb[0].mxu0
      %v1423 = vpop.f32.mrb[0].mxu0
      %1424 = vdwg.mxu0
      %1425 = vmatprep.subr.bf16.mxu0 0
      %1426 = vmatpush1.bf16.msra.mxu0 %v1161
      %1427 = vmatprep.subr.bf16.mxu0 0
      %1428 = vmatpush1.bf16.msra.mxu0 %v1162
      %1429 = vmatprep.subr.bf16.mxu0 0
      %1430 = vmatpush1.bf16.msra.mxu0 %v1163
      %1431 = vmatprep.subr.bf16.mxu0 0
      %1432 = vmatpush1.bf16.msra.mxu0 %v1164
      %1433 = vmatprep.subr.bf16.mxu0 0
      %1434 = vmatpush1.bf16.msra.mxu0 %v1165
      %1435 = vmatprep.subr.bf16.mxu0 0
      %1436 = vmatpush1.bf16.msra.mxu0 %v1166
      %1437 = vmatprep.subr.bf16.mxu0 0
      %1438 = vmatpush1.bf16.msra.mxu0 %v1167
      %1439 = vmatprep.subr.bf16.mxu0 0
      %1440 = vmatpush1.bf16.msra.mxu0 %v1168
      %1441 = vmatprep.subr.bf16.mxu0 0
      %1442 = vmatpush1.bf16.msra.mxu0 %v1169
      %1443 = vmatprep.subr.bf16.mxu0 0
      %1444 = vmatpush1.bf16.msra.mxu0 %v1170
      %1445 = vmatprep.subr.bf16.mxu0 0
      %1446 = vmatpush1.bf16.msra.mxu0 %v1171
      %1447 = vmatprep.subr.bf16.mxu0 0
      %1448 = vmatpush1.bf16.msra.mxu0 %v1172
      %1449 = vmatprep.subr.bf16.mxu0 0
      %1450 = vmatpush1.bf16.msra.mxu0 %v1173
      %1451 = vmatprep.subr.bf16.mxu0 0
      %1452 = vmatpush1.bf16.msra.mxu0 %v1174
      %1453 = vmatprep.subr.bf16.mxu0 0
      %1454 = vmatpush1.bf16.msra.mxu0 %v1175
      %1455 = vmatprep.subr.bf16.mxu0 0
      %1456 = vmatpush1.bf16.msra.mxu0 %v1176
      %1457 = vmatprep.mubr.bf16.mxu0 %v728
      %1458 = vmatmul.mubr.bf16.gmra.mrb[0].mxu0 %v727
      %v1459 = vpop.f32.mrb[0].mxu0
      %v1460 = vadd.f32 %v1276, %v1459
      %v1461 = vpop.f32.mrb[0].mxu0
      %v1462 = vpop.f32.mrb[0].mxu0
      %v1463 = vadd.f32 %v1279, %v1462
      %v1464 = vpop.f32.mrb[0].mxu0
      %1465 = vmatprep.mubr.bf16.mxu0 %v734
      %1466 = vmatmul.mubr.bf16.gmra.mrb[0].mxu0 %v733
      %v1467 = vpop.f32.mrb[0].mxu0
      %v1468 = vadd.f32 %v1284, %v1467
      %v1469 = vpop.f32.mrb[0].mxu0
      %v1470 = vpop.f32.mrb[0].mxu0
      %v1471 = vadd.f32 %v1287, %v1470
      %v1472 = vpop.f32.mrb[0].mxu0
      %1473 = vmatprep.mubr.bf16.mxu0 %v740
      %1474 = vmatmul.mubr.bf16.gmra.mrb[0].mxu0 %v739
      %v1475 = vpop.f32.mrb[0].mxu0
      %v1476 = vadd.f32 %v1292, %v1475
      %v1477 = vpop.f32.mrb[0].mxu0
      %v1478 = vpop.f32.mrb[0].mxu0
      %v1479 = vadd.f32 %v1295, %v1478
      %v1480 = vpop.f32.mrb[0].mxu0
      %1481 = vmatprep.mubr.bf16.mxu0 %v746
      %1482 = vmatmul.mubr.bf16.gmra.mrb[0].mxu0 %v745
      %v1483 = vpop.f32.mrb[0].mxu0
      %v1484 = vadd.f32 %v1300, %v1483
      %v1485 = vpop.f32.mrb[0].mxu0
      %v1486 = vpop.f32.mrb[0].mxu0
      %v1487 = vadd.f32 %v1303, %v1486
      %v1488 = vpop.f32.mrb[0].mxu0
      %1489 = vmatprep.mubr.bf16.mxu0 %v752
      %1490 = vmatmul.mubr.bf16.gmra.mrb[0].mxu0 %v751
      %v1491 = vpop.f32.mrb[0].mxu0
      %v1492 = vadd.f32 %v1308, %v1491
      %v1493 = vpop.f32.mrb[0].mxu0
      %v1494 = vpop.f32.mrb[0].mxu0
      %v1495 = vadd.f32 %v1311, %v1494
      %v1496 = vpop.f32.mrb[0].mxu0
      %1497 = vmatprep.mubr.bf16.mxu0 %v758
      %1498 = vmatmul.mubr.bf16.gmra.mrb[0].mxu0 %v757
      %v1499 = vpop.f32.mrb[0].mxu0
      %v1500 = vadd.f32 %v1316, %v1499
      %v1501 = vpop.f32.mrb[0].mxu0
      %v1502 = vpop.f32.mrb[0].mxu0
      %v1503 = vadd.f32 %v1319, %v1502
      %v1504 = vpop.f32.mrb[0].mxu0
      %1505 = vmatprep.mubr.bf16.mxu0 %v764
      %1506 = vmatmul.mubr.bf16.gmra.mrb[0].mxu0 %v763
      %v1507 = vpop.f32.mrb[0].mxu0
      %v1508 = vadd.f32 %v1324, %v1507
      %v1509 = vpop.f32.mrb[0].mxu0
      %v1510 = vpop.f32.mrb[0].mxu0
      %v1511 = vadd.f32 %v1327, %v1510
      %v1512 = vpop.f32.mrb[0].mxu0
      %1513 = vmatprep.mubr.bf16.mxu0 %v770
      %1514 = vmatmul.mubr.bf16.gmra.mrb[0].mxu0 %v769
      %v1515 = vpop.f32.mrb[0].mxu0
      %v1516 = vadd.f32 %v1332, %v1515
      %v1517 = vpop.f32.mrb[0].mxu0
      %v1518 = vpop.f32.mrb[0].mxu0
      %v1519 = vadd.f32 %v1335, %v1518
      %v1520 = vpop.f32.mrb[0].mxu0
      %1521 = vmatprep.mubr.bf16.mxu0 %v776
      %1522 = vmatmul.mubr.bf16.gmra.mrb[0].mxu0 %v775
      %v1523 = vpop.f32.mrb[0].mxu0
      %v1524 = vadd.f32 %v1340, %v1523
      %v1525 = vpop.f32.mrb[0].mxu0
      %v1526 = vpop.f32.mrb[0].mxu0
      %v1527 = vadd.f32 %v1343, %v1526
      %v1528 = vpop.f32.mrb[0].mxu0
      %1529 = vmatprep.mubr.bf16.mxu0 %v782
      %1530 = vmatmul.mubr.bf16.gmra.mrb[0].mxu0 %v781
      %v1531 = vpop.f32.mrb[0].mxu0
      %v1532 = vadd.f32 %v1348, %v1531
      %v1533 = vpop.f32.mrb[0].mxu0
      %v1534 = vpop.f32.mrb[0].mxu0
      %v1535 = vadd.f32 %v1351, %v1534
      %v1536 = vpop.f32.mrb[0].mxu0
      %1537 = vmatprep.mubr.bf16.mxu0 %v788
      %1538 = vmatmul.mubr.bf16.gmra.mrb[0].mxu0 %v787
      %v1539 = vpop.f32.mrb[0].mxu0
      %v1540 = vadd.f32 %v1356, %v1539
      %v1541 = vpop.f32.mrb[0].mxu0
      %v1542 = vpop.f32.mrb[0].mxu0
      %v1543 = vadd.f32 %v1359, %v1542
      %v1544 = vpop.f32.mrb[0].mxu0
      %1545 = vmatprep.mubr.bf16.mxu0 %v794
      %1546 = vmatmul.mubr.bf16.gmra.mrb[0].mxu0 %v793
      %v1547 = vpop.f32.mrb[0].mxu0
      %v1548 = vadd.f32 %v1364, %v1547
      %v1549 = vpop.f32.mrb[0].mxu0
      %v1550 = vpop.f32.mrb[0].mxu0
      %v1551 = vadd.f32 %v1367, %v1550
      %v1552 = vpop.f32.mrb[0].mxu0
      %1553 = vmatprep.mubr.bf16.mxu0 %v800
      %1554 = vmatmul.mubr.bf16.gmra.mrb[0].mxu0 %v799
      %v1555 = vpop.f32.mrb[0].mxu0
      %v1556 = vadd.f32 %v1372, %v1555
      %v1557 = vpop.f32.mrb[0].mxu0
      %v1558 = vpop.f32.mrb[0].mxu0
      %v1559 = vadd.f32 %v1375, %v1558
      %v1560 = vpop.f32.mrb[0].mxu0
      %1561 = vmatprep.mubr.bf16.mxu0 %v806
      %1562 = vmatmul.mubr.bf16.gmra.mrb[0].mxu0 %v805
      %v1563 = vpop.f32.mrb[0].mxu0
      %v1564 = vadd.f32 %v1380, %v1563
      %v1565 = vpop.f32.mrb[0].mxu0
      %v1566 = vpop.f32.mrb[0].mxu0
      %v1567 = vadd.f32 %v1383, %v1566
      %v1568 = vpop.f32.mrb[0].mxu0
      %1569 = vmatprep.mubr.bf16.mxu0 %v812
      %1570 = vmatmul.mubr.bf16.gmra.mrb[0].mxu0 %v811
      %v1571 = vpop.f32.mrb[0].mxu0
      %v1572 = vadd.f32 %v1388, %v1571
      %v1573 = vpop.f32.mrb[0].mxu0
      %v1574 = vpop.f32.mrb[0].mxu0
      %v1575 = vadd.f32 %v1391, %v1574
      %v1576 = vpop.f32.mrb[0].mxu0
      %1577 = vmatprep.mubr.bf16.mxu0 %v818
      %1578 = vmatmul.mubr.bf16.gmra.mrb[0].mxu0 %v817
      %v1579 = vpop.f32.mrb[0].mxu0
      %v1580 = vadd.f32 %v1396, %v1579
      %v1581 = vpop.f32.mrb[0].mxu0
      %v1582 = vpop.f32.mrb[0].mxu0
      %v1583 = vadd.f32 %v1399, %v1582
      %v1584 = vpop.f32.mrb[0].mxu0
      %1585 = vmatprep.mubr.bf16.mxu0 %v824
      %1586 = vmatmul.mubr.bf16.gmra.mrb[0].mxu0 %v823
      %v1587 = vpop.f32.mrb[0].mxu0
      %v1588 = vadd.f32 %v1404, %v1587
      %v1589 = vpop.f32.mrb[0].mxu0
      %v1590 = vpop.f32.mrb[0].mxu0
      %v1591 = vadd.f32 %v1407, %v1590
      %v1592 = vpop.f32.mrb[0].mxu0
      %1593 = vmatprep.mubr.bf16.mxu0 %v830
      %1594 = vmatmul.mubr.bf16.gmra.mrb[0].mxu0 %v829
      %v1595 = vpop.f32.mrb[0].mxu0
      %v1596 = vadd.f32 %v1412, %v1595
      %v1597 = vpop.f32.mrb[0].mxu0
      %v1598 = vpop.f32.mrb[0].mxu0
      %v1599 = vadd.f32 %v1415, %v1598
      %v1600 = vpop.f32.mrb[0].mxu0
      %1601 = vmatprep.mubr.bf16.mxu0 %v836
      %1602 = vmatmul.mubr.bf16.gmra.mrb[0].mxu0 %v835
      %v1603 = vpop.f32.mrb[0].mxu0
      %v1604 = vadd.f32 %v1420, %v1603
      %v1605 = vpop.f32.mrb[0].mxu0
      %v1606 = vpop.f32.mrb[0].mxu0
      %v1607 = vpop.f32.mrb[0].mxu0
      %1608 = vdwg.mxu0
      %1609 = vmatprep.subr.bf16.mxu0 0
      %1610 = vmatpush1.bf16.msra.mxu0 %v1177
      %1611 = vmatprep.subr.bf16.mxu0 0
      %1612 = vmatpush1.bf16.msra.mxu0 %v1178
      %1613 = vmatprep.subr.bf16.mxu0 0
      %1614 = vmatpush1.bf16.msra.mxu0 %v1179
      %1615 = vmatprep.subr.bf16.mxu0 0
      %1616 = vmatpush1.bf16.msra.mxu0 %v1180
      %1617 = vmatprep.subr.bf16.mxu0 0
      %1618 = vmatpush1.bf16.msra.mxu0 %v1181
      %1619 = vmatprep.subr.bf16.mxu0 0
      %1620 = vmatpush1.bf16.msra.mxu0 %v1182
      %1621 = vmatprep.subr.bf16.mxu0 0
      %1622 = vmatpush1.bf16.msra.mxu0 %v1183
      %1623 = vmatprep.subr.bf16.mxu0 0
      %1624 = vmatpush1.bf16.msra.mxu0 %v1184
      %1625 = vmatprep.subr.bf16.mxu0 0
      %1626 = vmatpush1.bf16.msra.mxu0 %v1185
      %1627 = vmatprep.subr.bf16.mxu0 0
      %1628 = vmatpush1.bf16.msra.mxu0 %v1186
      %1629 = vmatprep.subr.bf16.mxu0 0
      %1630 = vmatpush1.bf16.msra.mxu0 %v1187
      %1631 = vmatprep.subr.bf16.mxu0 0
      %1632 = vmatpush1.bf16.msra.mxu0 %v1188
      %1633 = vmatprep.subr.bf16.mxu0 0
      %1634 = vmatpush1.bf16.msra.mxu0 %v1189
      %1635 = vmatprep.subr.bf16.mxu0 0
      %1636 = vmatpush1.bf16.msra.mxu0 %v1190
      %1637 = vmatprep.subr.bf16.mxu0 0
      %1638 = vmatpush1.bf16.msra.mxu0 %v1191
      %1639 = vmatprep.subr.bf16.mxu0 0
      %1640 = vmatpush1.bf16.msra.mxu0 %v1192
      %1641 = vmatprep.mubr.bf16.mxu0 %v730
      %1642 = vmatmul.mubr.bf16.gmra.mrb[0].mxu0 %v729
      %v1643 = vpop.f32.mrb[0].mxu0
      %v1644 = vadd.f32 %v1460, %v1643
      %v1645 = vpop.f32.mrb[0].mxu0
      %v1646 = vpop.f32.mrb[0].mxu0
      %v1647 = vadd.f32 %v1463, %v1646
      %v1648 = vpop.f32.mrb[0].mxu0
      %1649 = vmatprep.mubr.bf16.mxu0 %v736
      %1650 = vmatmul.mubr.bf16.gmra.mrb[0].mxu0 %v735
      %v1651 = vpop.f32.mrb[0].mxu0
      %v1652 = vadd.f32 %v1468, %v1651
      %v1653 = vpop.f32.mrb[0].mxu0
      %v1654 = vpop.f32.mrb[0].mxu0
      %v1655 = vadd.f32 %v1471, %v1654
      %v1656 = vpop.f32.mrb[0].mxu0
      %1657 = vmatprep.mubr.bf16.mxu0 %v742
      %1658 = vmatmul.mubr.bf16.gmra.mrb[0].mxu0 %v741
      %v1659 = vpop.f32.mrb[0].mxu0
      %v1660 = vadd.f32 %v1476, %v1659
      %v1661 = vpop.f32.mrb[0].mxu0
      %v1662 = vpop.f32.mrb[0].mxu0
      %v1663 = vadd.f32 %v1479, %v1662
      %v1664 = vpop.f32.mrb[0].mxu0
      %1665 = vmatprep.mubr.bf16.mxu0 %v748
      %1666 = vmatmul.mubr.bf16.gmra.mrb[0].mxu0 %v747
      %v1667 = vpop.f32.mrb[0].mxu0
      %v1668 = vadd.f32 %v1484, %v1667
      %v1669 = vpop.f32.mrb[0].mxu0
      %v1670 = vpop.f32.mrb[0].mxu0
      %v1671 = vadd.f32 %v1487, %v1670
      %v1672 = vpop.f32.mrb[0].mxu0
      %1673 = vmatprep.mubr.bf16.mxu0 %v754
      %1674 = vmatmul.mubr.bf16.gmra.mrb[0].mxu0 %v753
      %v1675 = vpop.f32.mrb[0].mxu0
      %v1676 = vadd.f32 %v1492, %v1675
      %v1677 = vpop.f32.mrb[0].mxu0
      %v1678 = vpop.f32.mrb[0].mxu0
      %v1679 = vadd.f32 %v1495, %v1678
      %v1680 = vpop.f32.mrb[0].mxu0
      %1681 = vmatprep.mubr.bf16.mxu0 %v760
      %1682 = vmatmul.mubr.bf16.gmra.mrb[0].mxu0 %v759
      %v1683 = vpop.f32.mrb[0].mxu0
      %v1684 = vadd.f32 %v1500, %v1683
      %v1685 = vpop.f32.mrb[0].mxu0
      %v1686 = vpop.f32.mrb[0].mxu0
      %v1687 = vadd.f32 %v1503, %v1686
      %v1688 = vpop.f32.mrb[0].mxu0
      %1689 = vmatprep.mubr.bf16.mxu0 %v766
      %1690 = vmatmul.mubr.bf16.gmra.mrb[0].mxu0 %v765
      %v1691 = vpop.f32.mrb[0].mxu0
      %v1692 = vadd.f32 %v1508, %v1691
      %v1693 = vpop.f32.mrb[0].mxu0
      %v1694 = vpop.f32.mrb[0].mxu0
      %v1695 = vadd.f32 %v1511, %v1694
      %v1696 = vpop.f32.mrb[0].mxu0
      %1697 = vmatprep.mubr.bf16.mxu0 %v772
      %1698 = vmatmul.mubr.bf16.gmra.mrb[0].mxu0 %v771
      %v1699 = vpop.f32.mrb[0].mxu0
      %v1700 = vadd.f32 %v1516, %v1699
      %v1701 = vpop.f32.mrb[0].mxu0
      %v1702 = vpop.f32.mrb[0].mxu0
      %v1703 = vadd.f32 %v1519, %v1702
      %v1704 = vpop.f32.mrb[0].mxu0
      %1705 = vmatprep.mubr.bf16.mxu0 %v778
      %1706 = vmatmul.mubr.bf16.gmra.mrb[0].mxu0 %v777
      %v1707 = vpop.f32.mrb[0].mxu0
      %v1708 = vadd.f32 %v1524, %v1707
      %v1709 = vpop.f32.mrb[0].mxu0
      %v1710 = vpop.f32.mrb[0].mxu0
      %v1711 = vadd.f32 %v1527, %v1710
      %v1712 = vpop.f32.mrb[0].mxu0
      %1713 = vmatprep.mubr.bf16.mxu0 %v784
      %1714 = vmatmul.mubr.bf16.gmra.mrb[0].mxu0 %v783
      %v1715 = vpop.f32.mrb[0].mxu0
      %v1716 = vadd.f32 %v1532, %v1715
      %v1717 = vpop.f32.mrb[0].mxu0
      %v1718 = vpop.f32.mrb[0].mxu0
      %v1719 = vadd.f32 %v1535, %v1718
      %v1720 = vpop.f32.mrb[0].mxu0
      %1721 = vmatprep.mubr.bf16.mxu0 %v790
      %1722 = vmatmul.mubr.bf16.gmra.mrb[0].mxu0 %v789
      %v1723 = vpop.f32.mrb[0].mxu0
      %v1724 = vadd.f32 %v1540, %v1723
      %v1725 = vpop.f32.mrb[0].mxu0
      %v1726 = vpop.f32.mrb[0].mxu0
      %v1727 = vadd.f32 %v1543, %v1726
      %v1728 = vpop.f32.mrb[0].mxu0
      %1729 = vmatprep.mubr.bf16.mxu0 %v796
      %1730 = vmatmul.mubr.bf16.gmra.mrb[0].mxu0 %v795
      %v1731 = vpop.f32.mrb[0].mxu0
      %v1732 = vadd.f32 %v1548, %v1731
      %v1733 = vpop.f32.mrb[0].mxu0
      %v1734 = vpop.f32.mrb[0].mxu0
      %v1735 = vadd.f32 %v1551, %v1734
      %v1736 = vpop.f32.mrb[0].mxu0
      %1737 = vmatprep.mubr.bf16.mxu0 %v802
      %1738 = vmatmul.mubr.bf16.gmra.mrb[0].mxu0 %v801
      %v1739 = vpop.f32.mrb[0].mxu0
      %v1740 = vadd.f32 %v1556, %v1739
      %v1741 = vpop.f32.mrb[0].mxu0
      %v1742 = vpop.f32.mrb[0].mxu0
      %v1743 = vadd.f32 %v1559, %v1742
      %v1744 = vpop.f32.mrb[0].mxu0
      %1745 = vmatprep.mubr.bf16.mxu0 %v808
      %1746 = vmatmul.mubr.bf16.gmra.mrb[0].mxu0 %v807
      %v1747 = vpop.f32.mrb[0].mxu0
      %v1748 = vadd.f32 %v1564, %v1747
      %v1749 = vpop.f32.mrb[0].mxu0
      %v1750 = vpop.f32.mrb[0].mxu0
      %v1751 = vadd.f32 %v1567, %v1750
      %v1752 = vpop.f32.mrb[0].mxu0
      %1753 = vmatprep.mubr.bf16.mxu0 %v814
      %1754 = vmatmul.mubr.bf16.gmra.mrb[0].mxu0 %v813
      %v1755 = vpop.f32.mrb[0].mxu0
      %v1756 = vadd.f32 %v1572, %v1755
      %v1757 = vpop.f32.mrb[0].mxu0
      %v1758 = vpop.f32.mrb[0].mxu0
      %v1759 = vadd.f32 %v1575, %v1758
      %v1760 = vpop.f32.mrb[0].mxu0
      %1761 = vmatprep.mubr.bf16.mxu0 %v820
      %1762 = vmatmul.mubr.bf16.gmra.mrb[0].mxu0 %v819
      %v1763 = vpop.f32.mrb[0].mxu0
      %v1764 = vadd.f32 %v1580, %v1763
      %v1765 = vpop.f32.mrb[0].mxu0
      %v1766 = vpop.f32.mrb[0].mxu0
      %v1767 = vadd.f32 %v1583, %v1766
      %v1768 = vpop.f32.mrb[0].mxu0
      %1769 = vmatprep.mubr.bf16.mxu0 %v826
      %1770 = vmatmul.mubr.bf16.gmra.mrb[0].mxu0 %v825
      %v1771 = vpop.f32.mrb[0].mxu0
      %v1772 = vadd.f32 %v1588, %v1771
      %v1773 = vpop.f32.mrb[0].mxu0
      %v1774 = vpop.f32.mrb[0].mxu0
      %v1775 = vadd.f32 %v1591, %v1774
      %v1776 = vpop.f32.mrb[0].mxu0
      %1777 = vmatprep.mubr.bf16.mxu0 %v832
      %1778 = vmatmul.mubr.bf16.gmra.mrb[0].mxu0 %v831
      %v1779 = vpop.f32.mrb[0].mxu0
      %v1780 = vadd.f32 %v1596, %v1779
      %v1781 = vpop.f32.mrb[0].mxu0
      %v1782 = vpop.f32.mrb[0].mxu0
      %v1783 = vadd.f32 %v1599, %v1782
      %v1784 = vpop.f32.mrb[0].mxu0
      %1785 = vmatprep.mubr.bf16.mxu0 %v838
      %1786 = vmatmul.mubr.bf16.gmra.mrb[0].mxu0 %v837
      %v1787 = vpop.f32.mrb[0].mxu0
      %v1788 = vadd.f32 %v1604, %v1787
      %v1789 = vpop.f32.mrb[0].mxu0
      %v1790 = vpop.f32.mrb[0].mxu0
      %v1791 = vpop.f32.mrb[0].mxu0
      %1792 = vdwg.mxu0
      %1793 = vst [vmem:[%s175] sm:$0xff] %v1644
      %1794 = vst [vmem:[%s175 + $0x8] sm:$0xff] %v1647
      %1795 = vst [vmem:[%s175 + $0x10] sm:$0xff] %v1652
      %1796 = vst [vmem:[%s175 + $0x18] sm:$0xff] %v1655
      %1797 = vst [vmem:[%s175 + $0x20] sm:$0xff] %v1660
      %1798 = vst [vmem:[%s175 + $0x28] sm:$0xff] %v1663
      %1799 = vst [vmem:[%s175 + $0x30] sm:$0xff] %v1668
      %1800 = vst [vmem:[%s175 + $0x38] sm:$0xff] %v1671
      %1801 = vst [vmem:[%s175 + $0x40] sm:$0xff] %v1676
      %1802 = vst [vmem:[%s175 + $0x48] sm:$0xff] %v1679
      %1803 = vst [vmem:[%s175 + $0x50] sm:$0xff] %v1684
      %1804 = vst [vmem:[%s175 + $0x58] sm:$0xff] %v1687
      %1805 = vst [vmem:[%s175 + $0x60] sm:$0xff] %v1692
      %1806 = vst [vmem:[%s175 + $0x68] sm:$0xff] %v1695
      %1807 = vst [vmem:[%s175 + $0x70] sm:$0xff] %v1700
      %1808 = vst [vmem:[%s175 + $0x78] sm:$0xff] %v1703
      %1809 = vst [vmem:[%s175 + $0x80] sm:$0xff] %v1708
      %1810 = vst [vmem:[%s175 + $0x88] sm:$0xff] %v1711
      %1811 = vst [vmem:[%s175 + $0x90] sm:$0xff] %v1716
      %1812 = vst [vmem:[%s175 + $0x98] sm:$0xff] %v1719
      %1813 = vst [vmem:[%s175 + $0xa0] sm:$0xff] %v1724
      %1814 = vst [vmem:[%s175 + $0xa8] sm:$0xff] %v1727
      %1815 = vst [vmem:[%s175 + $0xb0] sm:$0xff] %v1732
      %1816 = vst [vmem:[%s175 + $0xb8] sm:$0xff] %v1735
      %1817 = vst [vmem:[%s175 + $0xc0] sm:$0xff] %v1740
      %1818 = vst [vmem:[%s175 + $0xc8] sm:$0xff] %v1743
      %1819 = vst [vmem:[%s175 + $0xd0] sm:$0xff] %v1748
      %1820 = vst [vmem:[%s175 + $0xd8] sm:$0xff] %v1751
      %1821 = vst [vmem:[%s175 + $0xe0] sm:$0xff] %v1756
      %1822 = vst [vmem:[%s175 + $0xe8] sm:$0xff] %v1759
      %1823 = vst [vmem:[%s175 + $0xf0] sm:$0xff] %v1764
      %1824 = vst [vmem:[%s175 + $0xf8] sm:$0xff] %v1767
      %1825 = vst [vmem:[%s175 + $0x100] sm:$0xff] %v1772
      %1826 = vst [vmem:[%s175 + $0x108] sm:$0xff] %v1775
      %1827 = vst [vmem:[%s175 + $0x110] sm:$0xff] %v1780
      %1828 = vst [vmem:[%s175 + $0x118] sm:$0xff] %v1783
      %1829 = vst [vmem:[%s175 + $0x120] sm:$0xff] %v1788
      %s1830 = smul.u32 37, %s14
      %p1831 = scmp.lt.s32.totalorder %s1830, 73
      %s1832 = scalar_select %p1831, %s1830, 73
      %s1833 = smul.addr %s1832, 8
      %s1834 = scalar_lea.vmem %s3, %s1833
      // Predicated region
      $region33: #{cnn_encoder_forward.2} parent=31 // pred_check
        %p1835 = pneg %p100
      $region34: #{cnn_encoder_forward.2} parent=31 // pred_check_branch
        %1837 = sbr.rel (%p1835) target = $region36
      $region35: #{cnn_encoder_forward.2} parent=31 // pred_region
        %s1838 = smul.u32 37, %s14
      $region36: #{cnn_encoder_forward.2} parent=31 // pred_fallthru
        _
    $region32: #{cnn_encoder_forward.2} parent=5 // pred_fallthru
      _
    %p1839 = scmp.le.s32.totalorder 2, %s9
    // Predicated region
    $region37: #{cnn_encoder_forward.2} parent=5 // pred_check
      %p1840 = pneg %p1839
    $region38: #{cnn_encoder_forward.2} parent=5 // pred_check_branch
      %1842 = sbr.rel (%p1840) target = $region40
    $region39: #{cnn_encoder_forward.2} parent=5 // pred_region
      %s1843 = ssub.s32 %s9, 2
      // Predicated region
      $region41: #{cnn_encoder_forward.2} parent=39 // pred_check
        %p1844 = pneg %p106
      $region42: #{cnn_encoder_forward.2} parent=39 // pred_check_branch
        %1846 = sbr.rel (%p1844) target = $region44
      $region43: #{cnn_encoder_forward.2} parent=39 // pred_region
        %s1847 = smul.u32 37, %s15
        %p1848 = scmp.lt.s32.totalorder %s1847, 73
        %s1849 = scalar_select %p1848, %s1847, 73
        %s1850 = smul.addr %s1849, 8
        %s1851 = scalar_lea.vmem %s3, %s1850
      $region44: #{cnn_encoder_forward.2} parent=39 // pred_fallthru
        _
    $region40: #{cnn_encoder_forward.2} parent=5 // pred_fallthru
      _
  $region6: #{cnn_encoder_forward.2} parent=0 // loop_footer
    %s13 = sadd.s32 1, %s9
  $region7: #{cnn_encoder_forward.2} parent=0 // loop_footer_branch
    %8 = sbr.rel target = $region3
  $region8: #{cnn_encoder_forward.2} parent=0 // loop_exit
    _

</llo_original>
